<compile_context>
chip_gen: v7x
topology: tpu7x:2x2x1
jax: 0.10.0
libtpu: 0.0.40
codegen_flags: <defaults>
</compile_context>

<pallas_src>
import functools
import math

import jax
import jax.numpy as jnp
from jax.experimental import pallas as pl
from jax.experimental.pallas import tpu as pltpu

LN_EPS = 1e-6
NEG_INF = -1e9


def _layer_norm(x, gamma, beta):
    """Annotated-transformer LayerNorm (unbiased std), two-pass f32 stats."""
    d = x.shape[-1]
    mean = jnp.mean(x, axis=-1, keepdims=True)
    diff = x - mean
    var = jnp.sum(diff * diff, axis=-1, keepdims=True) / (d - 1)
    std = jnp.sqrt(var)
    return gamma * diff / (std + LN_EPS) + beta


def encoder_layer_kernel(x_ref, mask_ref,
                         ln1_g_ref, ln1_b_ref,
                         wqkv_ref, bqkv_ref, wo_ref, bo_ref,
                         ln2_g_ref, ln2_b_ref,
                         w1_ref, b1_ref, w2_ref, b2_ref,
                         out_ref, o_heads_ref, *,
                         num_heads, ff_chunk):
    f32 = jnp.float32
    bf16 = jnp.bfloat16

    x = x_ref[0]                     # (N, D) f32, current batch element
    m = mask_ref[0]                  # (N, N) f32 (1 = keep, 0 = masked)
    n, d = x.shape
    dk = d // num_heads
    scale = 1.0 / math.sqrt(dk)

    # Additive mask bias, computed once per grid step (hoisted out of head loop).
    bias = jnp.where(m > 0.0, 0.0, NEG_INF).astype(f32)

    # -------- sublayer 0: x + self_attn(LayerNorm(x), ..., mask) ----------
    xn = _layer_norm(x, ln1_g_ref[...], ln1_b_ref[...])
    xn_b = xn.astype(bf16)

    # Fused QKV projection: one K=D MXU pass instead of three.
    qkv = jnp.dot(xn_b, wqkv_ref[...], preferred_element_type=f32) + bqkv_ref[...]
    q_b = (qkv[:, :d] * scale).astype(bf16)        # fold 1/sqrt(dk) into q once
    k_b = qkv[:, d:2 * d].astype(bf16)
    v_b = qkv[:, 2 * d:].astype(bf16)

    # TODO(synk): for many heads / long N, switch to lax.fori_loop over an
    # (H, N, dk) layout with flash-style K/V tiling to bound live ranges.
    for h in range(num_heads):
        sl = slice(h * dk, (h + 1) * dk)
        s = jnp.einsum('qd,kd->qk', q_b[:, sl], k_b[:, sl],
                       preferred_element_type=f32) + bias       # (N, N) f32
        s = s - jnp.max(s, axis=-1, keepdims=True)
        p = jnp.exp(s)                                           # unnormalized
        l = jnp.sum(p, axis=-1, keepdims=True)                   # (N, 1)
        oh = jnp.dot(p.astype(bf16), v_b[:, sl],
                     preferred_element_type=f32)                 # (N, dk)
        oh = oh * pl.reciprocal(l, approx=True)                  # deferred softmax norm
        o_heads_ref[:, sl] = oh.astype(bf16)

    # Single K=D output projection (fills the MXU) instead of per-head K=dk folds.
    attn = jnp.dot(o_heads_ref[...], wo_ref[...],
                   preferred_element_type=f32) + bo_ref[...]
    x1 = x + attn

    # -------- sublayer 1: x1 + feed_forward(LayerNorm(x1)) ----------------
    xn2 = _layer_norm(x1, ln2_g_ref[...], ln2_b_ref[...])
    xn2_b = xn2.astype(bf16)
    d_ff = w1_ref.shape[1]
    ff = jnp.zeros((n, d), f32)
    for c in range(d_ff // ff_chunk):          # chunk d_ff: only (N, ff_chunk) live
        cs = slice(c * ff_chunk, (c + 1) * ff_chunk)
        h1 = jnp.maximum(
            jnp.dot(xn2_b, w1_ref[:, cs], preferred_element_type=f32) + b1_ref[:, cs],
            0.0)
        ff = ff + jnp.dot(h1.astype(bf16), w2_ref[cs, :], preferred_element_type=f32)
    ff = ff + b2_ref[...]

    out_ref[0] = x1 + ff


def _pick_ff_chunk(d_ff):
    for c in (1024, 512):
        if d_ff > c and d_ff % c == 0:
            return c
    return d_ff


def _vmem_limit_bytes(kparams, N, D):
    param_bytes = sum(int(p.size) * p.dtype.itemsize for p in kparams)
    act_bytes = 2 * (2 * N * D * 4 + N * N * 4)     # double-buffered x/out + mask tiles
    scratch_bytes = N * D * 2
    need = 2 * param_bytes + act_bytes + scratch_bytes + (4 << 20)
    # Stay under v7x's 64 MiB/TC; v5e/v6e could go higher for larger models.
    return int(min(48 << 20, max(16 << 20, need)))


def encoder_layer_forward(x, mask, kparams, *, num_heads):
    """x: (B, N, D) f32; mask: (B, N, N) (1=keep, 0=mask) or None."""
    B, N, D = x.shape
    if mask is None:
        mask = jnp.ones((B, N, N), jnp.float32)
    mask = mask.astype(jnp.float32)

    d_ff = kparams[8].shape[1]            # w1: (D, d_ff)
    ff_chunk = _pick_ff_chunk(d_ff)

    seq_spec = pl.BlockSpec((1, N, D), lambda b: (b, 0, 0))
    mask_spec = pl.BlockSpec((1, N, N), lambda b: (b, 0, 0))

    kernel = functools.partial(encoder_layer_kernel,
                               num_heads=num_heads, ff_chunk=ff_chunk)

    def build(weight_pipeline_mode):
        def resident(p):
            kwargs = {}
            if weight_pipeline_mode is not None:
                kwargs["pipeline_mode"] = weight_pipeline_mode
            # Full-extent block, constant index_map -> DMA'd once, VMEM-resident.
            return pl.BlockSpec(p.shape, lambda b, _nd=p.ndim: (0,) * _nd, **kwargs)

        return pl.pallas_call(
            kernel,
            out_shape=jax.ShapeDtypeStruct((B, N, D), jnp.float32),
            grid=(B,),
            in_specs=[seq_spec, mask_spec] + [resident(p) for p in kparams],
            out_specs=seq_spec,
            scratch_shapes=[pltpu.VMEM((N, D), jnp.bfloat16)],   # per-head outputs
            compiler_params=pltpu.CompilerParams(
                dimension_semantics=("parallel",),
                vmem_limit_bytes=_vmem_limit_bytes(kparams, N, D)),
        )

    try:
        # Single-buffer the grid-invariant weights (halves resident VMEM footprint).
        return build(pl.Buffered(1))(x, mask, *kparams)
    except Exception:
        # TODO(synk): pipeline_mode=pl.Buffered(1) unsupported on this jax version;
        # fall back to default double-buffered residency.
        return build(None)(x, mask, *kparams)


def init_params(key, d_model, d_ff):
    """Deterministic synthetic parameters (f32, Linear weights as (in, out)).

    Matmul weights are round-tripped through bf16 so the bf16 kernel and the
    f32 reference see identical weight values.
    """
    keys = jax.random.split(key, 16)

    def lin(kw, kb, fin, fout):
        w = jax.random.normal(kw, (fin, fout), jnp.float32) / math.sqrt(fin)
        w = w.astype(jnp.bfloat16).astype(jnp.float32)
        b = 0.05 * jax.random.normal(kb, (1, fout), jnp.float32)
        return w, b

    ln1_g = 1.0 + 0.1 * jax.random.normal(keys[0], (1, d_model), jnp.float32)
    ln1_b = 0.1 * jax.random.normal(keys[1], (1, d_model), jnp.float32)
    wq, bq = lin(keys[2], keys[3], d_model, d_model)
    wk, bk = lin(keys[4], keys[5], d_model, d_model)
    wv, bv = lin(keys[6], keys[7], d_model, d_model)
    wo, bo = lin(keys[8], keys[9], d_model, d_model)
    ln2_g = 1.0 + 0.1 * jax.random.normal(keys[10], (1, d_model), jnp.float32)
    ln2_b = 0.1 * jax.random.normal(keys[11], (1, d_model), jnp.float32)
    w1, b1 = lin(keys[12], keys[13], d_model, d_ff)
    w2, b2 = lin(keys[14], keys[15], d_ff, d_model)
    return (ln1_g, ln1_b, wq, bq, wk, bk, wv, bv, wo, bo,
            ln2_g, ln2_b, w1, b1, w2, b2)


def prepare_kernel_params(params):
    """Fuse QKV and cast matmul weights to bf16; biases / LN params stay f32."""
    (ln1_g, ln1_b, wq, bq, wk, bk, wv, bv, wo, bo,
     ln2_g, ln2_b, w1, b1, w2, b2) = params
    bf16 = jnp.bfloat16
    wqkv = jnp.concatenate([wq, wk, wv], axis=1).astype(bf16)   # (D, 3D)
    bqkv = jnp.concatenate([bq, bk, bv], axis=1)                # (1, 3D) f32
    return (ln1_g, ln1_b, wqkv, bqkv, wo.astype(bf16), bo,
            ln2_g, ln2_b, w1.astype(bf16), b1, w2.astype(bf16), b2)


def ref_forward(x, mask, params, *, num_heads):
    """Pure-JAX f32 reference matching the PyTorch EncoderLayer semantics."""
    (ln1_g, ln1_b, wq, bq, wk, bk, wv, bv, wo, bo,
     ln2_g, ln2_b, w1, b1, w2, b2) = params
    P = jax.lax.Precision.HIGHEST
    B, N, D = x.shape
    dk = D // num_heads

    def ln(t, g, b):
        mean = jnp.mean(t, axis=-1, keepdims=True)
        var = jnp.sum((t - mean) ** 2, axis=-1, keepdims=True) / (t.shape[-1] - 1)
        return g * (t - mean) / (jnp.sqrt(var) + LN_EPS) + b

    xn = ln(x, ln1_g, ln1_b)
    q = (jnp.einsum('bnd,de->bne', xn, wq, precision=P) + bq).reshape(B, N, num_heads, dk)
    k = (jnp.einsum('bnd,de->bne', xn, wk, precision=P) + bk).reshape(B, N, num_heads, dk)
    v = (jnp.einsum('bnd,de->bne', xn, wv, precision=P) + bv).reshape(B, N, num_heads, dk)
    s = jnp.einsum('bqhd,bkhd->bhqk', q, k, precision=P) / math.sqrt(dk)
    s = jnp.where(mask[:, None, :, :] > 0.0, s, NEG_INF)
    p = jax.nn.softmax(s, axis=-1)
    o = jnp.einsum('bhqk,bkhd->bqhd', p, v, precision=P).reshape(B, N, D)
    x1 = x + jnp.einsum('bnd,de->bne', o, wo, precision=P) + bo
    xn2 = ln(x1, ln2_g, ln2_b)
    h1 = jnp.maximum(jnp.einsum('bnd,df->bnf', xn2, w1, precision=P) + b1, 0.0)
    ff = jnp.einsum('bnf,fd->bnd', h1, w2, precision=P) + b2
    return x1 + ff


if __name__ == "__main__":
    # Small but lane-dense shapes: D, d_ff multiples of 128; N a multiple of 8.
    B, N, D, HEADS, D_FF = 2, 16, 128, 4, 256
    key = jax.random.PRNGKey(0)
    kx, kp = jax.random.split(key)
    x = jax.random.normal(kx, (B, N, D), jnp.float32)

    # Key-padding mask: batch 0 keeps all keys, batch 1 masks its last 4 keys.
    lens = jnp.array([N, N - 4], jnp.int32)
    key_valid = (jnp.arange(N)[None, :] < lens[:, None]).astype(jnp.float32)   # (B, N)
    mask = jnp.broadcast_to(key_valid[:, None, :], (B, N, N))

    params = init_params(kp, D, D_FF)
    kparams = prepare_kernel_params(params)

    out = encoder_layer_forward(x, mask, kparams, num_heads=HEADS)
    jax.block_until_ready(out)
    assert out.shape == (B, N, D)

    ref = ref_forward(x, mask, params, num_heads=HEADS)
    err = float(jnp.max(jnp.abs(out - ref)))
    # bf16-matmul + approx-reciprocal precision vs the f32 reference.
    assert err < 1e-1, f"mismatch vs reference: max|err|={err}"
    print("KERNEL_OK")
</pallas_src>

<mosaic_0001>
module attributes {stable_mosaic.version = 11 : i64} {
  func.func @encoder_layer_kernel(%arg0: i32, %arg1: memref<1x16x128xf32, #tpu.memory_space<vmem>>, %arg2: memref<1x16x16xf32, #tpu.memory_space<vmem>>, %arg3: memref<1x128xf32, #tpu.memory_space<vmem>>, %arg4: memref<1x128xf32, #tpu.memory_space<vmem>>, %arg5: memref<128x384xbf16, #tpu.memory_space<vmem>>, %arg6: memref<1x384xf32, #tpu.memory_space<vmem>>, %arg7: memref<128x128xbf16, #tpu.memory_space<vmem>>, %arg8: memref<1x128xf32, #tpu.memory_space<vmem>>, %arg9: memref<1x128xf32, #tpu.memory_space<vmem>>, %arg10: memref<1x128xf32, #tpu.memory_space<vmem>>, %arg11: memref<128x256xbf16, #tpu.memory_space<vmem>>, %arg12: memref<1x256xf32, #tpu.memory_space<vmem>>, %arg13: memref<256x128xbf16, #tpu.memory_space<vmem>>, %arg14: memref<1x128xf32, #tpu.memory_space<vmem>>, %arg15: memref<1x16x128xf32, #tpu.memory_space<vmem>>, %arg16: memref<16x128xbf16, #tpu.memory_space<vmem>>) attributes {dimension_semantics = [#tpu.dimension_semantics<parallel>], iteration_bounds = array<i64: 2>, scalar_prefetch = 0 : i64, scratch_operands = 1 : i64, tpu.core_type = #tpu.core_type<tc>, window_params = [{transform_indices = @transform_0, window_bounds = array<i64: 1, 16, 128>}, {transform_indices = @transform_1, window_bounds = array<i64: 1, 16, 16>}, {pipeline_mode = #tpu.pipeline_mode<synchronous>, transform_indices = @transform_2, window_bounds = array<i64: 1, 128>}, {pipeline_mode = #tpu.pipeline_mode<synchronous>, transform_indices = @transform_3, window_bounds = array<i64: 1, 128>}, {pipeline_mode = #tpu.pipeline_mode<synchronous>, transform_indices = @transform_4, window_bounds = array<i64: 128, 384>}, {pipeline_mode = #tpu.pipeline_mode<synchronous>, transform_indices = @transform_5, window_bounds = array<i64: 1, 384>}, {pipeline_mode = #tpu.pipeline_mode<synchronous>, transform_indices = @transform_6, window_bounds = array<i64: 128, 128>}, {pipeline_mode = #tpu.pipeline_mode<synchronous>, transform_indices = @transform_7, window_bounds = array<i64: 1, 128>}, {pipeline_mode = #tpu.pipeline_mode<synchronous>, transform_indices = @transform_8, window_bounds = array<i64: 1, 128>}, {pipeline_mode = #tpu.pipeline_mode<synchronous>, transform_indices = @transform_9, window_bounds = array<i64: 1, 128>}, {pipeline_mode = #tpu.pipeline_mode<synchronous>, transform_indices = @transform_10, window_bounds = array<i64: 128, 256>}, {pipeline_mode = #tpu.pipeline_mode<synchronous>, transform_indices = @transform_11, window_bounds = array<i64: 1, 256>}, {pipeline_mode = #tpu.pipeline_mode<synchronous>, transform_indices = @transform_12, window_bounds = array<i64: 256, 128>}, {pipeline_mode = #tpu.pipeline_mode<synchronous>, transform_indices = @transform_13, window_bounds = array<i64: 1, 128>}, {transform_indices = @transform_14, window_bounds = array<i64: 1, 16, 128>}]} {
    %c0 = arith.constant 0 : index
    %c0_0 = arith.constant 0 : index
    %c0_1 = arith.constant 0 : index
    %0 = vector.load %arg1[%c0, %c0_0, %c0_1] : memref<1x16x128xf32, #tpu.memory_space<vmem>>, vector<1x16x128xf32>
    %1 = vector.shape_cast %0 : vector<1x16x128xf32> to vector<16x128xf32>
    %c0_2 = arith.constant 0 : index
    %c0_3 = arith.constant 0 : index
    %c0_4 = arith.constant 0 : index
    %2 = vector.load %arg2[%c0_2, %c0_3, %c0_4] : memref<1x16x16xf32, #tpu.memory_space<vmem>>, vector<1x16x16xf32>
    %3 = vector.shape_cast %2 : vector<1x16x16xf32> to vector<16x16xf32>
    %cst = arith.constant 0.000000e+00 : f32
    %4 = vector.broadcast %cst : f32 to vector<16x16xf32>
    %5 = arith.cmpf ogt, %3, %4 : vector<16x16xf32>
    %cst_5 = arith.constant 0.000000e+00 : f32
    %cst_6 = arith.constant -1.000000e+09 : f32
    %6 = vector.broadcast %cst_5 : f32 to vector<16x16xf32>
    %7 = vector.broadcast %cst_6 : f32 to vector<16x16xf32>
    %8 = arith.select %5, %6, %7 : vector<16x16xi1>, vector<16x16xf32>
    %c0_7 = arith.constant 0 : index
    %c0_8 = arith.constant 0 : index
    %9 = vector.load %arg3[%c0_7, %c0_8] : memref<1x128xf32, #tpu.memory_space<vmem>>, vector<1x128xf32>
    %c0_9 = arith.constant 0 : index
    %c0_10 = arith.constant 0 : index
    %10 = vector.load %arg4[%c0_9, %c0_10] : memref<1x128xf32, #tpu.memory_space<vmem>>, vector<1x128xf32>
    %cst_11 = arith.constant dense<0.000000e+00> : vector<16xf32>
    %11 = vector.multi_reduction <add>, %1, %cst_11 [1] : vector<16x128xf32> to vector<16xf32>
    %12 = vector.shape_cast %11 : vector<16xf32> to vector<16x1xf32>
    %cst_12 = arith.constant 1.280000e+02 : f32
    %13 = vector.broadcast %cst_12 : f32 to vector<16x1xf32>
    %14 = arith.divf %12, %13 : vector<16x1xf32>
    %15 = vector.broadcast %14 : vector<16x1xf32> to vector<16x128xf32>
    %16 = arith.subf %1, %15 : vector<16x128xf32>
    %17 = arith.mulf %16, %16 : vector<16x128xf32>
    %cst_13 = arith.constant dense<0.000000e+00> : vector<16xf32>
    %18 = vector.multi_reduction <add>, %17, %cst_13 [1] : vector<16x128xf32> to vector<16xf32>
    %19 = vector.shape_cast %18 : vector<16xf32> to vector<16x1xf32>
    %cst_14 = arith.constant 1.270000e+02 : f32
    %20 = vector.broadcast %cst_14 : f32 to vector<16x1xf32>
    %21 = arith.divf %19, %20 : vector<16x1xf32>
    %22 = math.sqrt %21 : vector<16x1xf32>
    %23 = vector.broadcast %9 : vector<1x128xf32> to vector<16x128xf32>
    %24 = arith.mulf %23, %16 : vector<16x128xf32>
    %cst_15 = arith.constant 9.99999997E-7 : f32
    %25 = vector.broadcast %cst_15 : f32 to vector<16x1xf32>
    %26 = arith.addf %22, %25 : vector<16x1xf32>
    %27 = vector.broadcast %26 : vector<16x1xf32> to vector<16x128xf32>
    %28 = arith.divf %24, %27 : vector<16x128xf32>
    %29 = vector.broadcast %10 : vector<1x128xf32> to vector<16x128xf32>
    %30 = arith.addf %28, %29 : vector<16x128xf32>
    %31 = arith.truncf %30 : vector<16x128xf32> to vector<16x128xbf16>
    %c0_16 = arith.constant 0 : index
    %c0_17 = arith.constant 0 : index
    %32 = vector.load %arg5[%c0_16, %c0_17] : memref<128x384xbf16, #tpu.memory_space<vmem>>, vector<128x384xbf16>
    %cst_18 = arith.constant dense<0.000000e+00> : vector<16x384xf32>
    %33 = tpu.matmul %31, %32, %cst_18 {dimension_numbers = #tpu.dot_dimension_numbers<[1], [0], [0], [1], [0, 0, 1, 1], [], []>} : vector<16x128xbf16>, vector<128x384xbf16>, vector<16x384xf32> -> vector<16x384xf32>
    %c0_19 = arith.constant 0 : index
    %c0_20 = arith.constant 0 : index
    %34 = vector.load %arg6[%c0_19, %c0_20] : memref<1x384xf32, #tpu.memory_space<vmem>>, vector<1x384xf32>
    %35 = vector.broadcast %34 : vector<1x384xf32> to vector<16x384xf32>
    %36 = arith.addf %33, %35 : vector<16x384xf32>
    %37 = vector.extract_strided_slice %36 {offsets = [0, 0], sizes = [16, 128], strides = [1, 1]} : vector<16x384xf32> to vector<16x128xf32>
    %cst_21 = arith.constant 0.176776692 : f32
    %38 = vector.broadcast %cst_21 : f32 to vector<16x128xf32>
    %39 = arith.mulf %37, %38 : vector<16x128xf32>
    %40 = arith.truncf %39 : vector<16x128xf32> to vector<16x128xbf16>
    %41 = vector.extract_strided_slice %36 {offsets = [0, 128], sizes = [16, 128], strides = [1, 1]} : vector<16x384xf32> to vector<16x128xf32>
    %42 = arith.truncf %41 : vector<16x128xf32> to vector<16x128xbf16>
    %43 = vector.extract_strided_slice %36 {offsets = [0, 256], sizes = [16, 128], strides = [1, 1]} : vector<16x384xf32> to vector<16x128xf32>
    %44 = arith.truncf %43 : vector<16x128xf32> to vector<16x128xbf16>
    %45 = vector.extract_strided_slice %40 {offsets = [0, 0], sizes = [16, 32], strides = [1, 1]} : vector<16x128xbf16> to vector<16x32xbf16>
    %46 = vector.extract_strided_slice %42 {offsets = [0, 0], sizes = [16, 32], strides = [1, 1]} : vector<16x128xbf16> to vector<16x32xbf16>
    "tpu.trace_start"() <{level = 10 : i32, message = "qd,kd->qk"}> : () -> ()
    %cst_22 = arith.constant dense<0.000000e+00> : vector<16x16xf32>
    %47 = tpu.matmul %45, %46, %cst_22 {dimension_numbers = #tpu.dot_dimension_numbers<[1], [1], [0], [0], [0, 0, 1, 0], [], []>} : vector<16x32xbf16>, vector<16x32xbf16>, vector<16x16xf32> -> vector<16x16xf32>
    "tpu.trace_stop"() : () -> ()
    %48 = arith.addf %47, %8 : vector<16x16xf32>
    %cst_23 = arith.constant dense<0xFF800000> : vector<16xf32>
    %49 = vector.multi_reduction <maximumf>, %48, %cst_23 [1] : vector<16x16xf32> to vector<16xf32>
    %50 = vector.shape_cast %49 : vector<16xf32> to vector<16x1xf32>
    %51 = vector.broadcast %50 : vector<16x1xf32> to vector<16x16xf32>
    %52 = arith.subf %48, %51 : vector<16x16xf32>
    %53 = math.exp %52 : vector<16x16xf32>
    %cst_24 = arith.constant dense<0.000000e+00> : vector<16xf32>
    %54 = vector.multi_reduction <add>, %53, %cst_24 [1] : vector<16x16xf32> to vector<16xf32>
    %55 = vector.shape_cast %54 : vector<16xf32> to vector<16x1xf32>
    %56 = arith.truncf %53 : vector<16x16xf32> to vector<16x16xbf16>
    %57 = vector.extract_strided_slice %44 {offsets = [0, 0], sizes = [16, 32], strides = [1, 1]} : vector<16x128xbf16> to vector<16x32xbf16>
    %cst_25 = arith.constant dense<0.000000e+00> : vector<16x32xf32>
    %58 = tpu.matmul %56, %57, %cst_25 {dimension_numbers = #tpu.dot_dimension_numbers<[1], [0], [0], [1], [0, 0, 1, 1], [], []>} : vector<16x16xbf16>, vector<16x32xbf16>, vector<16x32xf32> -> vector<16x32xf32>
    %59 = tpu.reciprocal %55 {approx = true} : vector<16x1xf32> -> vector<16x1xf32>
    %60 = vector.broadcast %59 : vector<16x1xf32> to vector<16x32xf32>
    %61 = arith.mulf %58, %60 : vector<16x32xf32>
    %62 = arith.truncf %61 : vector<16x32xf32> to vector<16x32xbf16>
    %c0_26 = arith.constant 0 : index
    %c0_27 = arith.constant 0 : index
    %63 = vector.load %arg16[%c0_26, %c0_27] : memref<16x128xbf16, #tpu.memory_space<vmem>>, vector<16x32xbf16>
    tpu.vector_store %arg16[%c0_26, %c0_27], %62 {strides = array<i32>} : memref<16x128xbf16, #tpu.memory_space<vmem>>, vector<16x32xbf16>,
    %64 = vector.extract_strided_slice %40 {offsets = [0, 32], sizes = [16, 32], strides = [1, 1]} : vector<16x128xbf16> to vector<16x32xbf16>
    %65 = vector.extract_strided_slice %42 {offsets = [0, 32], sizes = [16, 32], strides = [1, 1]} : vector<16x128xbf16> to vector<16x32xbf16>
    "tpu.trace_start"() <{level = 10 : i32, message = "qd,kd->qk"}> : () -> ()
    %cst_28 = arith.constant dense<0.000000e+00> : vector<16x16xf32>
    %66 = tpu.matmul %64, %65, %cst_28 {dimension_numbers = #tpu.dot_dimension_numbers<[1], [1], [0], [0], [0, 0, 1, 0], [], []>} : vector<16x32xbf16>, vector<16x32xbf16>, vector<16x16xf32> -> vector<16x16xf32>
    "tpu.trace_stop"() : () -> ()
    %67 = arith.addf %66, %8 : vector<16x16xf32>
    %cst_29 = arith.constant dense<0xFF800000> : vector<16xf32>
    %68 = vector.multi_reduction <maximumf>, %67, %cst_29 [1] : vector<16x16xf32> to vector<16xf32>
    %69 = vector.shape_cast %68 : vector<16xf32> to vector<16x1xf32>
    %70 = vector.broadcast %69 : vector<16x1xf32> to vector<16x16xf32>
    %71 = arith.subf %67, %70 : vector<16x16xf32>
    %72 = math.exp %71 : vector<16x16xf32>
    %cst_30 = arith.constant dense<0.000000e+00> : vector<16xf32>
    %73 = vector.multi_reduction <add>, %72, %cst_30 [1] : vector<16x16xf32> to vector<16xf32>
    %74 = vector.shape_cast %73 : vector<16xf32> to vector<16x1xf32>
    %75 = arith.truncf %72 : vector<16x16xf32> to vector<16x16xbf16>
    %76 = vector.extract_strided_slice %44 {offsets = [0, 32], sizes = [16, 32], strides = [1, 1]} : vector<16x128xbf16> to vector<16x32xbf16>
    %cst_31 = arith.constant dense<0.000000e+00> : vector<16x32xf32>
    %77 = tpu.matmul %75, %76, %cst_31 {dimension_numbers = #tpu.dot_dimension_numbers<[1], [0], [0], [1], [0, 0, 1, 1], [], []>} : vector<16x16xbf16>, vector<16x32xbf16>, vector<16x32xf32> -> vector<16x32xf32>
    %78 = tpu.reciprocal %74 {approx = true} : vector<16x1xf32> -> vector<16x1xf32>
    %79 = vector.broadcast %78 : vector<16x1xf32> to vector<16x32xf32>
    %80 = arith.mulf %77, %79 : vector<16x32xf32>
    %81 = arith.truncf %80 : vector<16x32xf32> to vector<16x32xbf16>
    %c0_32 = arith.constant 0 : index
    %c32 = arith.constant 32 : index
    %82 = vector.load %arg16[%c0_32, %c32] : memref<16x128xbf16, #tpu.memory_space<vmem>>, vector<16x32xbf16>
    tpu.vector_store %arg16[%c0_32, %c32], %81 {strides = array<i32>} : memref<16x128xbf16, #tpu.memory_space<vmem>>, vector<16x32xbf16>,
    %83 = vector.extract_strided_slice %40 {offsets = [0, 64], sizes = [16, 32], strides = [1, 1]} : vector<16x128xbf16> to vector<16x32xbf16>
    %84 = vector.extract_strided_slice %42 {offsets = [0, 64], sizes = [16, 32], strides = [1, 1]} : vector<16x128xbf16> to vector<16x32xbf16>
    "tpu.trace_start"() <{level = 10 : i32, message = "qd,kd->qk"}> : () -> ()
    %cst_33 = arith.constant dense<0.000000e+00> : vector<16x16xf32>
    %85 = tpu.matmul %83, %84, %cst_33 {dimension_numbers = #tpu.dot_dimension_numbers<[1], [1], [0], [0], [0, 0, 1, 0], [], []>} : vector<16x32xbf16>, vector<16x32xbf16>, vector<16x16xf32> -> vector<16x16xf32>
    "tpu.trace_stop"() : () -> ()
    %86 = arith.addf %85, %8 : vector<16x16xf32>
    %cst_34 = arith.constant dense<0xFF800000> : vector<16xf32>
    %87 = vector.multi_reduction <maximumf>, %86, %cst_34 [1] : vector<16x16xf32> to vector<16xf32>
    %88 = vector.shape_cast %87 : vector<16xf32> to vector<16x1xf32>
    %89 = vector.broadcast %88 : vector<16x1xf32> to vector<16x16xf32>
    %90 = arith.subf %86, %89 : vector<16x16xf32>
    %91 = math.exp %90 : vector<16x16xf32>
    %cst_35 = arith.constant dense<0.000000e+00> : vector<16xf32>
    %92 = vector.multi_reduction <add>, %91, %cst_35 [1] : vector<16x16xf32> to vector<16xf32>
    %93 = vector.shape_cast %92 : vector<16xf32> to vector<16x1xf32>
    %94 = arith.truncf %91 : vector<16x16xf32> to vector<16x16xbf16>
    %95 = vector.extract_strided_slice %44 {offsets = [0, 64], sizes = [16, 32], strides = [1, 1]} : vector<16x128xbf16> to vector<16x32xbf16>
    %cst_36 = arith.constant dense<0.000000e+00> : vector<16x32xf32>
    %96 = tpu.matmul %94, %95, %cst_36 {dimension_numbers = #tpu.dot_dimension_numbers<[1], [0], [0], [1], [0, 0, 1, 1], [], []>} : vector<16x16xbf16>, vector<16x32xbf16>, vector<16x32xf32> -> vector<16x32xf32>
    %97 = tpu.reciprocal %93 {approx = true} : vector<16x1xf32> -> vector<16x1xf32>
    %98 = vector.broadcast %97 : vector<16x1xf32> to vector<16x32xf32>
    %99 = arith.mulf %96, %98 : vector<16x32xf32>
    %100 = arith.truncf %99 : vector<16x32xf32> to vector<16x32xbf16>
    %c0_37 = arith.constant 0 : index
    %c64 = arith.constant 64 : index
    %101 = vector.load %arg16[%c0_37, %c64] : memref<16x128xbf16, #tpu.memory_space<vmem>>, vector<16x32xbf16>
    tpu.vector_store %arg16[%c0_37, %c64], %100 {strides = array<i32>} : memref<16x128xbf16, #tpu.memory_space<vmem>>, vector<16x32xbf16>,
    %102 = vector.extract_strided_slice %40 {offsets = [0, 96], sizes = [16, 32], strides = [1, 1]} : vector<16x128xbf16> to vector<16x32xbf16>
    %103 = vector.extract_strided_slice %42 {offsets = [0, 96], sizes = [16, 32], strides = [1, 1]} : vector<16x128xbf16> to vector<16x32xbf16>
    "tpu.trace_start"() <{level = 10 : i32, message = "qd,kd->qk"}> : () -> ()
    %cst_38 = arith.constant dense<0.000000e+00> : vector<16x16xf32>
    %104 = tpu.matmul %102, %103, %cst_38 {dimension_numbers = #tpu.dot_dimension_numbers<[1], [1], [0], [0], [0, 0, 1, 0], [], []>} : vector<16x32xbf16>, vector<16x32xbf16>, vector<16x16xf32> -> vector<16x16xf32>
    "tpu.trace_stop"() : () -> ()
    %105 = arith.addf %104, %8 : vector<16x16xf32>
    %cst_39 = arith.constant dense<0xFF800000> : vector<16xf32>
    %106 = vector.multi_reduction <maximumf>, %105, %cst_39 [1] : vector<16x16xf32> to vector<16xf32>
    %107 = vector.shape_cast %106 : vector<16xf32> to vector<16x1xf32>
    %108 = vector.broadcast %107 : vector<16x1xf32> to vector<16x16xf32>
    %109 = arith.subf %105, %108 : vector<16x16xf32>
    %110 = math.exp %109 : vector<16x16xf32>
    %cst_40 = arith.constant dense<0.000000e+00> : vector<16xf32>
    %111 = vector.multi_reduction <add>, %110, %cst_40 [1] : vector<16x16xf32> to vector<16xf32>
    %112 = vector.shape_cast %111 : vector<16xf32> to vector<16x1xf32>
    %113 = arith.truncf %110 : vector<16x16xf32> to vector<16x16xbf16>
    %114 = vector.extract_strided_slice %44 {offsets = [0, 96], sizes = [16, 32], strides = [1, 1]} : vector<16x128xbf16> to vector<16x32xbf16>
    %cst_41 = arith.constant dense<0.000000e+00> : vector<16x32xf32>
    %115 = tpu.matmul %113, %114, %cst_41 {dimension_numbers = #tpu.dot_dimension_numbers<[1], [0], [0], [1], [0, 0, 1, 1], [], []>} : vector<16x16xbf16>, vector<16x32xbf16>, vector<16x32xf32> -> vector<16x32xf32>
    %116 = tpu.reciprocal %112 {approx = true} : vector<16x1xf32> -> vector<16x1xf32>
    %117 = vector.broadcast %116 : vector<16x1xf32> to vector<16x32xf32>
    %118 = arith.mulf %115, %117 : vector<16x32xf32>
    %119 = arith.truncf %118 : vector<16x32xf32> to vector<16x32xbf16>
    %c0_42 = arith.constant 0 : index
    %c96 = arith.constant 96 : index
    %120 = vector.load %arg16[%c0_42, %c96] : memref<16x128xbf16, #tpu.memory_space<vmem>>, vector<16x32xbf16>
    tpu.vector_store %arg16[%c0_42, %c96], %119 {strides = array<i32>} : memref<16x128xbf16, #tpu.memory_space<vmem>>, vector<16x32xbf16>,
    %c0_43 = arith.constant 0 : index
    %c0_44 = arith.constant 0 : index
    %121 = vector.load %arg16[%c0_43, %c0_44] : memref<16x128xbf16, #tpu.memory_space<vmem>>, vector<16x128xbf16>
    %c0_45 = arith.constant 0 : index
    %c0_46 = arith.constant 0 : index
    %122 = vector.load %arg7[%c0_45, %c0_46] : memref<128x128xbf16, #tpu.memory_space<vmem>>, vector<128x128xbf16>
    %cst_47 = arith.constant dense<0.000000e+00> : vector<16x128xf32>
    %123 = tpu.matmul %121, %122, %cst_47 {dimension_numbers = #tpu.dot_dimension_numbers<[1], [0], [0], [1], [0, 0, 1, 1], [], []>} : vector<16x128xbf16>, vector<128x128xbf16>, vector<16x128xf32> -> vector<16x128xf32>
    %c0_48 = arith.constant 0 : index
    %c0_49 = arith.constant 0 : index
    %124 = vector.load %arg8[%c0_48, %c0_49] : memref<1x128xf32, #tpu.memory_space<vmem>>, vector<1x128xf32>
    %125 = vector.broadcast %124 : vector<1x128xf32> to vector<16x128xf32>
    %126 = arith.addf %123, %125 : vector<16x128xf32>
    %127 = arith.addf %1, %126 : vector<16x128xf32>
    %c0_50 = arith.constant 0 : index
    %c0_51 = arith.constant 0 : index
    %128 = vector.load %arg9[%c0_50, %c0_51] : memref<1x128xf32, #tpu.memory_space<vmem>>, vector<1x128xf32>
    %c0_52 = arith.constant 0 : index
    %c0_53 = arith.constant 0 : index
    %129 = vector.load %arg10[%c0_52, %c0_53] : memref<1x128xf32, #tpu.memory_space<vmem>>, vector<1x128xf32>
    %cst_54 = arith.constant dense<0.000000e+00> : vector<16xf32>
    %130 = vector.multi_reduction <add>, %127, %cst_54 [1] : vector<16x128xf32> to vector<16xf32>
    %131 = vector.shape_cast %130 : vector<16xf32> to vector<16x1xf32>
    %cst_55 = arith.constant 1.280000e+02 : f32
    %132 = vector.broadcast %cst_55 : f32 to vector<16x1xf32>
    %133 = arith.divf %131, %132 : vector<16x1xf32>
    %134 = vector.broadcast %133 : vector<16x1xf32> to vector<16x128xf32>
    %135 = arith.subf %127, %134 : vector<16x128xf32>
    %136 = arith.mulf %135, %135 : vector<16x128xf32>
    %cst_56 = arith.constant dense<0.000000e+00> : vector<16xf32>
    %137 = vector.multi_reduction <add>, %136, %cst_56 [1] : vector<16x128xf32> to vector<16xf32>
    %138 = vector.shape_cast %137 : vector<16xf32> to vector<16x1xf32>
    %cst_57 = arith.constant 1.270000e+02 : f32
    %139 = vector.broadcast %cst_57 : f32 to vector<16x1xf32>
    %140 = arith.divf %138, %139 : vector<16x1xf32>
    %141 = math.sqrt %140 : vector<16x1xf32>
    %142 = vector.broadcast %128 : vector<1x128xf32> to vector<16x128xf32>
    %143 = arith.mulf %142, %135 : vector<16x128xf32>
    %cst_58 = arith.constant 9.99999997E-7 : f32
    %144 = vector.broadcast %cst_58 : f32 to vector<16x1xf32>
    %145 = arith.addf %141, %144 : vector<16x1xf32>
    %146 = vector.broadcast %145 : vector<16x1xf32> to vector<16x128xf32>
    %147 = arith.divf %143, %146 : vector<16x128xf32>
    %148 = vector.broadcast %129 : vector<1x128xf32> to vector<16x128xf32>
    %149 = arith.addf %147, %148 : vector<16x128xf32>
    %150 = arith.truncf %149 : vector<16x128xf32> to vector<16x128xbf16>
    %cst_59 = arith.constant 0.000000e+00 : f32
    %151 = vector.broadcast %cst_59 : f32 to vector<16x128xf32>
    %c0_60 = arith.constant 0 : index
    %c0_61 = arith.constant 0 : index
    %152 = vector.load %arg11[%c0_60, %c0_61] : memref<128x256xbf16, #tpu.memory_space<vmem>>, vector<128x256xbf16>
    %cst_62 = arith.constant dense<0.000000e+00> : vector<16x256xf32>
    %153 = tpu.matmul %150, %152, %cst_62 {dimension_numbers = #tpu.dot_dimension_numbers<[1], [0], [0], [1], [0, 0, 1, 1], [], []>} : vector<16x128xbf16>, vector<128x256xbf16>, vector<16x256xf32> -> vector<16x256xf32>
    %c0_63 = arith.constant 0 : index
    %c0_64 = arith.constant 0 : index
    %154 = vector.load %arg12[%c0_63, %c0_64] : memref<1x256xf32, #tpu.memory_space<vmem>>, vector<1x256xf32>
    %155 = vector.broadcast %154 : vector<1x256xf32> to vector<16x256xf32>
    %156 = arith.addf %153, %155 : vector<16x256xf32>
    %cst_65 = arith.constant 0.000000e+00 : f32
    %157 = vector.broadcast %cst_65 : f32 to vector<16x256xf32>
    %158 = arith.maximumf %156, %157 : vector<16x256xf32>
    %159 = arith.truncf %158 : vector<16x256xf32> to vector<16x256xbf16>
    %c0_66 = arith.constant 0 : index
    %c0_67 = arith.constant 0 : index
    %160 = vector.load %arg13[%c0_66, %c0_67] : memref<256x128xbf16, #tpu.memory_space<vmem>>, vector<256x128xbf16>
    %cst_68 = arith.constant dense<0.000000e+00> : vector<16x128xf32>
    %161 = tpu.matmul %159, %160, %cst_68 {dimension_numbers = #tpu.dot_dimension_numbers<[1], [0], [0], [1], [0, 0, 1, 1], [], []>} : vector<16x256xbf16>, vector<256x128xbf16>, vector<16x128xf32> -> vector<16x128xf32>
    %162 = arith.addf %151, %161 : vector<16x128xf32>
    %c0_69 = arith.constant 0 : index
    %c0_70 = arith.constant 0 : index
    %163 = vector.load %arg14[%c0_69, %c0_70] : memref<1x128xf32, #tpu.memory_space<vmem>>, vector<1x128xf32>
    %164 = vector.broadcast %163 : vector<1x128xf32> to vector<16x128xf32>
    %165 = arith.addf %162, %164 : vector<16x128xf32>
    %166 = arith.addf %127, %165 : vector<16x128xf32>
    %c0_71 = arith.constant 0 : index
    %c0_72 = arith.constant 0 : index
    %c0_73 = arith.constant 0 : index
    %167 = vector.load %arg15[%c0_71, %c0_72, %c0_73] : memref<1x16x128xf32, #tpu.memory_space<vmem>>, vector<1x16x128xf32>
    %168 = vector.shape_cast %167 : vector<1x16x128xf32> to vector<16x128xf32>
    %169 = vector.shape_cast %166 : vector<16x128xf32> to vector<1x16x128xf32>
    tpu.vector_store %arg15[%c0_71, %c0_72, %c0_73], %169 {strides = array<i32>} : memref<1x16x128xf32, #tpu.memory_space<vmem>>, vector<1x16x128xf32>,
    return
  }
  func.func @transform_0(%arg0: i32) -> (i32, i32, i32) {
    %c0_i32 = arith.constant 0 : i32
    %c0_i32_0 = arith.constant 0 : i32
    %c0_i32_1 = arith.constant 0 : i32
    return %arg0, %c0_i32, %c0_i32_0 : i32, i32, i32
  }
  func.func @transform_1(%arg0: i32) -> (i32, i32, i32) {
    %c0_i32 = arith.constant 0 : i32
    %c0_i32_0 = arith.constant 0 : i32
    %c0_i32_1 = arith.constant 0 : i32
    return %arg0, %c0_i32, %c0_i32_0 : i32, i32, i32
  }
  func.func @transform_2(%arg0: i32) -> (i32, i32) {
    %c0_i32 = arith.constant 0 : i32
    %c0_i32_0 = arith.constant 0 : i32
    %c0_i32_1 = arith.constant 0 : i32
    return %c0_i32, %c0_i32_0 : i32, i32
  }
  func.func @transform_3(%arg0: i32) -> (i32, i32) {
    %c0_i32 = arith.constant 0 : i32
    %c0_i32_0 = arith.constant 0 : i32
    %c0_i32_1 = arith.constant 0 : i32
    return %c0_i32, %c0_i32_0 : i32, i32
  }
  func.func @transform_4(%arg0: i32) -> (i32, i32) {
    %c0_i32 = arith.constant 0 : i32
    %c0_i32_0 = arith.constant 0 : i32
    %c0_i32_1 = arith.constant 0 : i32
    return %c0_i32, %c0_i32_0 : i32, i32
  }
  func.func @transform_5(%arg0: i32) -> (i32, i32) {
    %c0_i32 = arith.constant 0 : i32
    %c0_i32_0 = arith.constant 0 : i32
    %c0_i32_1 = arith.constant 0 : i32
    return %c0_i32, %c0_i32_0 : i32, i32
  }
  func.func @transform_6(%arg0: i32) -> (i32, i32) {
    %c0_i32 = arith.constant 0 : i32
    %c0_i32_0 = arith.constant 0 : i32
    %c0_i32_1 = arith.constant 0 : i32
    return %c0_i32, %c0_i32_0 : i32, i32
  }
  func.func @transform_7(%arg0: i32) -> (i32, i32) {
    %c0_i32 = arith.constant 0 : i32
    %c0_i32_0 = arith.constant 0 : i32
    %c0_i32_1 = arith.constant 0 : i32
    return %c0_i32, %c0_i32_0 : i32, i32
  }
  func.func @transform_8(%arg0: i32) -> (i32, i32) {
    %c0_i32 = arith.constant 0 : i32
    %c0_i32_0 = arith.constant 0 : i32
    %c0_i32_1 = arith.constant 0 : i32
    return %c0_i32, %c0_i32_0 : i32, i32
  }
  func.func @transform_9(%arg0: i32) -> (i32, i32) {
    %c0_i32 = arith.constant 0 : i32
    %c0_i32_0 = arith.constant 0 : i32
    %c0_i32_1 = arith.constant 0 : i32
    return %c0_i32, %c0_i32_0 : i32, i32
  }
  func.func @transform_10(%arg0: i32) -> (i32, i32) {
    %c0_i32 = arith.constant 0 : i32
    %c0_i32_0 = arith.constant 0 : i32
    %c0_i32_1 = arith.constant 0 : i32
    return %c0_i32, %c0_i32_0 : i32, i32
  }
  func.func @transform_11(%arg0: i32) -> (i32, i32) {
    %c0_i32 = arith.constant 0 : i32
    %c0_i32_0 = arith.constant 0 : i32
    %c0_i32_1 = arith.constant 0 : i32
    return %c0_i32, %c0_i32_0 : i32, i32
  }
  func.func @transform_12(%arg0: i32) -> (i32, i32) {
    %c0_i32 = arith.constant 0 : i32
    %c0_i32_0 = arith.constant 0 : i32
    %c0_i32_1 = arith.constant 0 : i32
    return %c0_i32, %c0_i32_0 : i32, i32
  }
  func.func @transform_13(%arg0: i32) -> (i32, i32) {
    %c0_i32 = arith.constant 0 : i32
    %c0_i32_0 = arith.constant 0 : i32
    %c0_i32_1 = arith.constant 0 : i32
    return %c0_i32, %c0_i32_0 : i32, i32
  }
  func.func @transform_14(%arg0: i32) -> (i32, i32, i32) {
    %c0_i32 = arith.constant 0 : i32
    %c0_i32_0 = arith.constant 0 : i32
    %c0_i32_1 = arith.constant 0 : i32
    return %arg0, %c0_i32, %c0_i32_0 : i32, i32, i32
  }
}

module attributes {stable_mosaic.version = 11 : i64} {
  func.func @encoder_layer_kernel(%arg0: i32, %arg1: memref<1x16x128xf32, #tpu.memory_space<vmem>>, %arg2: memref<1x16x16xf32, #tpu.memory_space<vmem>>, %arg3: memref<1x128xf32, #tpu.memory_space<vmem>>, %arg4: memref<1x128xf32, #tpu.memory_space<vmem>>, %arg5: memref<128x384xbf16, #tpu.memory_space<vmem>>, %arg6: memref<1x384xf32, #tpu.memory_space<vmem>>, %arg7: memref<128x128xbf16, #tpu.memory_space<vmem>>, %arg8: memref<1x128xf32, #tpu.memory_space<vmem>>, %arg9: memref<1x128xf32, #tpu.memory_space<vmem>>, %arg10: memref<1x128xf32, #tpu.memory_space<vmem>>, %arg11: memref<128x256xbf16, #tpu.memory_space<vmem>>, %arg12: memref<1x256xf32, #tpu.memory_space<vmem>>, %arg13: memref<256x128xbf16, #tpu.memory_space<vmem>>, %arg14: memref<1x128xf32, #tpu.memory_space<vmem>>, %arg15: memref<1x16x128xf32, #tpu.memory_space<vmem>>, %arg16: memref<16x128xbf16, #tpu.memory_space<vmem>>) attributes {dimension_semantics = [#tpu.dimension_semantics<parallel>], iteration_bounds = array<i64: 2>, scalar_prefetch = 0 : i64, scratch_operands = 1 : i64, tpu.core_type = #tpu.core_type<tc>, window_params = [{transform_indices = @transform_0, window_bounds = array<i64: 1, 16, 128>}, {transform_indices = @transform_1, window_bounds = array<i64: 1, 16, 16>}, {pipeline_mode = #tpu.pipeline_mode<synchronous>, transform_indices = @transform_2, window_bounds = array<i64: 1, 128>}, {pipeline_mode = #tpu.pipeline_mode<synchronous>, transform_indices = @transform_3, window_bounds = array<i64: 1, 128>}, {pipeline_mode = #tpu.pipeline_mode<synchronous>, transform_indices = @transform_4, window_bounds = array<i64: 128, 384>}, {pipeline_mode = #tpu.pipeline_mode<synchronous>, transform_indices = @transform_5, window_bounds = array<i64: 1, 384>}, {pipeline_mode = #tpu.pipeline_mode<synchronous>, transform_indices = @transform_6, window_bounds = array<i64: 128, 128>}, {pipeline_mode = #tpu.pipeline_mode<synchronous>, transform_indices = @transform_7, window_bounds = array<i64: 1, 128>}, {pipeline_mode = #tpu.pipeline_mode<synchronous>, transform_indices = @transform_8, window_bounds = array<i64: 1, 128>}, {pipeline_mode = #tpu.pipeline_mode<synchronous>, transform_indices = @transform_9, window_bounds = array<i64: 1, 128>}, {pipeline_mode = #tpu.pipeline_mode<synchronous>, transform_indices = @transform_10, window_bounds = array<i64: 128, 256>}, {pipeline_mode = #tpu.pipeline_mode<synchronous>, transform_indices = @transform_11, window_bounds = array<i64: 1, 256>}, {pipeline_mode = #tpu.pipeline_mode<synchronous>, transform_indices = @transform_12, window_bounds = array<i64: 256, 128>}, {pipeline_mode = #tpu.pipeline_mode<synchronous>, transform_indices = @transform_13, window_bounds = array<i64: 1, 128>}, {transform_indices = @transform_14, window_bounds = array<i64: 1, 16, 128>}]} {
    %c0 = arith.constant 0 : index
    %c0_0 = arith.constant 0 : index
    %c0_1 = arith.constant 0 : index
    %0 = vector.load %arg1[%c0, %c0_0, %c0_1] : memref<1x16x128xf32, #tpu.memory_space<vmem>>, vector<1x16x128xf32>
    %1 = vector.shape_cast %0 : vector<1x16x128xf32> to vector<16x128xf32>
    %c0_2 = arith.constant 0 : index
    %c0_3 = arith.constant 0 : index
    %c0_4 = arith.constant 0 : index
    %2 = vector.load %arg2[%c0_2, %c0_3, %c0_4] : memref<1x16x16xf32, #tpu.memory_space<vmem>>, vector<1x16x16xf32>
    %3 = vector.shape_cast %2 : vector<1x16x16xf32> to vector<16x16xf32>
    %cst = arith.constant 0.000000e+00 : f32
    %4 = vector.broadcast %cst : f32 to vector<16x16xf32>
    %5 = arith.cmpf ogt, %3, %4 : vector<16x16xf32>
    %cst_5 = arith.constant 0.000000e+00 : f32
    %cst_6 = arith.constant -1.000000e+09 : f32
    %6 = vector.broadcast %cst_5 : f32 to vector<16x16xf32>
    %7 = vector.broadcast %cst_6 : f32 to vector<16x16xf32>
    %8 = arith.select %5, %6, %7 : vector<16x16xi1>, vector<16x16xf32>
    %c0_7 = arith.constant 0 : index
    %c0_8 = arith.constant 0 : index
    %9 = vector.load %arg3[%c0_7, %c0_8] : memref<1x128xf32, #tpu.memory_space<vmem>>, vector<1x128xf32>
    %c0_9 = arith.constant 0 : index
    %c0_10 = arith.constant 0 : index
    %10 = vector.load %arg4[%c0_9, %c0_10] : memref<1x128xf32, #tpu.memory_space<vmem>>, vector<1x128xf32>
    %cst_11 = arith.constant dense<0.000000e+00> : vector<16xf32>
    %11 = vector.multi_reduction <add>, %1, %cst_11 [1] : vector<16x128xf32> to vector<16xf32>
    %12 = vector.shape_cast %11 : vector<16xf32> to vector<16x1xf32>
    %cst_12 = arith.constant 1.280000e+02 : f32
    %13 = vector.broadcast %cst_12 : f32 to vector<16x1xf32>
    %14 = arith.divf %12, %13 : vector<16x1xf32>
    %15 = vector.broadcast %14 : vector<16x1xf32> to vector<16x128xf32>
    %16 = arith.subf %1, %15 : vector<16x128xf32>
    %17 = arith.mulf %16, %16 : vector<16x128xf32>
    %cst_13 = arith.constant dense<0.000000e+00> : vector<16xf32>
    %18 = vector.multi_reduction <add>, %17, %cst_13 [1] : vector<16x128xf32> to vector<16xf32>
    %19 = vector.shape_cast %18 : vector<16xf32> to vector<16x1xf32>
    %cst_14 = arith.constant 1.270000e+02 : f32
    %20 = vector.broadcast %cst_14 : f32 to vector<16x1xf32>
    %21 = arith.divf %19, %20 : vector<16x1xf32>
    %22 = math.sqrt %21 : vector<16x1xf32>
    %23 = vector.broadcast %9 : vector<1x128xf32> to vector<16x128xf32>
    %24 = arith.mulf %23, %16 : vector<16x128xf32>
    %cst_15 = arith.constant 9.99999997E-7 : f32
    %25 = vector.broadcast %cst_15 : f32 to vector<16x1xf32>
    %26 = arith.addf %22, %25 : vector<16x1xf32>
    %27 = vector.broadcast %26 : vector<16x1xf32> to vector<16x128xf32>
    %28 = arith.divf %24, %27 : vector<16x128xf32>
    %29 = vector.broadcast %10 : vector<1x128xf32> to vector<16x128xf32>
    %30 = arith.addf %28, %29 : vector<16x128xf32>
    %31 = arith.truncf %30 : vector<16x128xf32> to vector<16x128xbf16>
    %c0_16 = arith.constant 0 : index
    %c0_17 = arith.constant 0 : index
    %32 = vector.load %arg5[%c0_16, %c0_17] : memref<128x384xbf16, #tpu.memory_space<vmem>>, vector<128x384xbf16>
    %cst_18 = arith.constant dense<0.000000e+00> : vector<16x384xf32>
    %33 = tpu.matmul %31, %32, %cst_18 {dimension_numbers = #tpu.dot_dimension_numbers<[1], [0], [0], [1], [0, 0, 1, 1], [], []>} : vector<16x128xbf16>, vector<128x384xbf16>, vector<16x384xf32> -> vector<16x384xf32>
    %c0_19 = arith.constant 0 : index
    %c0_20 = arith.constant 0 : index
    %34 = vector.load %arg6[%c0_19, %c0_20] : memref<1x384xf32, #tpu.memory_space<vmem>>, vector<1x384xf32>
    %35 = vector.broadcast %34 : vector<1x384xf32> to vector<16x384xf32>
    %36 = arith.addf %33, %35 : vector<16x384xf32>
    %37 = vector.extract_strided_slice %36 {offsets = [0, 0], sizes = [16, 128], strides = [1, 1]} : vector<16x384xf32> to vector<16x128xf32>
    %cst_21 = arith.constant 0.176776692 : f32
    %38 = vector.broadcast %cst_21 : f32 to vector<16x128xf32>
    %39 = arith.mulf %37, %38 : vector<16x128xf32>
    %40 = arith.truncf %39 : vector<16x128xf32> to vector<16x128xbf16>
    %41 = vector.extract_strided_slice %36 {offsets = [0, 128], sizes = [16, 128], strides = [1, 1]} : vector<16x384xf32> to vector<16x128xf32>
    %42 = arith.truncf %41 : vector<16x128xf32> to vector<16x128xbf16>
    %43 = vector.extract_strided_slice %36 {offsets = [0, 256], sizes = [16, 128], strides = [1, 1]} : vector<16x384xf32> to vector<16x128xf32>
    %44 = arith.truncf %43 : vector<16x128xf32> to vector<16x128xbf16>
    %45 = vector.extract_strided_slice %40 {offsets = [0, 0], sizes = [16, 32], strides = [1, 1]} : vector<16x128xbf16> to vector<16x32xbf16>
    %46 = vector.extract_strided_slice %42 {offsets = [0, 0], sizes = [16, 32], strides = [1, 1]} : vector<16x128xbf16> to vector<16x32xbf16>
    "tpu.trace_start"() <{level = 10 : i32, message = "qd,kd->qk"}> : () -> ()
    %cst_22 = arith.constant dense<0.000000e+00> : vector<16x16xf32>
    %47 = tpu.matmul %45, %46, %cst_22 {dimension_numbers = #tpu.dot_dimension_numbers<[1], [1], [0], [0], [0, 0, 1, 0], [], []>} : vector<16x32xbf16>, vector<16x32xbf16>, vector<16x16xf32> -> vector<16x16xf32>
    "tpu.trace_stop"() : () -> ()
    %48 = arith.addf %47, %8 : vector<16x16xf32>
    %cst_23 = arith.constant dense<0xFF800000> : vector<16xf32>
    %49 = vector.multi_reduction <maximumf>, %48, %cst_23 [1] : vector<16x16xf32> to vector<16xf32>
    %50 = vector.shape_cast %49 : vector<16xf32> to vector<16x1xf32>
    %51 = vector.broadcast %50 : vector<16x1xf32> to vector<16x16xf32>
    %52 = arith.subf %48, %51 : vector<16x16xf32>
    %53 = math.exp %52 : vector<16x16xf32>
    %cst_24 = arith.constant dense<0.000000e+00> : vector<16xf32>
    %54 = vector.multi_reduction <add>, %53, %cst_24 [1] : vector<16x16xf32> to vector<16xf32>
    %55 = vector.shape_cast %54 : vector<16xf32> to vector<16x1xf32>
    %56 = arith.truncf %53 : vector<16x16xf32> to vector<16x16xbf16>
    %57 = vector.extract_strided_slice %44 {offsets = [0, 0], sizes = [16, 32], strides = [1, 1]} : vector<16x128xbf16> to vector<16x32xbf16>
    %cst_25 = arith.constant dense<0.000000e+00> : vector<16x32xf32>
    %58 = tpu.matmul %56, %57, %cst_25 {dimension_numbers = #tpu.dot_dimension_numbers<[1], [0], [0], [1], [0, 0, 1, 1], [], []>} : vector<16x16xbf16>, vector<16x32xbf16>, vector<16x32xf32> -> vector<16x32xf32>
    %59 = tpu.reciprocal %55 {approx = true} : vector<16x1xf32> -> vector<16x1xf32>
    %60 = vector.broadcast %59 : vector<16x1xf32> to vector<16x32xf32>
    %61 = arith.mulf %58, %60 : vector<16x32xf32>
    %62 = arith.truncf %61 : vector<16x32xf32> to vector<16x32xbf16>
    %c0_26 = arith.constant 0 : index
    %c0_27 = arith.constant 0 : index
    %63 = vector.load %arg16[%c0_26, %c0_27] : memref<16x128xbf16, #tpu.memory_space<vmem>>, vector<16x32xbf16>
    tpu.vector_store %arg16[%c0_26, %c0_27], %62 {strides = array<i32>} : memref<16x128xbf16, #tpu.memory_space<vmem>>, vector<16x32xbf16>,
    %64 = vector.extract_strided_slice %40 {offsets = [0, 32], sizes = [16, 32], strides = [1, 1]} : vector<16x128xbf16> to vector<16x32xbf16>
    %65 = vector.extract_strided_slice %42 {offsets = [0, 32], sizes = [16, 32], strides = [1, 1]} : vector<16x128xbf16> to vector<16x32xbf16>
    "tpu.trace_start"() <{level = 10 : i32, message = "qd,kd->qk"}> : () -> ()
    %cst_28 = arith.constant dense<0.000000e+00> : vector<16x16xf32>
    %66 = tpu.matmul %64, %65, %cst_28 {dimension_numbers = #tpu.dot_dimension_numbers<[1], [1], [0], [0], [0, 0, 1, 0], [], []>} : vector<16x32xbf16>, vector<16x32xbf16>, vector<16x16xf32> -> vector<16x16xf32>
    "tpu.trace_stop"() : () -> ()
    %67 = arith.addf %66, %8 : vector<16x16xf32>
    %cst_29 = arith.constant dense<0xFF800000> : vector<16xf32>
    %68 = vector.multi_reduction <maximumf>, %67, %cst_29 [1] : vector<16x16xf32> to vector<16xf32>
    %69 = vector.shape_cast %68 : vector<16xf32> to vector<16x1xf32>
    %70 = vector.broadcast %69 : vector<16x1xf32> to vector<16x16xf32>
    %71 = arith.subf %67, %70 : vector<16x16xf32>
    %72 = math.exp %71 : vector<16x16xf32>
    %cst_30 = arith.constant dense<0.000000e+00> : vector<16xf32>
    %73 = vector.multi_reduction <add>, %72, %cst_30 [1] : vector<16x16xf32> to vector<16xf32>
    %74 = vector.shape_cast %73 : vector<16xf32> to vector<16x1xf32>
    %75 = arith.truncf %72 : vector<16x16xf32> to vector<16x16xbf16>
    %76 = vector.extract_strided_slice %44 {offsets = [0, 32], sizes = [16, 32], strides = [1, 1]} : vector<16x128xbf16> to vector<16x32xbf16>
    %cst_31 = arith.constant dense<0.000000e+00> : vector<16x32xf32>
    %77 = tpu.matmul %75, %76, %cst_31 {dimension_numbers = #tpu.dot_dimension_numbers<[1], [0], [0], [1], [0, 0, 1, 1], [], []>} : vector<16x16xbf16>, vector<16x32xbf16>, vector<16x32xf32> -> vector<16x32xf32>
    %78 = tpu.reciprocal %74 {approx = true} : vector<16x1xf32> -> vector<16x1xf32>
    %79 = vector.broadcast %78 : vector<16x1xf32> to vector<16x32xf32>
    %80 = arith.mulf %77, %79 : vector<16x32xf32>
    %81 = arith.truncf %80 : vector<16x32xf32> to vector<16x32xbf16>
    %c0_32 = arith.constant 0 : index
    %c32 = arith.constant 32 : index
    %82 = vector.load %arg16[%c0_32, %c32] : memref<16x128xbf16, #tpu.memory_space<vmem>>, vector<16x32xbf16>
    tpu.vector_store %arg16[%c0_32, %c32], %81 {strides = array<i32>} : memref<16x128xbf16, #tpu.memory_space<vmem>>, vector<16x32xbf16>,
    %83 = vector.extract_strided_slice %40 {offsets = [0, 64], sizes = [16, 32], strides = [1, 1]} : vector<16x128xbf16> to vector<16x32xbf16>
    %84 = vector.extract_strided_slice %42 {offsets = [0, 64], sizes = [16, 32], strides = [1, 1]} : vector<16x128xbf16> to vector<16x32xbf16>
    "tpu.trace_start"() <{level = 10 : i32, message = "qd,kd->qk"}> : () -> ()
    %cst_33 = arith.constant dense<0.000000e+00> : vector<16x16xf32>
    %85 = tpu.matmul %83, %84, %cst_33 {dimension_numbers = #tpu.dot_dimension_numbers<[1], [1], [0], [0], [0, 0, 1, 0], [], []>} : vector<16x32xbf16>, vector<16x32xbf16>, vector<16x16xf32> -> vector<16x16xf32>
    "tpu.trace_stop"() : () -> ()
    %86 = arith.addf %85, %8 : vector<16x16xf32>
    %cst_34 = arith.constant dense<0xFF800000> : vector<16xf32>
    %87 = vector.multi_reduction <maximumf>, %86, %cst_34 [1] : vector<16x16xf32> to vector<16xf32>
    %88 = vector.shape_cast %87 : vector<16xf32> to vector<16x1xf32>
    %89 = vector.broadcast %88 : vector<16x1xf32> to vector<16x16xf32>
    %90 = arith.subf %86, %89 : vector<16x16xf32>
    %91 = math.exp %90 : vector<16x16xf32>
    %cst_35 = arith.constant dense<0.000000e+00> : vector<16xf32>
    %92 = vector.multi_reduction <add>, %91, %cst_35 [1] : vector<16x16xf32> to vector<16xf32>
    %93 = vector.shape_cast %92 : vector<16xf32> to vector<16x1xf32>
    %94 = arith.truncf %91 : vector<16x16xf32> to vector<16x16xbf16>
    %95 = vector.extract_strided_slice %44 {offsets = [0, 64], sizes = [16, 32], strides = [1, 1]} : vector<16x128xbf16> to vector<16x32xbf16>
    %cst_36 = arith.constant dense<0.000000e+00> : vector<16x32xf32>
    %96 = tpu.matmul %94, %95, %cst_36 {dimension_numbers = #tpu.dot_dimension_numbers<[1], [0], [0], [1], [0, 0, 1, 1], [], []>} : vector<16x16xbf16>, vector<16x32xbf16>, vector<16x32xf32> -> vector<16x32xf32>
    %97 = tpu.reciprocal %93 {approx = true} : vector<16x1xf32> -> vector<16x1xf32>
    %98 = vector.broadcast %97 : vector<16x1xf32> to vector<16x32xf32>
    %99 = arith.mulf %96, %98 : vector<16x32xf32>
    %100 = arith.truncf %99 : vector<16x32xf32> to vector<16x32xbf16>
    %c0_37 = arith.constant 0 : index
    %c64 = arith.constant 64 : index
    %101 = vector.load %arg16[%c0_37, %c64] : memref<16x128xbf16, #tpu.memory_space<vmem>>, vector<16x32xbf16>
    tpu.vector_store %arg16[%c0_37, %c64], %100 {strides = array<i32>} : memref<16x128xbf16, #tpu.memory_space<vmem>>, vector<16x32xbf16>,
    %102 = vector.extract_strided_slice %40 {offsets = [0, 96], sizes = [16, 32], strides = [1, 1]} : vector<16x128xbf16> to vector<16x32xbf16>
    %103 = vector.extract_strided_slice %42 {offsets = [0, 96], sizes = [16, 32], strides = [1, 1]} : vector<16x128xbf16> to vector<16x32xbf16>
    "tpu.trace_start"() <{level = 10 : i32, message = "qd,kd->qk"}> : () -> ()
    %cst_38 = arith.constant dense<0.000000e+00> : vector<16x16xf32>
    %104 = tpu.matmul %102, %103, %cst_38 {dimension_numbers = #tpu.dot_dimension_numbers<[1], [1], [0], [0], [0, 0, 1, 0], [], []>} : vector<16x32xbf16>, vector<16x32xbf16>, vector<16x16xf32> -> vector<16x16xf32>
    "tpu.trace_stop"() : () -> ()
    %105 = arith.addf %104, %8 : vector<16x16xf32>
    %cst_39 = arith.constant dense<0xFF800000> : vector<16xf32>
    %106 = vector.multi_reduction <maximumf>, %105, %cst_39 [1] : vector<16x16xf32> to vector<16xf32>
    %107 = vector.shape_cast %106 : vector<16xf32> to vector<16x1xf32>
    %108 = vector.broadcast %107 : vector<16x1xf32> to vector<16x16xf32>
    %109 = arith.subf %105, %108 : vector<16x16xf32>
    %110 = math.exp %109 : vector<16x16xf32>
    %cst_40 = arith.constant dense<0.000000e+00> : vector<16xf32>
    %111 = vector.multi_reduction <add>, %110, %cst_40 [1] : vector<16x16xf32> to vector<16xf32>
    %112 = vector.shape_cast %111 : vector<16xf32> to vector<16x1xf32>
    %113 = arith.truncf %110 : vector<16x16xf32> to vector<16x16xbf16>
    %114 = vector.extract_strided_slice %44 {offsets = [0, 96], sizes = [16, 32], strides = [1, 1]} : vector<16x128xbf16> to vector<16x32xbf16>
    %cst_41 = arith.constant dense<0.000000e+00> : vector<16x32xf32>
    %115 = tpu.matmul %113, %114, %cst_41 {dimension_numbers = #tpu.dot_dimension_numbers<[1], [0], [0], [1], [0, 0, 1, 1], [], []>} : vector<16x16xbf16>, vector<16x32xbf16>, vector<16x32xf32> -> vector<16x32xf32>
    %116 = tpu.reciprocal %112 {approx = true} : vector<16x1xf32> -> vector<16x1xf32>
    %117 = vector.broadcast %116 : vector<16x1xf32> to vector<16x32xf32>
    %118 = arith.mulf %115, %117 : vector<16x32xf32>
    %119 = arith.truncf %118 : vector<16x32xf32> to vector<16x32xbf16>
    %c0_42 = arith.constant 0 : index
    %c96 = arith.constant 96 : index
    %120 = vector.load %arg16[%c0_42, %c96] : memref<16x128xbf16, #tpu.memory_space<vmem>>, vector<16x32xbf16>
    tpu.vector_store %arg16[%c0_42, %c96], %119 {strides = array<i32>} : memref<16x128xbf16, #tpu.memory_space<vmem>>, vector<16x32xbf16>,
    %c0_43 = arith.constant 0 : index
    %c0_44 = arith.constant 0 : index
    %121 = vector.load %arg16[%c0_43, %c0_44] : memref<16x128xbf16, #tpu.memory_space<vmem>>, vector<16x128xbf16>
    %c0_45 = arith.constant 0 : index
    %c0_46 = arith.constant 0 : index
    %122 = vector.load %arg7[%c0_45, %c0_46] : memref<128x128xbf16, #tpu.memory_space<vmem>>, vector<128x128xbf16>
    %cst_47 = arith.constant dense<0.000000e+00> : vector<16x128xf32>
    %123 = tpu.matmul %121, %122, %cst_47 {dimension_numbers = #tpu.dot_dimension_numbers<[1], [0], [0], [1], [0, 0, 1, 1], [], []>} : vector<16x128xbf16>, vector<128x128xbf16>, vector<16x128xf32> -> vector<16x128xf32>
    %c0_48 = arith.constant 0 : index
    %c0_49 = arith.constant 0 : index
    %124 = vector.load %arg8[%c0_48, %c0_49] : memref<1x128xf32, #tpu.memory_space<vmem>>, vector<1x128xf32>
    %125 = vector.broadcast %124 : vector<1x128xf32> to vector<16x128xf32>
    %126 = arith.addf %123, %125 : vector<16x128xf32>
    %127 = arith.addf %1, %126 : vector<16x128xf32>
    %c0_50 = arith.constant 0 : index
    %c0_51 = arith.constant 0 : index
    %128 = vector.load %arg9[%c0_50, %c0_51] : memref<1x128xf32, #tpu.memory_space<vmem>>, vector<1x128xf32>
    %c0_52 = arith.constant 0 : index
    %c0_53 = arith.constant 0 : index
    %129 = vector.load %arg10[%c0_52, %c0_53] : memref<1x128xf32, #tpu.memory_space<vmem>>, vector<1x128xf32>
    %cst_54 = arith.constant dense<0.000000e+00> : vector<16xf32>
    %130 = vector.multi_reduction <add>, %127, %cst_54 [1] : vector<16x128xf32> to vector<16xf32>
    %131 = vector.shape_cast %130 : vector<16xf32> to vector<16x1xf32>
    %cst_55 = arith.constant 1.280000e+02 : f32
    %132 = vector.broadcast %cst_55 : f32 to vector<16x1xf32>
    %133 = arith.divf %131, %132 : vector<16x1xf32>
    %134 = vector.broadcast %133 : vector<16x1xf32> to vector<16x128xf32>
    %135 = arith.subf %127, %134 : vector<16x128xf32>
    %136 = arith.mulf %135, %135 : vector<16x128xf32>
    %cst_56 = arith.constant dense<0.000000e+00> : vector<16xf32>
    %137 = vector.multi_reduction <add>, %136, %cst_56 [1] : vector<16x128xf32> to vector<16xf32>
    %138 = vector.shape_cast %137 : vector<16xf32> to vector<16x1xf32>
    %cst_57 = arith.constant 1.270000e+02 : f32
    %139 = vector.broadcast %cst_57 : f32 to vector<16x1xf32>
    %140 = arith.divf %138, %139 : vector<16x1xf32>
    %141 = math.sqrt %140 : vector<16x1xf32>
    %142 = vector.broadcast %128 : vector<1x128xf32> to vector<16x128xf32>
    %143 = arith.mulf %142, %135 : vector<16x128xf32>
    %cst_58 = arith.constant 9.99999997E-7 : f32
    %144 = vector.broadcast %cst_58 : f32 to vector<16x1xf32>
    %145 = arith.addf %141, %144 : vector<16x1xf32>
    %146 = vector.broadcast %145 : vector<16x1xf32> to vector<16x128xf32>
    %147 = arith.divf %143, %146 : vector<16x128xf32>
    %148 = vector.broadcast %129 : vector<1x128xf32> to vector<16x128xf32>
    %149 = arith.addf %147, %148 : vector<16x128xf32>
    %150 = arith.truncf %149 : vector<16x128xf32> to vector<16x128xbf16>
    %cst_59 = arith.constant 0.000000e+00 : f32
    %151 = vector.broadcast %cst_59 : f32 to vector<16x128xf32>
    %c0_60 = arith.constant 0 : index
    %c0_61 = arith.constant 0 : index
    %152 = vector.load %arg11[%c0_60, %c0_61] : memref<128x256xbf16, #tpu.memory_space<vmem>>, vector<128x256xbf16>
    %cst_62 = arith.constant dense<0.000000e+00> : vector<16x256xf32>
    %153 = tpu.matmul %150, %152, %cst_62 {dimension_numbers = #tpu.dot_dimension_numbers<[1], [0], [0], [1], [0, 0, 1, 1], [], []>} : vector<16x128xbf16>, vector<128x256xbf16>, vector<16x256xf32> -> vector<16x256xf32>
    %c0_63 = arith.constant 0 : index
    %c0_64 = arith.constant 0 : index
    %154 = vector.load %arg12[%c0_63, %c0_64] : memref<1x256xf32, #tpu.memory_space<vmem>>, vector<1x256xf32>
    %155 = vector.broadcast %154 : vector<1x256xf32> to vector<16x256xf32>
    %156 = arith.addf %153, %155 : vector<16x256xf32>
    %cst_65 = arith.constant 0.000000e+00 : f32
    %157 = vector.broadcast %cst_65 : f32 to vector<16x256xf32>
    %158 = arith.maximumf %156, %157 : vector<16x256xf32>
    %159 = arith.truncf %158 : vector<16x256xf32> to vector<16x256xbf16>
    %c0_66 = arith.constant 0 : index
    %c0_67 = arith.constant 0 : index
    %160 = vector.load %arg13[%c0_66, %c0_67] : memref<256x128xbf16, #tpu.memory_space<vmem>>, vector<256x128xbf16>
    %cst_68 = arith.constant dense<0.000000e+00> : vector<16x128xf32>
    %161 = tpu.matmul %159, %160, %cst_68 {dimension_numbers = #tpu.dot_dimension_numbers<[1], [0], [0], [1], [0, 0, 1, 1], [], []>} : vector<16x256xbf16>, vector<256x128xbf16>, vector<16x128xf32> -> vector<16x128xf32>
    %162 = arith.addf %151, %161 : vector<16x128xf32>
    %c0_69 = arith.constant 0 : index
    %c0_70 = arith.constant 0 : index
    %163 = vector.load %arg14[%c0_69, %c0_70] : memref<1x128xf32, #tpu.memory_space<vmem>>, vector<1x128xf32>
    %164 = vector.broadcast %163 : vector<1x128xf32> to vector<16x128xf32>
    %165 = arith.addf %162, %164 : vector<16x128xf32>
    %166 = arith.addf %127, %165 : vector<16x128xf32>
    %c0_71 = arith.constant 0 : index
    %c0_72 = arith.constant 0 : index
    %c0_73 = arith.constant 0 : index
    %167 = vector.load %arg15[%c0_71, %c0_72, %c0_73] : memref<1x16x128xf32, #tpu.memory_space<vmem>>, vector<1x16x128xf32>
    %168 = vector.shape_cast %167 : vector<1x16x128xf32> to vector<16x128xf32>
    %169 = vector.shape_cast %166 : vector<16x128xf32> to vector<1x16x128xf32>
    tpu.vector_store %arg15[%c0_71, %c0_72, %c0_73], %169 {strides = array<i32>} : memref<1x16x128xf32, #tpu.memory_space<vmem>>, vector<1x16x128xf32>,
    return
  }
  func.func @transform_0(%arg0: i32) -> (i32, i32, i32) {
    %c0_i32 = arith.constant 0 : i32
    %c0_i32_0 = arith.constant 0 : i32
    %c0_i32_1 = arith.constant 0 : i32
    return %arg0, %c0_i32, %c0_i32_0 : i32, i32, i32
  }
  func.func @transform_1(%arg0: i32) -> (i32, i32, i32) {
    %c0_i32 = arith.constant 0 : i32
    %c0_i32_0 = arith.constant 0 : i32
    %c0_i32_1 = arith.constant 0 : i32
    return %arg0, %c0_i32, %c0_i32_0 : i32, i32, i32
  }
  func.func @transform_2(%arg0: i32) -> (i32, i32) {
    %c0_i32 = arith.constant 0 : i32
    %c0_i32_0 = arith.constant 0 : i32
    %c0_i32_1 = arith.constant 0 : i32
    return %c0_i32, %c0_i32_0 : i32, i32
  }
  func.func @transform_3(%arg0: i32) -> (i32, i32) {
    %c0_i32 = arith.constant 0 : i32
    %c0_i32_0 = arith.constant 0 : i32
    %c0_i32_1 = arith.constant 0 : i32
    return %c0_i32, %c0_i32_0 : i32, i32
  }
  func.func @transform_4(%arg0: i32) -> (i32, i32) {
    %c0_i32 = arith.constant 0 : i32
    %c0_i32_0 = arith.constant 0 : i32
    %c0_i32_1 = arith.constant 0 : i32
    return %c0_i32, %c0_i32_0 : i32, i32
  }
  func.func @transform_5(%arg0: i32) -> (i32, i32) {
    %c0_i32 = arith.constant 0 : i32
    %c0_i32_0 = arith.constant 0 : i32
    %c0_i32_1 = arith.constant 0 : i32
    return %c0_i32, %c0_i32_0 : i32, i32
  }
  func.func @transform_6(%arg0: i32) -> (i32, i32) {
    %c0_i32 = arith.constant 0 : i32
    %c0_i32_0 = arith.constant 0 : i32
    %c0_i32_1 = arith.constant 0 : i32
    return %c0_i32, %c0_i32_0 : i32, i32
  }
  func.func @transform_7(%arg0: i32) -> (i32, i32) {
    %c0_i32 = arith.constant 0 : i32
    %c0_i32_0 = arith.constant 0 : i32
    %c0_i32_1 = arith.constant 0 : i32
    return %c0_i32, %c0_i32_0 : i32, i32
  }
  func.func @transform_8(%arg0: i32) -> (i32, i32) {
    %c0_i32 = arith.constant 0 : i32
    %c0_i32_0 = arith.constant 0 : i32
    %c0_i32_1 = arith.constant 0 : i32
    return %c0_i32, %c0_i32_0 : i32, i32
  }
  func.func @transform_9(%arg0: i32) -> (i32, i32) {
    %c0_i32 = arith.constant 0 : i32
    %c0_i32_0 = arith.constant 0 : i32
    %c0_i32_1 = arith.constant 0 : i32
    return %c0_i32, %c0_i32_0 : i32, i32
  }
  func.func @transform_10(%arg0: i32) -> (i32, i32) {
    %c0_i32 = arith.constant 0 : i32
    %c0_i32_0 = arith.constant 0 : i32
    %c0_i32_1 = arith.constant 0 : i32
    return %c0_i32, %c0_i32_0 : i32, i32
  }
  func.func @transform_11(%arg0: i32) -> (i32, i32) {
    %c0_i32 = arith.constant 0 : i32
    %c0_i32_0 = arith.constant 0 : i32
    %c0_i32_1 = arith.constant 0 : i32
    return %c0_i32, %c0_i32_0 : i32, i32
  }
  func.func @transform_12(%arg0: i32) -> (i32, i32) {
    %c0_i32 = arith.constant 0 : i32
    %c0_i32_0 = arith.constant 0 : i32
    %c0_i32_1 = arith.constant 0 : i32
    return %c0_i32, %c0_i32_0 : i32, i32
  }
  func.func @transform_13(%arg0: i32) -> (i32, i32) {
    %c0_i32 = arith.constant 0 : i32
    %c0_i32_0 = arith.constant 0 : i32
    %c0_i32_1 = arith.constant 0 : i32
    return %c0_i32, %c0_i32_0 : i32, i32
  }
  func.func @transform_14(%arg0: i32) -> (i32, i32, i32) {
    %c0_i32 = arith.constant 0 : i32
    %c0_i32_0 = arith.constant 0 : i32
    %c0_i32_1 = arith.constant 0 : i32
    return %arg0, %c0_i32, %c0_i32_0 : i32, i32, i32
  }
}

</mosaic_0001>

<llo_original>
// kernel: tpu_custom_call.1
$region0: #{tpu_custom_call.1}
  #allocation0 [shape = 'u32[]', space=smem, size = 0x4, offset = 0x4, fixed_abs, tag = 'smem constant byte address 0x4 - core index']
  #allocation1 [shape = 'u32[144,128]{1,0:T(1,128)}', space=vmem, size = 0x12000, scoped, tag = 'internal scratch']
  #allocation2 [shape = 'bf16[16,128]{1,0:T(16,128)(2,1)}', space=vmem, size = 0x1000, scoped, tag = 'scratch operand']
  %s0 = inlined_call_operand.hbm [shape: f32[2,16,128], index: 0, kind: input, shape index: {}]
  %s1 = inlined_call_operand.hbm [shape: f32[2,16,16], index: 1, kind: input, shape index: {}]
  %s2 = inlined_call_operand.vmem [shape: f32[1,128], index: 2, kind: input, shape index: {}]
  %s3 = inlined_call_operand.vmem [shape: f32[1,128], index: 3, kind: input, shape index: {}]
  %s4 = inlined_call_operand.hbm [shape: bf16[128,384], index: 4, kind: input, shape index: {}]
  %s5 = inlined_call_operand.vmem [shape: f32[1,384], index: 5, kind: input, shape index: {}]
  %s6 = inlined_call_operand.hbm [shape: bf16[128,128], index: 6, kind: input, shape index: {}]
  %s7 = inlined_call_operand.vmem [shape: f32[1,128], index: 7, kind: input, shape index: {}]
  %s8 = inlined_call_operand.vmem [shape: f32[1,128], index: 8, kind: input, shape index: {}]
  %s9 = inlined_call_operand.vmem [shape: f32[1,128], index: 9, kind: input, shape index: {}]
  %s10 = inlined_call_operand.hbm [shape: bf16[128,256], index: 10, kind: input, shape index: {}]
  %s11 = inlined_call_operand.vmem [shape: f32[1,256], index: 11, kind: input, shape index: {}]
  %s12 = inlined_call_operand.hbm [shape: bf16[256,128], index: 12, kind: input, shape index: {}]
  %s13 = inlined_call_operand.vmem [shape: f32[1,128], index: 13, kind: input, shape index: {}]
  %s14 = inlined_call_operand.hbm [shape: f32[2,16,128], index: 14, kind: output, shape index: {}]
  %s15 = sld [smem:[#allocation0]]
  $region113: #{tpu_custom_call.1} parent=0
    _
  %s17 = ssub.s32 1, %s15
  %s18 = scalar_select 0, %s17, %s15
  $region1: #{tpu_custom_call.1} parent=0
    #allocation3 [shape = 'u8[16384]{0}', space=vmem, size = 0x4000, scoped, tag = 'input window, operand 0']
    #allocation4 [shape = 's32[2]{0}', space=sflag, size = 0x8, scoped, tag = 'scoped memory for tpu_custom_call.1']
    #allocation5 [shape = 's32[2]{0}', space=sflag, size = 0x8, scoped, tag = 'scoped memory for tpu_custom_call.1']
    #allocation6 [shape = 'u8[16384]{0}', space=vmem, size = 0x4000, scoped, tag = 'input window, operand 1']
    #allocation7 [shape = 's32[2]{0}', space=sflag, size = 0x8, scoped, tag = 'scoped memory for tpu_custom_call.1']
    #allocation8 [shape = 'u8[98304]{0}', space=vmem, size = 0x18000, scoped, tag = 'input window, operand 4, single buffered']
    #allocation9 [shape = 'u8[32768]{0}', space=vmem, size = 0x8000, scoped, tag = 'input window, operand 6, single buffered']
    #allocation10 [shape = 's32[1]{0}', space=sflag, size = 0x4, scoped, tag = 'scoped memory for tpu_custom_call.1']
    #allocation11 [shape = 'u8[65536]{0}', space=vmem, size = 0x10000, scoped, tag = 'input window, operand 10, single buffered']
    #allocation12 [shape = 'u8[65536]{0}', space=vmem, size = 0x10000, scoped, tag = 'input window, operand 12, single buffered']
    #allocation13 [shape = 's32[1]{0}', space=sflag, size = 0x4, scoped, tag = 'scoped memory for tpu_custom_call.1']
    #allocation14 [shape = 'u8[16384]{0}', space=vmem, size = 0x4000, scoped, tag = 'output window, operand 0']
    %19 = vsyncpa [#allocation4], 0
    %s20 = scalar_lea.sflag [#allocation4], 1
    %21 = vsyncpa %s20, 0
    %22 = vsyncpa [#allocation7], 0
    %s23 = scalar_lea.sflag [#allocation7], 1
    %24 = vsyncpa %s23, 0
    %25 = vsyncpa [#allocation10], 0
    %26 = vsyncpa [#allocation13], 0
    %27 = vsyncpa [#allocation5], 0
    %s28 = scalar_lea.sflag [#allocation5], 1
    %29 = vsyncpa %s28, 0
    loop: start=0, step=1, limit=4
    $region2: #{tpu_custom_call.1} parent=1 // loop_pre_header
      _
    $region3: #{tpu_custom_call.1} parent=1 // loop_header
      %s31 = sphi 0, %s35
      %p32 = scmp.ge.s32.totalorder %s31, 4
      %s41 = sphi 0, %s43
      %s44 = sphi 0, %s41
      %s45 = sphi 0, %s44
      %s61 = sphi 0, %s45
      %s67 = sphi 0, %s69
      %s70 = sphi 0, %s67
      %s71 = sphi 0, %s70
      %s87 = sphi 0, %s71
      %s91 = sphi 0, %s91
      %s93 = sphi 0, %s91
      %s94 = sphi 0, %s93
      %s108 = sphi 0, %s94
      %s112 = sphi 0, %s112
      %s114 = sphi 0, %s112
      %s115 = sphi 0, %s114
      %s129 = sphi 0, %s115
      %s133 = sphi 0, %s133
      %s135 = sphi 0, %s133
      %s136 = sphi 0, %s135
      %s150 = sphi 0, %s136
      %s154 = sphi 0, %s154
      %s156 = sphi 0, %s154
      %s157 = sphi 0, %s156
      %s171 = sphi 0, %s157
      %s175 = sphi 0, %s175
      %s177 = sphi 0, %s175
      %s178 = sphi 0, %s177
      %s192 = sphi 0, %s178
      %s196 = sphi 0, %s196
      %s198 = sphi 0, %s196
      %s199 = sphi 0, %s198
      %s213 = sphi 0, %s199
      %s217 = sphi 0, %s217
      %s219 = sphi 0, %s217
      %s220 = sphi 0, %s219
      %s234 = sphi 0, %s220
      %s238 = sphi 0, %s238
      %s240 = sphi 0, %s238
      %s241 = sphi 0, %s240
      %s255 = sphi 0, %s241
      %s259 = sphi 0, %s259
      %s261 = sphi 0, %s259
      %s262 = sphi 0, %s261
      %s276 = sphi 0, %s262
      %s280 = sphi 0, %s280
      %s282 = sphi 0, %s280
      %s283 = sphi 0, %s282
      %s297 = sphi 0, %s283
      %s301 = sphi 0, %s301
      %s303 = sphi 0, %s301
      %s304 = sphi 0, %s303
      %s318 = sphi 0, %s304
      %s322 = sphi 0, %s322
      %s324 = sphi 0, %s322
      %s325 = sphi 0, %s324
      %s339 = sphi 0, %s325
      %s345 = sphi 0, %s347
      %s348 = sphi 0, %s345
      %s349 = sphi 0, %s348
      %s365 = sphi 0, %s349
    $region4: #{tpu_custom_call.1} parent=1 // loop_header_branch
      %34 = sbr.rel (%p32) target = $region8
    $region5: #{tpu_custom_call.1} parent=1 // loop_body
      %s36 = ssub.s32 %s31, 1
      %s37 = ssub.s32 %s31, 2
      %s38 = sadd.s32 %s31, 1
      %s39 = ssub.s32 %s31, %s38
      %p40 = scmp.eq.s32.totalorder %s39, 0
      %s42 = sadd.s32 %s41, 1
      %s43 = scalar_select %p40, %s41, %s42
      %p46 = pneg %p40
      %p47 = scmp.eq.s32.totalorder %s31, 1
      %p48 = por %p46, %p47
      %p49 = scmp.ne.s32.totalorder %s41, %s44
      %p50 = scmp.eq.s32.totalorder %s31, 0
      %p51 = por %p49, %p50
      %p52 = scmp.ne.s32.totalorder %s41, %s44
      %p53 = scmp.eq.s32.totalorder %s36, 1
      %p54 = por %p52, %p53
      %p55 = scmp.ne.s32.totalorder %s44, %s45
      %p56 = scmp.eq.s32.totalorder %s36, 0
      %p57 = por %p55, %p56
      %p58 = scmp.ne.s32.totalorder %s44, %s45
      %p59 = scmp.eq.s32.totalorder %s37, 1
      %p60 = por %p58, %p59
      %p62 = scmp.ne.s32.totalorder %s45, %s61
      %p63 = scmp.eq.s32.totalorder %s37, 0
      %p64 = por %p62, %p63
      %s65 = ssub.s32 %s31, %s38
      %p66 = scmp.eq.s32.totalorder %s65, 0
      %s68 = sadd.s32 %s67, 1
      %s69 = scalar_select %p66, %s67, %s68
      %p72 = pneg %p66
      %p73 = scmp.eq.s32.totalorder %s31, 1
      %p74 = por %p72, %p73
      %p75 = scmp.ne.s32.totalorder %s67, %s70
      %p76 = scmp.eq.s32.totalorder %s31, 0
      %p77 = por %p75, %p76
      %p78 = scmp.ne.s32.totalorder %s67, %s70
      %p79 = scmp.eq.s32.totalorder %s36, 1
      %p80 = por %p78, %p79
      %p81 = scmp.ne.s32.totalorder %s70, %s71
      %p82 = scmp.eq.s32.totalorder %s36, 0
      %p83 = por %p81, %p82
      %p84 = scmp.ne.s32.totalorder %s70, %s71
      %p85 = scmp.eq.s32.totalorder %s37, 1
      %p86 = por %p84, %p85
      %p88 = scmp.ne.s32.totalorder %s71, %s87
      %p89 = scmp.eq.s32.totalorder %s37, 0
      %p90 = por %p88, %p89
      %s92 = sadd.s32 %s91, 1
      %p95 = scmp.eq.s32.totalorder %s31, 1
      %p96 = scmp.ne.s32.totalorder %s91, %s93
      %p97 = scmp.eq.s32.totalorder %s31, 0
      %p98 = por %p96, %p97
      %p99 = scmp.ne.s32.totalorder %s91, %s93
      %p100 = scmp.eq.s32.totalorder %s36, 1
      %p101 = por %p99, %p100
      %p102 = scmp.ne.s32.totalorder %s93, %s94
      %p103 = scmp.eq.s32.totalorder %s36, 0
      %p104 = por %p102, %p103
      %p105 = scmp.ne.s32.totalorder %s93, %s94
      %p106 = scmp.eq.s32.totalorder %s37, 1
      %p107 = por %p105, %p106
      %p109 = scmp.ne.s32.totalorder %s94, %s108
      %p110 = scmp.eq.s32.totalorder %s37, 0
      %p111 = por %p109, %p110
      %s113 = sadd.s32 %s112, 1
      %p116 = scmp.eq.s32.totalorder %s31, 1
      %p117 = scmp.ne.s32.totalorder %s112, %s114
      %p118 = scmp.eq.s32.totalorder %s31, 0
      %p119 = por %p117, %p118
      %p120 = scmp.ne.s32.totalorder %s112, %s114
      %p121 = scmp.eq.s32.totalorder %s36, 1
      %p122 = por %p120, %p121
      %p123 = scmp.ne.s32.totalorder %s114, %s115
      %p124 = scmp.eq.s32.totalorder %s36, 0
      %p125 = por %p123, %p124
      %p126 = scmp.ne.s32.totalorder %s114, %s115
      %p127 = scmp.eq.s32.totalorder %s37, 1
      %p128 = por %p126, %p127
      %p130 = scmp.ne.s32.totalorder %s115, %s129
      %p131 = scmp.eq.s32.totalorder %s37, 0
      %p132 = por %p130, %p131
      %s134 = sadd.s32 %s133, 1
      %p137 = scmp.eq.s32.totalorder %s31, 1
      %p138 = scmp.ne.s32.totalorder %s133, %s135
      %p139 = scmp.eq.s32.totalorder %s31, 0
      %p140 = por %p138, %p139
      %p141 = scmp.ne.s32.totalorder %s133, %s135
      %p142 = scmp.eq.s32.totalorder %s36, 1
      %p143 = por %p141, %p142
      %p144 = scmp.ne.s32.totalorder %s135, %s136
      %p145 = scmp.eq.s32.totalorder %s36, 0
      %p146 = por %p144, %p145
      %p147 = scmp.ne.s32.totalorder %s135, %s136
      %p148 = scmp.eq.s32.totalorder %s37, 1
      %p149 = por %p147, %p148
      %p151 = scmp.ne.s32.totalorder %s136, %s150
      %p152 = scmp.eq.s32.totalorder %s37, 0
      %p153 = por %p151, %p152
      %s155 = sadd.s32 %s154, 1
      %p158 = scmp.eq.s32.totalorder %s31, 1
      %p159 = scmp.ne.s32.totalorder %s154, %s156
      %p160 = scmp.eq.s32.totalorder %s31, 0
      %p161 = por %p159, %p160
      %p162 = scmp.ne.s32.totalorder %s154, %s156
      %p163 = scmp.eq.s32.totalorder %s36, 1
      %p164 = por %p162, %p163
      %p165 = scmp.ne.s32.totalorder %s156, %s157
      %p166 = scmp.eq.s32.totalorder %s36, 0
      %p167 = por %p165, %p166
      %p168 = scmp.ne.s32.totalorder %s156, %s157
      %p169 = scmp.eq.s32.totalorder %s37, 1
      %p170 = por %p168, %p169
      %p172 = scmp.ne.s32.totalorder %s157, %s171
      %p173 = scmp.eq.s32.totalorder %s37, 0
      %p174 = por %p172, %p173
      %s176 = sadd.s32 %s175, 1
      %p179 = scmp.eq.s32.totalorder %s31, 1
      %p180 = scmp.ne.s32.totalorder %s175, %s177
      %p181 = scmp.eq.s32.totalorder %s31, 0
      %p182 = por %p180, %p181
      %p183 = scmp.ne.s32.totalorder %s175, %s177
      %p184 = scmp.eq.s32.totalorder %s36, 1
      %p185 = por %p183, %p184
      %p186 = scmp.ne.s32.totalorder %s177, %s178
      %p187 = scmp.eq.s32.totalorder %s36, 0
      %p188 = por %p186, %p187
      %p189 = scmp.ne.s32.totalorder %s177, %s178
      %p190 = scmp.eq.s32.totalorder %s37, 1
      %p191 = por %p189, %p190
      %p193 = scmp.ne.s32.totalorder %s178, %s192
      %p194 = scmp.eq.s32.totalorder %s37, 0
      %p195 = por %p193, %p194
      %s197 = sadd.s32 %s196, 1
      %p200 = scmp.eq.s32.totalorder %s31, 1
      %p201 = scmp.ne.s32.totalorder %s196, %s198
      %p202 = scmp.eq.s32.totalorder %s31, 0
      %p203 = por %p201, %p202
      %p204 = scmp.ne.s32.totalorder %s196, %s198
      %p205 = scmp.eq.s32.totalorder %s36, 1
      %p206 = por %p204, %p205
      %p207 = scmp.ne.s32.totalorder %s198, %s199
      %p208 = scmp.eq.s32.totalorder %s36, 0
      %p209 = por %p207, %p208
      %p210 = scmp.ne.s32.totalorder %s198, %s199
      %p211 = scmp.eq.s32.totalorder %s37, 1
      %p212 = por %p210, %p211
      %p214 = scmp.ne.s32.totalorder %s199, %s213
      %p215 = scmp.eq.s32.totalorder %s37, 0
      %p216 = por %p214, %p215
      %s218 = sadd.s32 %s217, 1
      %p221 = scmp.eq.s32.totalorder %s31, 1
      %p222 = scmp.ne.s32.totalorder %s217, %s219
      %p223 = scmp.eq.s32.totalorder %s31, 0
      %p224 = por %p222, %p223
      %p225 = scmp.ne.s32.totalorder %s217, %s219
      %p226 = scmp.eq.s32.totalorder %s36, 1
      %p227 = por %p225, %p226
      %p228 = scmp.ne.s32.totalorder %s219, %s220
      %p229 = scmp.eq.s32.totalorder %s36, 0
      %p230 = por %p228, %p229
      %p231 = scmp.ne.s32.totalorder %s219, %s220
      %p232 = scmp.eq.s32.totalorder %s37, 1
      %p233 = por %p231, %p232
      %p235 = scmp.ne.s32.totalorder %s220, %s234
      %p236 = scmp.eq.s32.totalorder %s37, 0
      %p237 = por %p235, %p236
      %s239 = sadd.s32 %s238, 1
      %p242 = scmp.eq.s32.totalorder %s31, 1
      %p243 = scmp.ne.s32.totalorder %s238, %s240
      %p244 = scmp.eq.s32.totalorder %s31, 0
      %p245 = por %p243, %p244
      %p246 = scmp.ne.s32.totalorder %s238, %s240
      %p247 = scmp.eq.s32.totalorder %s36, 1
      %p248 = por %p246, %p247
      %p249 = scmp.ne.s32.totalorder %s240, %s241
      %p250 = scmp.eq.s32.totalorder %s36, 0
      %p251 = por %p249, %p250
      %p252 = scmp.ne.s32.totalorder %s240, %s241
      %p253 = scmp.eq.s32.totalorder %s37, 1
      %p254 = por %p252, %p253
      %p256 = scmp.ne.s32.totalorder %s241, %s255
      %p257 = scmp.eq.s32.totalorder %s37, 0
      %p258 = por %p256, %p257
      %s260 = sadd.s32 %s259, 1
      %p263 = scmp.eq.s32.totalorder %s31, 1
      %p264 = scmp.ne.s32.totalorder %s259, %s261
      %p265 = scmp.eq.s32.totalorder %s31, 0
      %p266 = por %p264, %p265
      %p267 = scmp.ne.s32.totalorder %s259, %s261
      %p268 = scmp.eq.s32.totalorder %s36, 1
      %p269 = por %p267, %p268
      %p270 = scmp.ne.s32.totalorder %s261, %s262
      %p271 = scmp.eq.s32.totalorder %s36, 0
      %p272 = por %p270, %p271
      %p273 = scmp.ne.s32.totalorder %s261, %s262
      %p274 = scmp.eq.s32.totalorder %s37, 1
      %p275 = por %p273, %p274
      %p277 = scmp.ne.s32.totalorder %s262, %s276
      %p278 = scmp.eq.s32.totalorder %s37, 0
      %p279 = por %p277, %p278
      %s281 = sadd.s32 %s280, 1
      %p284 = scmp.eq.s32.totalorder %s31, 1
      %p285 = scmp.ne.s32.totalorder %s280, %s282
      %p286 = scmp.eq.s32.totalorder %s31, 0
      %p287 = por %p285, %p286
      %p288 = scmp.ne.s32.totalorder %s280, %s282
      %p289 = scmp.eq.s32.totalorder %s36, 1
      %p290 = por %p288, %p289
      %p291 = scmp.ne.s32.totalorder %s282, %s283
      %p292 = scmp.eq.s32.totalorder %s36, 0
      %p293 = por %p291, %p292
      %p294 = scmp.ne.s32.totalorder %s282, %s283
      %p295 = scmp.eq.s32.totalorder %s37, 1
      %p296 = por %p294, %p295
      %p298 = scmp.ne.s32.totalorder %s283, %s297
      %p299 = scmp.eq.s32.totalorder %s37, 0
      %p300 = por %p298, %p299
      %s302 = sadd.s32 %s301, 1
      %p305 = scmp.eq.s32.totalorder %s31, 1
      %p306 = scmp.ne.s32.totalorder %s301, %s303
      %p307 = scmp.eq.s32.totalorder %s31, 0
      %p308 = por %p306, %p307
      %p309 = scmp.ne.s32.totalorder %s301, %s303
      %p310 = scmp.eq.s32.totalorder %s36, 1
      %p311 = por %p309, %p310
      %p312 = scmp.ne.s32.totalorder %s303, %s304
      %p313 = scmp.eq.s32.totalorder %s36, 0
      %p314 = por %p312, %p313
      %p315 = scmp.ne.s32.totalorder %s303, %s304
      %p316 = scmp.eq.s32.totalorder %s37, 1
      %p317 = por %p315, %p316
      %p319 = scmp.ne.s32.totalorder %s304, %s318
      %p320 = scmp.eq.s32.totalorder %s37, 0
      %p321 = por %p319, %p320
      %s323 = sadd.s32 %s322, 1
      %p326 = scmp.eq.s32.totalorder %s31, 1
      %p327 = scmp.ne.s32.totalorder %s322, %s324
      %p328 = scmp.eq.s32.totalorder %s31, 0
      %p329 = por %p327, %p328
      %p330 = scmp.ne.s32.totalorder %s322, %s324
      %p331 = scmp.eq.s32.totalorder %s36, 1
      %p332 = por %p330, %p331
      %p333 = scmp.ne.s32.totalorder %s324, %s325
      %p334 = scmp.eq.s32.totalorder %s36, 0
      %p335 = por %p333, %p334
      %p336 = scmp.ne.s32.totalorder %s324, %s325
      %p337 = scmp.eq.s32.totalorder %s37, 1
      %p338 = por %p336, %p337
      %p340 = scmp.ne.s32.totalorder %s325, %s339
      %p341 = scmp.eq.s32.totalorder %s37, 0
      %p342 = por %p340, %p341
      %s343 = ssub.s32 %s31, %s38
      %p344 = scmp.eq.s32.totalorder %s343, 0
      %s346 = sadd.s32 %s345, 1
      %s347 = scalar_select %p344, %s345, %s346
      %p350 = pneg %p344
      %p351 = scmp.eq.s32.totalorder %s31, 1
      %p352 = por %p350, %p351
      %p353 = scmp.ne.s32.totalorder %s345, %s348
      %p354 = scmp.eq.s32.totalorder %s31, 0
      %p355 = por %p353, %p354
      %p356 = scmp.ne.s32.totalorder %s345, %s348
      %p357 = scmp.eq.s32.totalorder %s36, 1
      %p358 = por %p356, %p357
      %p359 = scmp.ne.s32.totalorder %s348, %s349
      %p360 = scmp.eq.s32.totalorder %s36, 0
      %p361 = por %p359, %p360
      %p362 = scmp.ne.s32.totalorder %s348, %s349
      %p363 = scmp.eq.s32.totalorder %s37, 1
      %p364 = por %p362, %p363
      %p366 = scmp.ne.s32.totalorder %s349, %s365
      %p367 = scmp.eq.s32.totalorder %s37, 0
      %p368 = por %p366, %p367
      %p369 = scmp.le.s32.totalorder 1, %s31
      %p370 = scmp.lt.s32.totalorder %s31, 3
      %p371 = pnand %p369, %p370
      %p372 = pneg %p371
      // Predicated region
      $region9: #{tpu_custom_call.1} parent=5 // pred_check
        _
      $region10: #{tpu_custom_call.1} parent=5 // pred_check_branch
        %374 = sbr.rel (%p371) target = $region12
      $region11: #{tpu_custom_call.1} parent=5 // pred_region
        %s375 = ssub.s32 %s31, 1
        // Predicated region
        $region13: #{tpu_custom_call.1} parent=11 // pred_check
          %p376 = pneg %p104
        $region14: #{tpu_custom_call.1} parent=11 // pred_check_branch
          %378 = sbr.rel (%p376) target = $region16
        $region15: #{tpu_custom_call.1} parent=11 // pred_region
          _
        $region16: #{tpu_custom_call.1} parent=11 // pred_fallthru
          _
        // Predicated region
        $region17: #{tpu_custom_call.1} parent=11 // pred_check
          %p379 = pneg %p125
        $region18: #{tpu_custom_call.1} parent=11 // pred_check_branch
          %381 = sbr.rel (%p379) target = $region20
        $region19: #{tpu_custom_call.1} parent=11 // pred_region
          _
        $region20: #{tpu_custom_call.1} parent=11 // pred_fallthru
          _
        // Predicated region
        $region21: #{tpu_custom_call.1} parent=11 // pred_check
          %p382 = pneg %p146
        $region22: #{tpu_custom_call.1} parent=11 // pred_check_branch
          %384 = sbr.rel (%p382) target = $region24
        $region23: #{tpu_custom_call.1} parent=11 // pred_region
          %s386 = ssub.s32 3072, 3072
          %387 = vsyncadd [#allocation7], %s386
          %s388 = sshll.u32 [#allocation8], 4
          %s389 = int_to_ptr.vmem [resolvable:$true] %s388
          %394 = dma.hbm_to_vmem [thread:$0]  %s4, 3072, %s389, [#allocation7], 192, 192, 12
        $region24: #{tpu_custom_call.1} parent=11 // pred_fallthru
          _
        // Predicated region
        $region25: #{tpu_custom_call.1} parent=11 // pred_check
          %p395 = pneg %p167
        $region26: #{tpu_custom_call.1} parent=11 // pred_check_branch
          %397 = sbr.rel (%p395) target = $region28
        $region27: #{tpu_custom_call.1} parent=11 // pred_region
          _
        $region28: #{tpu_custom_call.1} parent=11 // pred_fallthru
          _
        // Predicated region
        $region29: #{tpu_custom_call.1} parent=11 // pred_check
          %p398 = pneg %p188
        $region30: #{tpu_custom_call.1} parent=11 // pred_check_branch
          %400 = sbr.rel (%p398) target = $region32
        $region31: #{tpu_custom_call.1} parent=11 // pred_region
          %s402 = ssub.s32 1024, 1024
          %403 = vsyncadd [#allocation10], %s402
          %s404 = sshll.u32 [#allocation9], 4
          %s405 = int_to_ptr.vmem [resolvable:$true] %s404
          %410 = dma.hbm_to_vmem [thread:$0]  %s6, 1024, %s405, [#allocation10], 64, 64, 4
        $region32: #{tpu_custom_call.1} parent=11 // pred_fallthru
          _
        // Predicated region
        $region33: #{tpu_custom_call.1} parent=11 // pred_check
          %p411 = pneg %p209
        $region34: #{tpu_custom_call.1} parent=11 // pred_check_branch
          %413 = sbr.rel (%p411) target = $region36
        $region35: #{tpu_custom_call.1} parent=11 // pred_region
          _
        $region36: #{tpu_custom_call.1} parent=11 // pred_fallthru
          _
        // Predicated region
        $region37: #{tpu_custom_call.1} parent=11 // pred_check
          %p414 = pneg %p230
        $region38: #{tpu_custom_call.1} parent=11 // pred_check_branch
          %416 = sbr.rel (%p414) target = $region40
        $region39: #{tpu_custom_call.1} parent=11 // pred_region
          _
        $region40: #{tpu_custom_call.1} parent=11 // pred_fallthru
          _
        // Predicated region
        $region41: #{tpu_custom_call.1} parent=11 // pred_check
          %p417 = pneg %p251
        $region42: #{tpu_custom_call.1} parent=11 // pred_check_branch
          %419 = sbr.rel (%p417) target = $region44
        $region43: #{tpu_custom_call.1} parent=11 // pred_region
          _
        $region44: #{tpu_custom_call.1} parent=11 // pred_fallthru
          _
        // Predicated region
        $region45: #{tpu_custom_call.1} parent=11 // pred_check
          %p420 = pneg %p272
        $region46: #{tpu_custom_call.1} parent=11 // pred_check_branch
          %422 = sbr.rel (%p420) target = $region48
        $region47: #{tpu_custom_call.1} parent=11 // pred_region
          %s424 = ssub.s32 2048, 2048
          %425 = vsyncadd [#allocation10], %s424
          %s426 = sshll.u32 [#allocation11], 4
          %s427 = int_to_ptr.vmem [resolvable:$true] %s426
          %432 = dma.hbm_to_vmem [thread:$0]  %s10, 2048, %s427, [#allocation10], 128, 128, 8
        $region48: #{tpu_custom_call.1} parent=11 // pred_fallthru
          _
        // Predicated region
        $region49: #{tpu_custom_call.1} parent=11 // pred_check
          %p433 = pneg %p293
        $region50: #{tpu_custom_call.1} parent=11 // pred_check_branch
          %435 = sbr.rel (%p433) target = $region52
        $region51: #{tpu_custom_call.1} parent=11 // pred_region
          _
        $region52: #{tpu_custom_call.1} parent=11 // pred_fallthru
          _
        // Predicated region
        $region53: #{tpu_custom_call.1} parent=11 // pred_check
          %p436 = pneg %p314
        $region54: #{tpu_custom_call.1} parent=11 // pred_check_branch
          %438 = sbr.rel (%p436) target = $region56
        $region55: #{tpu_custom_call.1} parent=11 // pred_region
          %s440 = ssub.s32 2048, 2048
          %441 = vsyncadd [#allocation13], %s440
          %s442 = sshll.u32 [#allocation12], 4
          %s443 = int_to_ptr.vmem [resolvable:$true] %s442
          %448 = dma.hbm_to_vmem [thread:$0]  %s12, 2048, %s443, [#allocation13], 64, 64, 4
        $region56: #{tpu_custom_call.1} parent=11 // pred_fallthru
          _
        // Predicated region
        $region57: #{tpu_custom_call.1} parent=11 // pred_check
          %p449 = pneg %p335
        $region58: #{tpu_custom_call.1} parent=11 // pred_check_branch
          %451 = sbr.rel (%p449) target = $region60
        $region59: #{tpu_custom_call.1} parent=11 // pred_region
          _
        $region60: #{tpu_custom_call.1} parent=11 // pred_fallthru
          _
      $region12: #{tpu_custom_call.1} parent=5 // pred_fallthru
        _
      %p452 = scmp.lt.s32.totalorder %s31, 2
      // Predicated region
      $region61: #{tpu_custom_call.1} parent=5 // pred_check
        %p453 = pneg %p452
      $region62: #{tpu_custom_call.1} parent=5 // pred_check_branch
        %455 = sbr.rel (%p453) target = $region64
      $region63: #{tpu_custom_call.1} parent=5 // pred_region
        // Predicated region
        $region65: #{tpu_custom_call.1} parent=63 // pred_check
          %p456 = pneg %p51
        $region66: #{tpu_custom_call.1} parent=63 // pred_check_branch
          %458 = sbr.rel (%p456) target = $region68
        $region67: #{tpu_custom_call.1} parent=63 // pred_region
          %s459 = sand.u32 %s41, 1
          %s460 = scalar_lea.sflag [#allocation4], %s459
          %s461 = sand.u32 %s41, 1
          %s462 = smul.addr %s461, 16
          %s463 = scalar_lea.vmem [#allocation3], %s462
          %s465 = ssub.s32 256, 256
          %466 = vsyncadd %s460, %s465
          %s467 = smul.addr %s31, 2
          %s468 = smul.addr %s467, 128
          %s469 = scalar_lea.hbm %s0, %s468
          %s470 = sshll.u32 %s463, 4
          %s471 = int_to_ptr.vmem [resolvable:$true] %s470
          %476 = dma.hbm_to_vmem [thread:$0]  %s469, 256, %s471, %s460, 128, 128, 8
        $region68: #{tpu_custom_call.1} parent=63 // pred_fallthru
          _
        // Predicated region
        $region69: #{tpu_custom_call.1} parent=63 // pred_check
          %p477 = pneg %p77
        $region70: #{tpu_custom_call.1} parent=63 // pred_check_branch
          %479 = sbr.rel (%p477) target = $region72
        $region71: #{tpu_custom_call.1} parent=63 // pred_region
          %s480 = sand.u32 %s31, 1
          %s481 = scalar_lea.sflag [#allocation7], %s480
          %s482 = sand.u32 %s67, 1
          %s483 = smul.addr %s482, 16
          %s484 = scalar_lea.vmem [#allocation6], %s483
          %s486 = ssub.s32 256, 256
          %487 = vsyncadd %s481, %s486
          %s488 = smul.addr %s31, 2
          %s489 = smul.addr %s488, 128
          %s490 = scalar_lea.hbm %s1, %s489
          %s491 = sshll.u32 %s484, 4
          %s492 = int_to_ptr.vmem [resolvable:$true] %s491
          %497 = dma.hbm_to_vmem [thread:$0]  %s490, 256, %s492, %s481, 128, 128, 8
        $region72: #{tpu_custom_call.1} parent=63 // pred_fallthru
          _
      $region64: #{tpu_custom_call.1} parent=5 // pred_fallthru
        _
      %p498 = scmp.le.s32.totalorder 1, %s31
      %p499 = scmp.lt.s32.totalorder %s31, 3
      %p500 = pnand %p498, %p499
      %p501 = pneg %p500
      // Predicated region
      $region73: #{tpu_custom_call.1} parent=5 // pred_check
        _
      $region74: #{tpu_custom_call.1} parent=5 // pred_check_branch
        %503 = sbr.rel (%p500) target = $region76
      $region75: #{tpu_custom_call.1} parent=5 // pred_region
        %s504 = ssub.s32 %s31, 1
        %s505 = sand.u32 %s44, 1
        %s506 = scalar_lea.sflag [#allocation4], %s505
        %s507 = sand.u32 %s44, 1
        %s508 = smul.addr %s507, 16
        %s509 = scalar_lea.vmem [#allocation3], %s508
        // Predicated region
        $region77: #{tpu_custom_call.1} parent=75 // pred_check
          %p510 = pneg %p57
        $region78: #{tpu_custom_call.1} parent=75 // pred_check_branch
          %512 = sbr.rel (%p510) target = $region80
        $region79: #{tpu_custom_call.1} parent=75 // pred_region
          %513 = dma.done %s506, 256
        $region80: #{tpu_custom_call.1} parent=75 // pred_fallthru
          _
        %s514 = sand.u32 %s36, 1
        %s515 = scalar_lea.sflag [#allocation7], %s514
        %s516 = sand.u32 %s70, 1
        %s517 = smul.addr %s516, 16
        %s518 = scalar_lea.vmem [#allocation6], %s517
        // Predicated region
        $region81: #{tpu_custom_call.1} parent=75 // pred_check
          %p519 = pneg %p83
        $region82: #{tpu_custom_call.1} parent=75 // pred_check_branch
          %521 = sbr.rel (%p519) target = $region84
        $region83: #{tpu_custom_call.1} parent=75 // pred_region
          %522 = dma.done %s515, 256
        $region84: #{tpu_custom_call.1} parent=75 // pred_fallthru
          _
        // Predicated region
        $region85: #{tpu_custom_call.1} parent=75 // pred_check
          %p523 = pneg %p146
        $region86: #{tpu_custom_call.1} parent=75 // pred_check_branch
          %525 = sbr.rel (%p523) target = $region88
        $region87: #{tpu_custom_call.1} parent=75 // pred_region
          %526 = dma.done [#allocation7], 3072
        $region88: #{tpu_custom_call.1} parent=75 // pred_fallthru
          _
        // Predicated region
        $region89: #{tpu_custom_call.1} parent=75 // pred_check
          %p527 = pneg %p188
        $region90: #{tpu_custom_call.1} parent=75 // pred_check_branch
          %529 = sbr.rel (%p527) target = $region92
        $region91: #{tpu_custom_call.1} parent=75 // pred_region
          %530 = dma.done [#allocation10], 1024
        $region92: #{tpu_custom_call.1} parent=75 // pred_fallthru
          _
        // Predicated region
        $region93: #{tpu_custom_call.1} parent=75 // pred_check
          %p531 = pneg %p272
        $region94: #{tpu_custom_call.1} parent=75 // pred_check_branch
          %533 = sbr.rel (%p531) target = $region96
        $region95: #{tpu_custom_call.1} parent=75 // pred_region
          %534 = dma.done [#allocation10], 2048
        $region96: #{tpu_custom_call.1} parent=75 // pred_fallthru
          _
        // Predicated region
        $region97: #{tpu_custom_call.1} parent=75 // pred_check
          %p535 = pneg %p314
        $region98: #{tpu_custom_call.1} parent=75 // pred_check_branch
          %537 = sbr.rel (%p535) target = $region100
        $region99: #{tpu_custom_call.1} parent=75 // pred_region
          %538 = dma.done [#allocation13], 2048
        $region100: #{tpu_custom_call.1} parent=75 // pred_fallthru
          _
        %s539 = sand.u32 %s44, 1
        %s540 = scalar_lea.sflag [#allocation4], %s539
        %s541 = sand.u32 %s44, 1
        %s542 = smul.addr %s541, 16
        %s543 = scalar_lea.vmem [#allocation3], %s542
        %p544 = pneg %p57
        %p545 = pneg %p54
        %s546 = sand.u32 %s36, 1
        %s547 = scalar_lea.sflag [#allocation7], %s546
        %s548 = sand.u32 %s70, 1
        %s549 = smul.addr %s548, 16
        %s550 = scalar_lea.vmem [#allocation6], %s549
        %p551 = pneg %p83
        %p552 = pneg %p80
        %p553 = pneg %p104
        %p554 = pneg %p101
        %p555 = pneg %p125
        %p556 = pneg %p122
        %p557 = pneg %p146
        %p558 = pneg %p143
        %p559 = pneg %p167
        %p560 = pneg %p164
        %p561 = pneg %p188
        %p562 = pneg %p185
        %p563 = pneg %p209
        %p564 = pneg %p206
        %p565 = pneg %p230
        %p566 = pneg %p227
        %p567 = pneg %p251
        %p568 = pneg %p248
        %p569 = pneg %p272
        %p570 = pneg %p269
        %p571 = pneg %p293
        %p572 = pneg %p290
        %p573 = pneg %p314
        %p574 = pneg %p311
        %p575 = pneg %p335
        %p576 = pneg %p332
        %p577 = pneg %p361
        %p578 = pneg %p358
        %s579 = sand.u32 %s348, 1
        %s580 = scalar_lea.sflag [#allocation5], %s579
        %s581 = sand.u32 %s348, 1
        %s582 = smul.addr %s581, 16
        %s583 = scalar_lea.vmem [#allocation14], %s582
        %v585 = vld [vmem:[%s509] sm:$0xff]
        %v586 = vld [vmem:[%s509 + $0x8] sm:$0xff]
        %v587 = vld [vmem:[%s518] sm:$0xff]
        %v588 = vld [vmem:[%s518 + $0x8] sm:$0xff]
        %vm589 = vcmp.gt.f32.partialorder %v587, 0.0
        %vm590 = vcmp.gt.f32.partialorder %v588, 0.0
        %v591 = vsel %vm589, 0.0, -1e+09
        %v592 = vsel %vm590, 0.0, -1e+09
        %v593 = vld [vmem:[%s2] sm:$0x1]
        %v594 = vld [vmem:[%s3] sm:$0x1]
        %595 = vadd.xlane.f32.xlu0 %v585
        %v596 = vpop.xlane.xlu0 %595
        %597 = vadd.xlane.f32.xlu0 %v586
        %v598 = vpop.xlane.xlu0 %597
        %v599 = vrcp.pop 128.0
        %v600 = vmul.f32 %v596, %v599
        %v601 = vmul.f32 %v598, %v599
        %v602 = vsub.f32 %v585, %v600
        %v603 = vsub.f32 %v586, %v601
        %v604 = vmul.f32 %v602, %v602
        %v605 = vmul.f32 %v603, %v603
        %606 = vadd.xlane.f32.xlu0 %v604
        %v607 = vpop.xlane.xlu0 %606
        %608 = vadd.xlane.f32.xlu0 %v605
        %v609 = vpop.xlane.xlu0 %608
        %v610 = vrcp.pop 127.0
        %v611 = vmul.f32 %v607, %v610
        %v612 = vmul.f32 %v609, %v610
        %v613 = vrsqrt.pop %v611
        %v614 = vmul.f32 %v611, %v613
        %vm615 = vcmp.eq.f32.partialorder %v611, inf
        %v616 = vsel %vm615, %v611, %v614
        %vm617 = vcmp.eq.f32.partialorder %v611, 0.0
        %v618 = vand.u32 %v611, 2147483648
        %v619 = vsel %vm617, %v618, %v616
        %v620 = vrsqrt.pop %v612
        %v621 = vmul.f32 %v612, %v620
        %vm622 = vcmp.eq.f32.partialorder %v612, inf
        %v623 = vsel %vm622, %v612, %v621
        %vm624 = vcmp.eq.f32.partialorder %v612, 0.0
        %v625 = vand.u32 %v612, 2147483648
        %v626 = vsel %vm624, %v625, %v623
        %v628 = vlaneseq
        %v629 = vshrl.u32 %v628, 7
        %v630 = vsub.s32 0, %v629
        %v631 = vrot.slane %v593, %v630
        %v633 = vmul.f32 %v631, %v602
        %v634 = vmul.f32 %v631, %v603
        %v635 = vadd.f32 %v619, 1e-06
        %v636 = vadd.f32 %v626, 1e-06
        %v637 = vrcp.pop %v635
        %v638 = vmul.f32 %v633, %v637
        %v639 = vrcp.pop %v636
        %v640 = vmul.f32 %v634, %v639
        %v642 = vlaneseq
        %v643 = vshrl.u32 %v642, 7
        %v644 = vsub.s32 0, %v643
        %v645 = vrot.slane %v594, %v644
        %v647 = vadd.f32 %v638, %v645
        %v648 = vadd.f32 %v640, %v645
        %v649 = vpack.c.bf16 %v648, %v647
        %v650 = vld [vmem:[#allocation8] sm:$0xff]
        %v651 = vld [vmem:[#allocation8 + $0x8] sm:$0xf]
        %v652 = vld [vmem:[#allocation8 + $0xc] sm:$0xff]
        %v653 = vld [vmem:[#allocation8 + $0x14] sm:$0xf]
        %v654 = vld [vmem:[#allocation8 + $0x18] sm:$0xff]
        %v655 = vld [vmem:[#allocation8 + $0x20] sm:$0xf]
        %v656 = vld [vmem:[#allocation8 + $0x24] sm:$0xff]
        %v657 = vld [vmem:[#allocation8 + $0x2c] sm:$0xf]
        %v658 = vld [vmem:[#allocation8 + $0x30] sm:$0xff]
        %v659 = vld [vmem:[#allocation8 + $0x38] sm:$0xf]
        %v660 = vld [vmem:[#allocation8 + $0x3c] sm:$0xff]
        %v661 = vld [vmem:[#allocation8 + $0x44] sm:$0xf]
        %v662 = vld [vmem:[#allocation8 + $0x48] sm:$0xff]
        %v663 = vld [vmem:[#allocation8 + $0x50] sm:$0xf]
        %v664 = vld [vmem:[#allocation8 + $0x54] sm:$0xff]
        %v665 = vld [vmem:[#allocation8 + $0x5c] sm:$0xf]
        %v666 = vld [vmem:[#allocation8 + $0x60] sm:$0xff]
        %v667 = vld [vmem:[#allocation8 + $0x68] sm:$0xf]
        %v668 = vld [vmem:[#allocation8 + $0x6c] sm:$0xff]
        %v669 = vld [vmem:[#allocation8 + $0x74] sm:$0xf]
        %v670 = vld [vmem:[#allocation8 + $0x78] sm:$0xff]
        %v671 = vld [vmem:[#allocation8 + $0x80] sm:$0xf]
        %v672 = vld [vmem:[#allocation8 + $0x84] sm:$0xff]
        %v673 = vld [vmem:[#allocation8 + $0x8c] sm:$0xf]
        %v674 = vld [vmem:[#allocation8 + $0x90] sm:$0xff]
        %v675 = vld [vmem:[#allocation8 + $0x98] sm:$0xf]
        %v676 = vld [vmem:[#allocation8 + $0x9c] sm:$0xff]
        %v677 = vld [vmem:[#allocation8 + $0xa4] sm:$0xf]
        %v678 = vld [vmem:[#allocation8 + $0xa8] sm:$0xff]
        %v679 = vld [vmem:[#allocation8 + $0xb0] sm:$0xf]
        %v680 = vld [vmem:[#allocation8 + $0xb4] sm:$0xff]
        %v681 = vld [vmem:[#allocation8 + $0xbc] sm:$0xf]
        %v682 = vld [vmem:[%s5] sm:$0x7]
        %v684 = vlaneseq
        %v685 = vshrl.u32 %v684, 7
        %v686 = vsub.s32 0, %v685
        %v687 = vrot.slane %v682, %v686
        %v688 = vlaneseq
        %v689 = vshrl.u32 %v688, 7
        %v690 = vsub.s32 1, %v689
        %v691 = vrot.slane %v682, %v690
        %v692 = vlaneseq
        %v693 = vshrl.u32 %v692, 7
        %v694 = vsub.s32 2, %v693
        %v695 = vrot.slane %v682, %v694
        %v731 = vunpack.c.l.b16 %v650
        %v732 = vunpack.c.h.b16 %v650
        %v733 = vunpack.c.l.b16 %v651
        %v734 = vunpack.c.l.b16 %v652
        %v735 = vunpack.c.h.b16 %v652
        %v736 = vunpack.c.l.b16 %v653
        %v737 = vunpack.c.l.b16 %v654
        %v738 = vunpack.c.h.b16 %v654
        %v739 = vunpack.c.l.b16 %v655
        %v740 = vunpack.c.l.b16 %v656
        %v741 = vunpack.c.h.b16 %v656
        %v742 = vunpack.c.l.b16 %v657
        %v743 = vunpack.c.l.b16 %v658
        %v744 = vunpack.c.h.b16 %v658
        %v745 = vunpack.c.l.b16 %v659
        %v746 = vunpack.c.l.b16 %v660
        %v747 = vunpack.c.h.b16 %v660
        %v748 = vunpack.c.l.b16 %v661
        %v749 = vunpack.c.l.b16 %v662
        %v750 = vunpack.c.h.b16 %v662
        %v751 = vunpack.c.l.b16 %v663
        %v752 = vunpack.c.l.b16 %v664
        %v753 = vunpack.c.h.b16 %v664
        %v754 = vunpack.c.l.b16 %v665
        %v755 = vunpack.c.l.b16 %v666
        %v756 = vunpack.c.h.b16 %v666
        %v757 = vunpack.c.l.b16 %v667
        %v758 = vunpack.c.l.b16 %v668
        %v759 = vunpack.c.h.b16 %v668
        %v760 = vunpack.c.l.b16 %v669
        %v761 = vunpack.c.l.b16 %v670
        %v762 = vunpack.c.h.b16 %v670
        %v763 = vunpack.c.l.b16 %v671
        %v764 = vunpack.c.l.b16 %v672
        %v765 = vunpack.c.h.b16 %v672
        %v766 = vunpack.c.l.b16 %v673
        %v767 = vunpack.c.l.b16 %v674
        %v768 = vunpack.c.h.b16 %v674
        %v769 = vunpack.c.l.b16 %v675
        %v770 = vunpack.c.l.b16 %v676
        %v771 = vunpack.c.h.b16 %v676
        %v772 = vunpack.c.l.b16 %v677
        %v773 = vunpack.c.l.b16 %v678
        %v774 = vunpack.c.h.b16 %v678
        %v775 = vunpack.c.l.b16 %v679
        %v776 = vunpack.c.l.b16 %v680
        %v777 = vunpack.c.h.b16 %v680
        %v778 = vunpack.c.l.b16 %v681
        %v779 = vpack.c.b16 %v734, %v731
        %v780 = vpack.c.b16 %v735, %v732
        %v781 = vpack.c.b16 %v736, %v733
        %v782 = vpack.c.b16 %v740, %v737
        %v783 = vpack.c.b16 %v741, %v738
        %v784 = vpack.c.b16 %v742, %v739
        %v785 = vpack.c.b16 %v746, %v743
        %v786 = vpack.c.b16 %v747, %v744
        %v787 = vpack.c.b16 %v748, %v745
        %v788 = vpack.c.b16 %v752, %v749
        %v789 = vpack.c.b16 %v753, %v750
        %v790 = vpack.c.b16 %v754, %v751
        %v791 = vpack.c.b16 %v758, %v755
        %v792 = vpack.c.b16 %v759, %v756
        %v793 = vpack.c.b16 %v760, %v757
        %v794 = vpack.c.b16 %v764, %v761
        %v795 = vpack.c.b16 %v765, %v762
        %v796 = vpack.c.b16 %v766, %v763
        %v797 = vpack.c.b16 %v770, %v767
        %v798 = vpack.c.b16 %v771, %v768
        %v799 = vpack.c.b16 %v772, %v769
        %v800 = vpack.c.b16 %v776, %v773
        %v801 = vpack.c.b16 %v777, %v774
        %v802 = vpack.c.b16 %v778, %v775
        %827 = vmatprep.subr.bf16.mxu0 %v780
        %828 = vmatpush1.bf16.msra.mxu0 %v779
        %829 = vmatprep.subr.bf16.mxu0 %v783
        %830 = vmatpush1.bf16.msra.mxu0 %v782
        %831 = vmatprep.subr.bf16.mxu0 %v786
        %832 = vmatpush1.bf16.msra.mxu0 %v785
        %833 = vmatprep.subr.bf16.mxu0 %v789
        %834 = vmatpush1.bf16.msra.mxu0 %v788
        %835 = vmatprep.subr.bf16.mxu0 %v792
        %836 = vmatpush1.bf16.msra.mxu0 %v791
        %837 = vmatprep.subr.bf16.mxu0 %v795
        %838 = vmatpush1.bf16.msra.mxu0 %v794
        %839 = vmatprep.subr.bf16.mxu0 %v798
        %840 = vmatpush1.bf16.msra.mxu0 %v797
        %841 = vmatprep.subr.bf16.mxu0 %v801
        %842 = vmatpush1.bf16.msra.mxu0 %v800
        %843 = vmatprep.subr.bf16.mxu0 0
        %844 = vmatpush1.bf16.msra.mxu0 0
        %845 = vmatprep.subr.bf16.mxu0 0
        %846 = vmatpush1.bf16.msra.mxu0 0
        %847 = vmatprep.subr.bf16.mxu0 0
        %848 = vmatpush1.bf16.msra.mxu0 0
        %849 = vmatprep.subr.bf16.mxu0 0
        %850 = vmatpush1.bf16.msra.mxu0 0
        %851 = vmatprep.subr.bf16.mxu0 0
        %852 = vmatpush1.bf16.msra.mxu0 0
        %853 = vmatprep.subr.bf16.mxu0 0
        %854 = vmatpush1.bf16.msra.mxu0 0
        %855 = vmatprep.subr.bf16.mxu0 0
        %856 = vmatpush1.bf16.msra.mxu0 0
        %857 = vmatprep.subr.bf16.mxu0 0
        %858 = vmatpush1.bf16.msra.mxu0 0
        %859 = vmatprep.mubr.bf16.mxu0 0
        %860 = vmatmul.mubr.bf16.gmra.mrb[0].mxu0 %v649
        %v861 = vpop.f32.mrb[0].mxu0
        %v862 = vadd.f32 %v687, %v861
        %v863 = vpop.f32.mrb[0].mxu0
        %v864 = vadd.f32 %v691, %v863
        %v865 = vpop.f32.mrb[0].mxu0
        %v866 = vadd.f32 %v687, %v865
        %v867 = vpop.f32.mrb[0].mxu0
        %v868 = vadd.f32 %v691, %v867
        %869 = vdwg.mxu0
        %870 = vmatprep.subr.bf16.mxu0 0
        %871 = vmatpush1.bf16.msra.mxu0 %v781
        %872 = vmatprep.subr.bf16.mxu0 0
        %873 = vmatpush1.bf16.msra.mxu0 %v784
        %874 = vmatprep.subr.bf16.mxu0 0
        %875 = vmatpush1.bf16.msra.mxu0 %v787
        %876 = vmatprep.subr.bf16.mxu0 0
        %877 = vmatpush1.bf16.msra.mxu0 %v790
        %878 = vmatprep.subr.bf16.mxu0 0
        %879 = vmatpush1.bf16.msra.mxu0 %v793
        %880 = vmatprep.subr.bf16.mxu0 0
        %881 = vmatpush1.bf16.msra.mxu0 %v796
        %882 = vmatprep.subr.bf16.mxu0 0
        %883 = vmatpush1.bf16.msra.mxu0 %v799
        %884 = vmatprep.subr.bf16.mxu0 0
        %885 = vmatpush1.bf16.msra.mxu0 %v802
        %886 = vmatprep.subr.bf16.mxu0 0
        %887 = vmatpush1.bf16.msra.mxu0 0
        %888 = vmatprep.subr.bf16.mxu0 0
        %889 = vmatpush1.bf16.msra.mxu0 0
        %890 = vmatprep.subr.bf16.mxu0 0
        %891 = vmatpush1.bf16.msra.mxu0 0
        %892 = vmatprep.subr.bf16.mxu0 0
        %893 = vmatpush1.bf16.msra.mxu0 0
        %894 = vmatprep.subr.bf16.mxu0 0
        %895 = vmatpush1.bf16.msra.mxu0 0
        %896 = vmatprep.subr.bf16.mxu0 0
        %897 = vmatpush1.bf16.msra.mxu0 0
        %898 = vmatprep.subr.bf16.mxu0 0
        %899 = vmatpush1.bf16.msra.mxu0 0
        %900 = vmatprep.subr.bf16.mxu0 0
        %901 = vmatpush1.bf16.msra.mxu0 0
        %902 = vmatprep.mubr.bf16.mxu0 0
        %903 = vmatmul.mubr.bf16.gmra.mrb[0].mxu0 %v649
        %v904 = vpop.f32.mrb[0].mxu0
        %v905 = vadd.f32 %v695, %v904
        %v906 = vpop.f32.mrb[0].mxu0
        %v907 = vpop.f32.mrb[0].mxu0
        %v908 = vadd.f32 %v695, %v907
        %v909 = vpop.f32.mrb[0].mxu0
        %910 = vdwg.mxu0
        %v911 = vmul.f32 %v862, 0.17677669
        %v912 = vmul.f32 %v866, 0.17677669
        %v913 = vpack.c.bf16 %v912, %v911
        %v914 = vpack.c.bf16 %v868, %v864
        %v915 = vpack.c.bf16 %v908, %v905
        %vm916 = vcmask 261120
        %v918 = vsel %vm916, %v913, 0
        %v921 = vsel %vm916, %v914, 0
        %923 = vmatprep.subr.bf16.mxu0 0
        %924 = vmatpush1.bf16.xpose.msra.mxu0 %v921
        %925 = vmatprep.subr.bf16.mxu0 0
        %926 = vmatpush1.bf16.xpose.msra.mxu0 0
        %927 = vmatprep.subr.bf16.mxu0 0
        %928 = vmatpush1.bf16.xpose.msra.mxu0 0
        %929 = vmatprep.subr.bf16.mxu0 0
        %930 = vmatpush1.bf16.xpose.msra.mxu0 0
        %931 = vmatprep.subr.bf16.mxu0 0
        %932 = vmatpush1.bf16.xpose.msra.mxu0 0
        %933 = vmatprep.subr.bf16.mxu0 0
        %934 = vmatpush1.bf16.xpose.msra.mxu0 0
        %935 = vmatprep.subr.bf16.mxu0 0
        %936 = vmatpush1.bf16.xpose.msra.mxu0 0
        %937 = vmatprep.subr.bf16.mxu0 0
        %938 = vmatpush1.bf16.xpose.msra.mxu0 0
        %939 = vmatprep.subr.bf16.mxu0 0
        %940 = vmatpush1.bf16.xpose.msra.mxu0 0
        %941 = vmatprep.subr.bf16.mxu0 0
        %942 = vmatpush1.bf16.xpose.msra.mxu0 0
        %943 = vmatprep.subr.bf16.mxu0 0
        %944 = vmatpush1.bf16.xpose.msra.mxu0 0
        %945 = vmatprep.subr.bf16.mxu0 0
        %946 = vmatpush1.bf16.xpose.msra.mxu0 0
        %947 = vmatprep.subr.bf16.mxu0 0
        %948 = vmatpush1.bf16.xpose.msra.mxu0 0
        %949 = vmatprep.subr.bf16.mxu0 0
        %950 = vmatpush1.bf16.xpose.msra.mxu0 0
        %951 = vmatprep.subr.bf16.mxu0 0
        %952 = vmatpush1.bf16.xpose.msra.mxu0 0
        %953 = vmatprep.subr.bf16.mxu0 0
        %954 = vmatpush1.bf16.xpose.msra.mxu0 0
        %955 = vmatprep.mubr.bf16.mxu0 0
        %956 = vmatmul.mubr.bf16.gmra.mrb[0].mxu0 %v918
        %v957 = vpop.f32.mrb[0].mxu0
        %v958 = vadd.f32 %v591, %v957
        %v959 = vpop.f32.mrb[0].mxu0
        %v960 = vpop.f32.mrb[0].mxu0
        %v961 = vadd.f32 %v592, %v960
        %v962 = vpop.f32.mrb[0].mxu0
        %963 = vdwg.mxu0
        %vm964 = vcmask 130048
        %v965 = vsel %vm964, %v958, -inf
        %966 = vmax.xlane.f32.xlu0 %v965
        %v967 = vpop.xlane.xlu0 %966
        %v968 = vsel %vm964, %v961, -inf
        %969 = vmax.xlane.f32.xlu0 %v968
        %v970 = vpop.xlane.xlu0 %969
        %v971 = vsub.f32 %v958, %v967
        %v972 = vsub.f32 %v961, %v970
        %v973 = vmul.f32 %v971, 1.442695
        %v974 = vpow.pop %v973
        %v975 = vmul.f32 %v972, 1.442695
        %v976 = vpow.pop %v975
        %v977 = vsel %vm964, %v974, 0.0
        %978 = vadd.xlane.f32.xlu0 %v977
        %v979 = vpop.xlane.xlu0 %978
        %v980 = vsel %vm964, %v976, 0.0
        %981 = vadd.xlane.f32.xlu0 %v980
        %v982 = vpop.xlane.xlu0 %981
        %v983 = vpack.c.bf16 %v976, %v974
        %v985 = vsel %vm964, %v983, 0
        %987 = vmatprep.subr.bf16.mxu0 0
        %988 = vmatpush1.bf16.msra.mxu0 %v915
        %989 = vmatprep.subr.bf16.mxu0 0
        %990 = vmatpush1.bf16.msra.mxu0 0
        %991 = vmatprep.subr.bf16.mxu0 0
        %992 = vmatpush1.bf16.msra.mxu0 0
        %993 = vmatprep.subr.bf16.mxu0 0
        %994 = vmatpush1.bf16.msra.mxu0 0
        %995 = vmatprep.subr.bf16.mxu0 0
        %996 = vmatpush1.bf16.msra.mxu0 0
        %997 = vmatprep.subr.bf16.mxu0 0
        %998 = vmatpush1.bf16.msra.mxu0 0
        %999 = vmatprep.subr.bf16.mxu0 0
        %1000 = vmatpush1.bf16.msra.mxu0 0
        %1001 = vmatprep.subr.bf16.mxu0 0
        %1002 = vmatpush1.bf16.msra.mxu0 0
        %1003 = vmatprep.subr.bf16.mxu0 0
        %1004 = vmatpush1.bf16.msra.mxu0 0
        %1005 = vmatprep.subr.bf16.mxu0 0
        %1006 = vmatpush1.bf16.msra.mxu0 0
        %1007 = vmatprep.subr.bf16.mxu0 0
        %1008 = vmatpush1.bf16.msra.mxu0 0
        %1009 = vmatprep.subr.bf16.mxu0 0
        %1010 = vmatpush1.bf16.msra.mxu0 0
        %1011 = vmatprep.subr.bf16.mxu0 0
        %1012 = vmatpush1.bf16.msra.mxu0 0
        %1013 = vmatprep.subr.bf16.mxu0 0
        %1014 = vmatpush1.bf16.msra.mxu0 0
        %1015 = vmatprep.subr.bf16.mxu0 0
        %1016 = vmatpush1.bf16.msra.mxu0 0
        %1017 = vmatprep.subr.bf16.mxu0 0
        %1018 = vmatpush1.bf16.msra.mxu0 0
        %1019 = vmatprep.mubr.bf16.mxu0 0
        %1020 = vmatmul.mubr.bf16.gmra.mrb[0].mxu0 %v985
        %v1021 = vpop.f32.mrb[0].mxu0
        %v1022 = vadd.f32 0.0, %v1021
        %v1023 = vpop.f32.mrb[0].mxu0
        %v1024 = vpop.f32.mrb[0].mxu0
        %v1025 = vadd.f32 0.0, %v1024
        %v1026 = vpop.f32.mrb[0].mxu0
        %1027 = vdwg.mxu0
        %v1028 = vrcp.pop %v979
        %v1029 = vrcp.pop %v982
        %v1030 = vmul.f32 %v1022, %v1028
        %v1031 = vmul.f32 %v1025, %v1029
        %v1032 = vpack.c.bf16 %v1031, %v1030
        %1033 = vst.msk [vmem:[#allocation2] sm:$0xff] %vm916, %v1032
        %1035 = vrot.lane.b32.xlu0 %v913, 96
        %v1036 = vpop.permute.xlu0 %1035
        %1038 = vrot.lane.b32.xlu0 %v914, 96
        %v1039 = vpop.permute.xlu0 %1038
        %v1041 = vsel %vm916, %v1036, 0
        %v1044 = vsel %vm916, %v1039, 0
        %1046 = vmatprep.subr.bf16.mxu0 0
        %1047 = vmatpush1.bf16.xpose.msra.mxu0 %v1044
        %1048 = vmatprep.subr.bf16.mxu0 0
        %1049 = vmatpush1.bf16.xpose.msra.mxu0 0
        %1050 = vmatprep.subr.bf16.mxu0 0
        %1051 = vmatpush1.bf16.xpose.msra.mxu0 0
        %1052 = vmatprep.subr.bf16.mxu0 0
        %1053 = vmatpush1.bf16.xpose.msra.mxu0 0
        %1054 = vmatprep.subr.bf16.mxu0 0
        %1055 = vmatpush1.bf16.xpose.msra.mxu0 0
        %1056 = vmatprep.subr.bf16.mxu0 0
        %1057 = vmatpush1.bf16.xpose.msra.mxu0 0
        %1058 = vmatprep.subr.bf16.mxu0 0
        %1059 = vmatpush1.bf16.xpose.msra.mxu0 0
        %1060 = vmatprep.subr.bf16.mxu0 0
        %1061 = vmatpush1.bf16.xpose.msra.mxu0 0
        %1062 = vmatprep.subr.bf16.mxu0 0
        %1063 = vmatpush1.bf16.xpose.msra.mxu0 0
        %1064 = vmatprep.subr.bf16.mxu0 0
        %1065 = vmatpush1.bf16.xpose.msra.mxu0 0
        %1066 = vmatprep.subr.bf16.mxu0 0
        %1067 = vmatpush1.bf16.xpose.msra.mxu0 0
        %1068 = vmatprep.subr.bf16.mxu0 0
        %1069 = vmatpush1.bf16.xpose.msra.mxu0 0
        %1070 = vmatprep.subr.bf16.mxu0 0
        %1071 = vmatpush1.bf16.xpose.msra.mxu0 0
        %1072 = vmatprep.subr.bf16.mxu0 0
        %1073 = vmatpush1.bf16.xpose.msra.mxu0 0
        %1074 = vmatprep.subr.bf16.mxu0 0
        %1075 = vmatpush1.bf16.xpose.msra.mxu0 0
        %1076 = vmatprep.subr.bf16.mxu0 0
        %1077 = vmatpush1.bf16.xpose.msra.mxu0 0
        %1078 = vmatprep.mubr.bf16.mxu0 0
        %1079 = vmatmul.mubr.bf16.gmra.mrb[0].mxu0 %v1041
        %v1080 = vpop.f32.mrb[0].mxu0
        %v1081 = vadd.f32 %v591, %v1080
        %v1082 = vpop.f32.mrb[0].mxu0
        %v1083 = vpop.f32.mrb[0].mxu0
        %v1084 = vadd.f32 %v592, %v1083
        %v1085 = vpop.f32.mrb[0].mxu0
        %1086 = vdwg.mxu0
        %v1087 = vsel %vm964, %v1081, -inf
        %1088 = vmax.xlane.f32.xlu0 %v1087
        %v1089 = vpop.xlane.xlu0 %1088
        %v1090 = vsel %vm964, %v1084, -inf
        %1091 = vmax.xlane.f32.xlu0 %v1090
        %v1092 = vpop.xlane.xlu0 %1091
        %v1093 = vsub.f32 %v1081, %v1089
        %v1094 = vsub.f32 %v1084, %v1092
        %v1095 = vmul.f32 %v1093, 1.442695
        %v1096 = vpow.pop %v1095
        %v1097 = vmul.f32 %v1094, 1.442695
        %v1098 = vpow.pop %v1097
        %v1099 = vsel %vm964, %v1096, 0.0
        %1100 = vadd.xlane.f32.xlu0 %v1099
        %v1101 = vpop.xlane.xlu0 %1100
        %v1102 = vsel %vm964, %v1098, 0.0
        %1103 = vadd.xlane.f32.xlu0 %v1102
        %v1104 = vpop.xlane.xlu0 %1103
        %v1105 = vpack.c.bf16 %v1098, %v1096
        %1107 = vrot.lane.b32.xlu0 %v915, 96
        %v1108 = vpop.permute.xlu0 %1107
        %v1111 = vsel %vm964, %v1105, 0
        %1113 = vmatprep.subr.bf16.mxu0 0
        %1114 = vmatpush1.bf16.msra.mxu0 %v1108
        %1115 = vmatprep.subr.bf16.mxu0 0
        %1116 = vmatpush1.bf16.msra.mxu0 0
        %1117 = vmatprep.subr.bf16.mxu0 0
        %1118 = vmatpush1.bf16.msra.mxu0 0
        %1119 = vmatprep.subr.bf16.mxu0 0
        %1120 = vmatpush1.bf16.msra.mxu0 0
        %1121 = vmatprep.subr.bf16.mxu0 0
        %1122 = vmatpush1.bf16.msra.mxu0 0
        %1123 = vmatprep.subr.bf16.mxu0 0
        %1124 = vmatpush1.bf16.msra.mxu0 0
        %1125 = vmatprep.subr.bf16.mxu0 0
        %1126 = vmatpush1.bf16.msra.mxu0 0
        %1127 = vmatprep.subr.bf16.mxu0 0
        %1128 = vmatpush1.bf16.msra.mxu0 0
        %1129 = vmatprep.subr.bf16.mxu0 0
        %1130 = vmatpush1.bf16.msra.mxu0 0
        %1131 = vmatprep.subr.bf16.mxu0 0
        %1132 = vmatpush1.bf16.msra.mxu0 0
        %1133 = vmatprep.subr.bf16.mxu0 0
        %1134 = vmatpush1.bf16.msra.mxu0 0
        %1135 = vmatprep.subr.bf16.mxu0 0
        %1136 = vmatpush1.bf16.msra.mxu0 0
        %1137 = vmatprep.subr.bf16.mxu0 0
        %1138 = vmatpush1.bf16.msra.mxu0 0
        %1139 = vmatprep.subr.bf16.mxu0 0
        %1140 = vmatpush1.bf16.msra.mxu0 0
        %1141 = vmatprep.subr.bf16.mxu0 0
        %1142 = vmatpush1.bf16.msra.mxu0 0
        %1143 = vmatprep.subr.bf16.mxu0 0
        %1144 = vmatpush1.bf16.msra.mxu0 0
        %1145 = vmatprep.mubr.bf16.mxu0 0
        %1146 = vmatmul.mubr.bf16.gmra.mrb[0].mxu0 %v1111
        %v1147 = vpop.f32.mrb[0].mxu0
        %v1148 = vadd.f32 0.0, %v1147
        %v1149 = vpop.f32.mrb[0].mxu0
        %v1150 = vpop.f32.mrb[0].mxu0
        %v1151 = vadd.f32 0.0, %v1150
        %v1152 = vpop.f32.mrb[0].mxu0
        %1153 = vdwg.mxu0
        %v1154 = vrcp.pop %v1101
        %v1155 = vrcp.pop %v1104
        %v1156 = vmul.f32 %v1148, %v1154
        %v1157 = vmul.f32 %v1151, %v1155
        %v1158 = vpack.c.bf16 %v1157, %v1156
        %1160 = vrot.lane.b32.xlu0 %v1158, 32
        %v1161 = vpop.permute.xlu0 %1160
        %vm1163 = vcmask 523520
        %1164 = vst.msk [vmem:[#allocation2] sm:$0xff] %vm1163, %v1161
        %1165 = vrot.lane.b32.xlu0 %v913, 64
        %v1166 = vpop.permute.xlu0 %1165
        %1167 = vrot.lane.b32.xlu0 %v914, 64
        %v1168 = vpop.permute.xlu0 %1167
        %v1170 = vsel %vm916, %v1166, 0
        %v1173 = vsel %vm916, %v1168, 0
        %1175 = vmatprep.subr.bf16.mxu0 0
        %1176 = vmatpush1.bf16.xpose.msra.mxu0 %v1173
        %1177 = vmatprep.subr.bf16.mxu0 0
        %1178 = vmatpush1.bf16.xpose.msra.mxu0 0
        %1179 = vmatprep.subr.bf16.mxu0 0
        %1180 = vmatpush1.bf16.xpose.msra.mxu0 0
        %1181 = vmatprep.subr.bf16.mxu0 0
        %1182 = vmatpush1.bf16.xpose.msra.mxu0 0
        %1183 = vmatprep.subr.bf16.mxu0 0
        %1184 = vmatpush1.bf16.xpose.msra.mxu0 0
        %1185 = vmatprep.subr.bf16.mxu0 0
        %1186 = vmatpush1.bf16.xpose.msra.mxu0 0
        %1187 = vmatprep.subr.bf16.mxu0 0
        %1188 = vmatpush1.bf16.xpose.msra.mxu0 0
        %1189 = vmatprep.subr.bf16.mxu0 0
        %1190 = vmatpush1.bf16.xpose.msra.mxu0 0
        %1191 = vmatprep.subr.bf16.mxu0 0
        %1192 = vmatpush1.bf16.xpose.msra.mxu0 0
        %1193 = vmatprep.subr.bf16.mxu0 0
        %1194 = vmatpush1.bf16.xpose.msra.mxu0 0
        %1195 = vmatprep.subr.bf16.mxu0 0
        %1196 = vmatpush1.bf16.xpose.msra.mxu0 0
        %1197 = vmatprep.subr.bf16.mxu0 0
        %1198 = vmatpush1.bf16.xpose.msra.mxu0 0
        %1199 = vmatprep.subr.bf16.mxu0 0
        %1200 = vmatpush1.bf16.xpose.msra.mxu0 0
        %1201 = vmatprep.subr.bf16.mxu0 0
        %1202 = vmatpush1.bf16.xpose.msra.mxu0 0
        %1203 = vmatprep.subr.bf16.mxu0 0
        %1204 = vmatpush1.bf16.xpose.msra.mxu0 0
        %1205 = vmatprep.subr.bf16.mxu0 0
        %1206 = vmatpush1.bf16.xpose.msra.mxu0 0
        %1207 = vmatprep.mubr.bf16.mxu0 0
        %1208 = vmatmul.mubr.bf16.gmra.mrb[0].mxu0 %v1170
        %v1209 = vpop.f32.mrb[0].mxu0
        %v1210 = vadd.f32 %v591, %v1209
        %v1211 = vpop.f32.mrb[0].mxu0
        %v1212 = vpop.f32.mrb[0].mxu0
        %v1213 = vadd.f32 %v592, %v1212
        %v1214 = vpop.f32.mrb[0].mxu0
        %1215 = vdwg.mxu0
        %v1216 = vsel %vm964, %v1210, -inf
        %1217 = vmax.xlane.f32.xlu0 %v1216
        %v1218 = vpop.xlane.xlu0 %1217
        %v1219 = vsel %vm964, %v1213, -inf
        %1220 = vmax.xlane.f32.xlu0 %v1219
        %v1221 = vpop.xlane.xlu0 %1220
        %v1222 = vsub.f32 %v1210, %v1218
        %v1223 = vsub.f32 %v1213, %v1221
        %v1224 = vmul.f32 %v1222, 1.442695
        %v1225 = vpow.pop %v1224
        %v1226 = vmul.f32 %v1223, 1.442695
        %v1227 = vpow.pop %v1226
        %v1228 = vsel %vm964, %v1225, 0.0
        %1229 = vadd.xlane.f32.xlu0 %v1228
        %v1230 = vpop.xlane.xlu0 %1229
        %v1231 = vsel %vm964, %v1227, 0.0
        %1232 = vadd.xlane.f32.xlu0 %v1231
        %v1233 = vpop.xlane.xlu0 %1232
        %v1234 = vpack.c.bf16 %v1227, %v1225
        %1235 = vrot.lane.b32.xlu0 %v915, 64
        %v1236 = vpop.permute.xlu0 %1235
        %v1239 = vsel %vm964, %v1234, 0
        %1241 = vmatprep.subr.bf16.mxu0 0
        %1242 = vmatpush1.bf16.msra.mxu0 %v1236
        %1243 = vmatprep.subr.bf16.mxu0 0
        %1244 = vmatpush1.bf16.msra.mxu0 0
        %1245 = vmatprep.subr.bf16.mxu0 0
        %1246 = vmatpush1.bf16.msra.mxu0 0
        %1247 = vmatprep.subr.bf16.mxu0 0
        %1248 = vmatpush1.bf16.msra.mxu0 0
        %1249 = vmatprep.subr.bf16.mxu0 0
        %1250 = vmatpush1.bf16.msra.mxu0 0
        %1251 = vmatprep.subr.bf16.mxu0 0
        %1252 = vmatpush1.bf16.msra.mxu0 0
        %1253 = vmatprep.subr.bf16.mxu0 0
        %1254 = vmatpush1.bf16.msra.mxu0 0
        %1255 = vmatprep.subr.bf16.mxu0 0
        %1256 = vmatpush1.bf16.msra.mxu0 0
        %1257 = vmatprep.subr.bf16.mxu0 0
        %1258 = vmatpush1.bf16.msra.mxu0 0
        %1259 = vmatprep.subr.bf16.mxu0 0
        %1260 = vmatpush1.bf16.msra.mxu0 0
        %1261 = vmatprep.subr.bf16.mxu0 0
        %1262 = vmatpush1.bf16.msra.mxu0 0
        %1263 = vmatprep.subr.bf16.mxu0 0
        %1264 = vmatpush1.bf16.msra.mxu0 0
        %1265 = vmatprep.subr.bf16.mxu0 0
        %1266 = vmatpush1.bf16.msra.mxu0 0
        %1267 = vmatprep.subr.bf16.mxu0 0
        %1268 = vmatpush1.bf16.msra.mxu0 0
        %1269 = vmatprep.subr.bf16.mxu0 0
        %1270 = vmatpush1.bf16.msra.mxu0 0
        %1271 = vmatprep.subr.bf16.mxu0 0
        %1272 = vmatpush1.bf16.msra.mxu0 0
        %1273 = vmatprep.mubr.bf16.mxu0 0
        %1274 = vmatmul.mubr.bf16.gmra.mrb[0].mxu0 %v1239
        %v1275 = vpop.f32.mrb[0].mxu0
        %v1276 = vadd.f32 0.0, %v1275
        %v1277 = vpop.f32.mrb[0].mxu0
        %v1278 = vpop.f32.mrb[0].mxu0
        %v1279 = vadd.f32 0.0, %v1278
        %v1280 = vpop.f32.mrb[0].mxu0
        %1281 = vdwg.mxu0
        %v1282 = vrcp.pop %v1230
        %v1283 = vrcp.pop %v1233
        %v1284 = vmul.f32 %v1276, %v1282
        %v1285 = vmul.f32 %v1279, %v1283
        %v1286 = vpack.c.bf16 %v1285, %v1284
        %1288 = vrot.lane.b32.xlu0 %v1286, 64
        %v1289 = vpop.permute.xlu0 %1288
        %vm1291 = vcmask 785920
        %1292 = vst.msk [vmem:[#allocation2] sm:$0xff] %vm1291, %v1289
        %1293 = vrot.lane.b32.xlu0 %v913, 32
        %v1294 = vpop.permute.xlu0 %1293
        %1295 = vrot.lane.b32.xlu0 %v914, 32
        %v1296 = vpop.permute.xlu0 %1295
        %v1298 = vsel %vm916, %v1294, 0
        %v1301 = vsel %vm916, %v1296, 0
        %1303 = vmatprep.subr.bf16.mxu0 0
        %1304 = vmatpush1.bf16.xpose.msra.mxu0 %v1301
        %1305 = vmatprep.subr.bf16.mxu0 0
        %1306 = vmatpush1.bf16.xpose.msra.mxu0 0
        %1307 = vmatprep.subr.bf16.mxu0 0
        %1308 = vmatpush1.bf16.xpose.msra.mxu0 0
        %1309 = vmatprep.subr.bf16.mxu0 0
        %1310 = vmatpush1.bf16.xpose.msra.mxu0 0
        %1311 = vmatprep.subr.bf16.mxu0 0
        %1312 = vmatpush1.bf16.xpose.msra.mxu0 0
        %1313 = vmatprep.subr.bf16.mxu0 0
        %1314 = vmatpush1.bf16.xpose.msra.mxu0 0
        %1315 = vmatprep.subr.bf16.mxu0 0
        %1316 = vmatpush1.bf16.xpose.msra.mxu0 0
        %1317 = vmatprep.subr.bf16.mxu0 0
        %1318 = vmatpush1.bf16.xpose.msra.mxu0 0
        %1319 = vmatprep.subr.bf16.mxu0 0
        %1320 = vmatpush1.bf16.xpose.msra.mxu0 0
        %1321 = vmatprep.subr.bf16.mxu0 0
        %1322 = vmatpush1.bf16.xpose.msra.mxu0 0
        %1323 = vmatprep.subr.bf16.mxu0 0
        %1324 = vmatpush1.bf16.xpose.msra.mxu0 0
        %1325 = vmatprep.subr.bf16.mxu0 0
        %1326 = vmatpush1.bf16.xpose.msra.mxu0 0
        %1327 = vmatprep.subr.bf16.mxu0 0
        %1328 = vmatpush1.bf16.xpose.msra.mxu0 0
        %1329 = vmatprep.subr.bf16.mxu0 0
        %1330 = vmatpush1.bf16.xpose.msra.mxu0 0
        %1331 = vmatprep.subr.bf16.mxu0 0
        %1332 = vmatpush1.bf16.xpose.msra.mxu0 0
        %1333 = vmatprep.subr.bf16.mxu0 0
        %1334 = vmatpush1.bf16.xpose.msra.mxu0 0
        %1335 = vmatprep.mubr.bf16.mxu0 0
        %1336 = vmatmul.mubr.bf16.gmra.mrb[0].mxu0 %v1298
        %v1337 = vpop.f32.mrb[0].mxu0
        %v1338 = vadd.f32 %v591, %v1337
        %v1339 = vpop.f32.mrb[0].mxu0
        %v1340 = vpop.f32.mrb[0].mxu0
        %v1341 = vadd.f32 %v592, %v1340
        %v1342 = vpop.f32.mrb[0].mxu0
        %1343 = vdwg.mxu0
        %v1344 = vsel %vm964, %v1338, -inf
        %1345 = vmax.xlane.f32.xlu0 %v1344
        %v1346 = vpop.xlane.xlu0 %1345
        %v1347 = vsel %vm964, %v1341, -inf
        %1348 = vmax.xlane.f32.xlu0 %v1347
        %v1349 = vpop.xlane.xlu0 %1348
        %v1350 = vsub.f32 %v1338, %v1346
        %v1351 = vsub.f32 %v1341, %v1349
        %v1352 = vmul.f32 %v1350, 1.442695
        %v1353 = vpow.pop %v1352
        %v1354 = vmul.f32 %v1351, 1.442695
        %v1355 = vpow.pop %v1354
        %v1356 = vsel %vm964, %v1353, 0.0
        %1357 = vadd.xlane.f32.xlu0 %v1356
        %v1358 = vpop.xlane.xlu0 %1357
        %v1359 = vsel %vm964, %v1355, 0.0
        %1360 = vadd.xlane.f32.xlu0 %v1359
        %v1361 = vpop.xlane.xlu0 %1360
        %v1362 = vpack.c.bf16 %v1355, %v1353
        %1363 = vrot.lane.b32.xlu0 %v915, 32
        %v1364 = vpop.permute.xlu0 %1363
        %v1367 = vsel %vm964, %v1362, 0
        %1369 = vmatprep.subr.bf16.mxu0 0
        %1370 = vmatpush1.bf16.msra.mxu0 %v1364
        %1371 = vmatprep.subr.bf16.mxu0 0
        %1372 = vmatpush1.bf16.msra.mxu0 0
        %1373 = vmatprep.subr.bf16.mxu0 0
        %1374 = vmatpush1.bf16.msra.mxu0 0
        %1375 = vmatprep.subr.bf16.mxu0 0
        %1376 = vmatpush1.bf16.msra.mxu0 0
        %1377 = vmatprep.subr.bf16.mxu0 0
        %1378 = vmatpush1.bf16.msra.mxu0 0
        %1379 = vmatprep.subr.bf16.mxu0 0
        %1380 = vmatpush1.bf16.msra.mxu0 0
        %1381 = vmatprep.subr.bf16.mxu0 0
        %1382 = vmatpush1.bf16.msra.mxu0 0
        %1383 = vmatprep.subr.bf16.mxu0 0
        %1384 = vmatpush1.bf16.msra.mxu0 0
        %1385 = vmatprep.subr.bf16.mxu0 0
        %1386 = vmatpush1.bf16.msra.mxu0 0
        %1387 = vmatprep.subr.bf16.mxu0 0
        %1388 = vmatpush1.bf16.msra.mxu0 0
        %1389 = vmatprep.subr.bf16.mxu0 0
        %1390 = vmatpush1.bf16.msra.mxu0 0
        %1391 = vmatprep.subr.bf16.mxu0 0
        %1392 = vmatpush1.bf16.msra.mxu0 0
        %1393 = vmatprep.subr.bf16.mxu0 0
        %1394 = vmatpush1.bf16.msra.mxu0 0
        %1395 = vmatprep.subr.bf16.mxu0 0
        %1396 = vmatpush1.bf16.msra.mxu0 0
        %1397 = vmatprep.subr.bf16.mxu0 0
        %1398 = vmatpush1.bf16.msra.mxu0 0
        %1399 = vmatprep.subr.bf16.mxu0 0
        %1400 = vmatpush1.bf16.msra.mxu0 0
        %1401 = vmatprep.mubr.bf16.mxu0 0
        %1402 = vmatmul.mubr.bf16.gmra.mrb[0].mxu0 %v1367
        %v1403 = vpop.f32.mrb[0].mxu0
        %v1404 = vadd.f32 0.0, %v1403
        %v1405 = vpop.f32.mrb[0].mxu0
        %v1406 = vpop.f32.mrb[0].mxu0
        %v1407 = vadd.f32 0.0, %v1406
        %v1408 = vpop.f32.mrb[0].mxu0
        %1409 = vdwg.mxu0
        %v1410 = vrcp.pop %v1358
        %v1411 = vrcp.pop %v1361
        %v1412 = vmul.f32 %v1404, %v1410
        %v1413 = vmul.f32 %v1407, %v1411
        %v1414 = vpack.c.bf16 %v1413, %v1412
        %1416 = vrot.lane.b32.xlu0 %v1414, 96
        %v1417 = vpop.permute.xlu0 %1416
        %vm1419 = vcmask 1048320
        %1420 = vst.msk [vmem:[#allocation2] sm:$0xff] %vm1419, %v1417
        %v1421 = vld [vmem:[#allocation2] sm:$0xff]
        %v1422 = vld [vmem:[#allocation9] sm:$0xf]
        %v1423 = vld [vmem:[#allocation9 + $0x4] sm:$0xf]
        %v1424 = vld [vmem:[#allocation9 + $0x8] sm:$0xf]
        %v1425 = vld [vmem:[#allocation9 + $0xc] sm:$0xf]
        %v1426 = vld [vmem:[#allocation9 + $0x10] sm:$0xf]
        %v1427 = vld [vmem:[#allocation9 + $0x14] sm:$0xf]
        %v1428 = vld [vmem:[#allocation9 + $0x18] sm:$0xf]
        %v1429 = vld [vmem:[#allocation9 + $0x1c] sm:$0xf]
        %v1430 = vld [vmem:[#allocation9 + $0x20] sm:$0xf]
        %v1431 = vld [vmem:[#allocation9 + $0x24] sm:$0xf]
        %v1432 = vld [vmem:[#allocation9 + $0x28] sm:$0xf]
        %v1433 = vld [vmem:[#allocation9 + $0x2c] sm:$0xf]
        %v1434 = vld [vmem:[#allocation9 + $0x30] sm:$0xf]
        %v1435 = vld [vmem:[#allocation9 + $0x34] sm:$0xf]
        %v1436 = vld [vmem:[#allocation9 + $0x38] sm:$0xf]
        %v1437 = vld [vmem:[#allocation9 + $0x3c] sm:$0xf]
        %v1438 = vld [vmem:[%s7] sm:$0x1]
        %v1440 = vlaneseq
        %v1441 = vshrl.u32 %v1440, 7
        %v1442 = vsub.s32 0, %v1441
        %v1443 = vrot.slane %v1438, %v1442
        %v1461 = vunpack.c.l.b16 %v1422
        %v1462 = vunpack.c.l.b16 %v1423
        %v1463 = vunpack.c.l.b16 %v1424
        %v1464 = vunpack.c.l.b16 %v1425
        %v1465 = vunpack.c.l.b16 %v1426
        %v1466 = vunpack.c.l.b16 %v1427
        %v1467 = vunpack.c.l.b16 %v1428
        %v1468 = vunpack.c.l.b16 %v1429
        %v1469 = vunpack.c.l.b16 %v1430
        %v1470 = vunpack.c.l.b16 %v1431
        %v1471 = vunpack.c.l.b16 %v1432
        %v1472 = vunpack.c.l.b16 %v1433
        %v1473 = vunpack.c.l.b16 %v1434
        %v1474 = vunpack.c.l.b16 %v1435
        %v1475 = vunpack.c.l.b16 %v1436
        %v1476 = vunpack.c.l.b16 %v1437
        %v1477 = vpack.c.b16 %v1462, %v1461
        %v1478 = vpack.c.b16 %v1464, %v1463
        %v1479 = vpack.c.b16 %v1466, %v1465
        %v1480 = vpack.c.b16 %v1468, %v1467
        %v1481 = vpack.c.b16 %v1470, %v1469
        %v1482 = vpack.c.b16 %v1472, %v1471
        %v1483 = vpack.c.b16 %v1474, %v1473
        %v1484 = vpack.c.b16 %v1476, %v1475
        %1493 = vmatprep.subr.bf16.mxu0 0
        %1494 = vmatpush1.bf16.msra.mxu0 %v1477
        %1495 = vmatprep.subr.bf16.mxu0 0
        %1496 = vmatpush1.bf16.msra.mxu0 %v1478
        %1497 = vmatprep.subr.bf16.mxu0 0
        %1498 = vmatpush1.bf16.msra.mxu0 %v1479
        %1499 = vmatprep.subr.bf16.mxu0 0
        %1500 = vmatpush1.bf16.msra.mxu0 %v1480
        %1501 = vmatprep.subr.bf16.mxu0 0
        %1502 = vmatpush1.bf16.msra.mxu0 %v1481
        %1503 = vmatprep.subr.bf16.mxu0 0
        %1504 = vmatpush1.bf16.msra.mxu0 %v1482
        %1505 = vmatprep.subr.bf16.mxu0 0
        %1506 = vmatpush1.bf16.msra.mxu0 %v1483
        %1507 = vmatprep.subr.bf16.mxu0 0
        %1508 = vmatpush1.bf16.msra.mxu0 %v1484
        %1509 = vmatprep.subr.bf16.mxu0 0
        %1510 = vmatpush1.bf16.msra.mxu0 0
        %1511 = vmatprep.subr.bf16.mxu0 0
        %1512 = vmatpush1.bf16.msra.mxu0 0
        %1513 = vmatprep.subr.bf16.mxu0 0
        %1514 = vmatpush1.bf16.msra.mxu0 0
        %1515 = vmatprep.subr.bf16.mxu0 0
        %1516 = vmatpush1.bf16.msra.mxu0 0
        %1517 = vmatprep.subr.bf16.mxu0 0
        %1518 = vmatpush1.bf16.msra.mxu0 0
        %1519 = vmatprep.subr.bf16.mxu0 0
        %1520 = vmatpush1.bf16.msra.mxu0 0
        %1521 = vmatprep.subr.bf16.mxu0 0
        %1522 = vmatpush1.bf16.msra.mxu0 0
        %1523 = vmatprep.subr.bf16.mxu0 0
        %1524 = vmatpush1.bf16.msra.mxu0 0
        %1525 = vmatprep.mubr.bf16.mxu0 0
        %1526 = vmatmul.mubr.bf16.gmra.mrb[0].mxu0 %v1421
        %v1527 = vpop.f32.mrb[0].mxu0
        %v1528 = vadd.f32 %v1443, %v1527
        %v1529 = vpop.f32.mrb[0].mxu0
        %v1530 = vpop.f32.mrb[0].mxu0
        %v1531 = vadd.f32 %v1443, %v1530
        %v1532 = vpop.f32.mrb[0].mxu0
        %1533 = vdwg.mxu0
        %v1534 = vadd.f32 %v585, %v1528
        %v1535 = vadd.f32 %v586, %v1531
        %v1536 = vld [vmem:[%s8] sm:$0x1]
        %v1537 = vld [vmem:[%s9] sm:$0x1]
        %1538 = vadd.xlane.f32.xlu0 %v1534
        %v1539 = vpop.xlane.xlu0 %1538
        %1540 = vadd.xlane.f32.xlu0 %v1535
        %v1541 = vpop.xlane.xlu0 %1540
        %v1542 = vmul.f32 %v1539, %v599
        %v1543 = vmul.f32 %v1541, %v599
        %v1544 = vsub.f32 %v1534, %v1542
        %v1545 = vsub.f32 %v1535, %v1543
        %v1546 = vmul.f32 %v1544, %v1544
        %v1547 = vmul.f32 %v1545, %v1545
        %1548 = vadd.xlane.f32.xlu0 %v1546
        %v1549 = vpop.xlane.xlu0 %1548
        %1550 = vadd.xlane.f32.xlu0 %v1547
        %v1551 = vpop.xlane.xlu0 %1550
        %v1552 = vmul.f32 %v1549, %v610
        %v1553 = vmul.f32 %v1551, %v610
        %v1554 = vrsqrt.pop %v1552
        %v1555 = vmul.f32 %v1552, %v1554
        %vm1556 = vcmp.eq.f32.partialorder %v1552, inf
        %v1557 = vsel %vm1556, %v1552, %v1555
        %vm1558 = vcmp.eq.f32.partialorder %v1552, 0.0
        %v1559 = vand.u32 %v1552, 2147483648
        %v1560 = vsel %vm1558, %v1559, %v1557
        %v1561 = vrsqrt.pop %v1553
        %v1562 = vmul.f32 %v1553, %v1561
        %vm1563 = vcmp.eq.f32.partialorder %v1553, inf
        %v1564 = vsel %vm1563, %v1553, %v1562
        %vm1565 = vcmp.eq.f32.partialorder %v1553, 0.0
        %v1566 = vand.u32 %v1553, 2147483648
        %v1567 = vsel %vm1565, %v1566, %v1564
        %v1569 = vlaneseq
        %v1570 = vshrl.u32 %v1569, 7
        %v1571 = vsub.s32 0, %v1570
        %v1572 = vrot.slane %v1536, %v1571
        %v1574 = vmul.f32 %v1572, %v1544
        %v1575 = vmul.f32 %v1572, %v1545
        %v1576 = vadd.f32 %v1560, 1e-06
        %v1577 = vadd.f32 %v1567, 1e-06
        %v1578 = vrcp.pop %v1576
        %v1579 = vmul.f32 %v1574, %v1578
        %v1580 = vrcp.pop %v1577
        %v1581 = vmul.f32 %v1575, %v1580
        %v1583 = vlaneseq
        %v1584 = vshrl.u32 %v1583, 7
        %v1585 = vsub.s32 0, %v1584
        %v1586 = vrot.slane %v1537, %v1585
        %v1588 = vadd.f32 %v1579, %v1586
        %v1589 = vadd.f32 %v1581, %v1586
        %v1590 = vpack.c.bf16 %v1589, %v1588
        %v1591 = vld [vmem:[#allocation11] sm:$0xff]
        %v1592 = vld [vmem:[#allocation11 + $0x8] sm:$0xff]
        %v1593 = vld [vmem:[#allocation11 + $0x10] sm:$0xff]
        %v1594 = vld [vmem:[#allocation11 + $0x18] sm:$0xff]
        %v1595 = vld [vmem:[#allocation11 + $0x20] sm:$0xff]
        %v1596 = vld [vmem:[#allocation11 + $0x28] sm:$0xff]
        %v1597 = vld [vmem:[#allocation11 + $0x30] sm:$0xff]
        %v1598 = vld [vmem:[#allocation11 + $0x38] sm:$0xff]
        %v1599 = vld [vmem:[#allocation11 + $0x40] sm:$0xff]
        %v1600 = vld [vmem:[#allocation11 + $0x48] sm:$0xff]
        %v1601 = vld [vmem:[#allocation11 + $0x50] sm:$0xff]
        %v1602 = vld [vmem:[#allocation11 + $0x58] sm:$0xff]
        %v1603 = vld [vmem:[#allocation11 + $0x60] sm:$0xff]
        %v1604 = vld [vmem:[#allocation11 + $0x68] sm:$0xff]
        %v1605 = vld [vmem:[#allocation11 + $0x70] sm:$0xff]
        %v1606 = vld [vmem:[#allocation11 + $0x78] sm:$0xff]
        %v1607 = vld [vmem:[%s11] sm:$0x3]
        %v1609 = vlaneseq
        %v1610 = vshrl.u32 %v1609, 7
        %v1611 = vsub.s32 0, %v1610
        %v1612 = vrot.slane %v1607, %v1611
        %v1613 = vlaneseq
        %v1614 = vshrl.u32 %v1613, 7
        %v1615 = vsub.s32 1, %v1614
        %v1616 = vrot.slane %v1607, %v1615
        %v1635 = vunpack.c.l.b16 %v1591
        %v1636 = vunpack.c.h.b16 %v1591
        %v1637 = vunpack.c.l.b16 %v1592
        %v1638 = vunpack.c.h.b16 %v1592
        %v1639 = vunpack.c.l.b16 %v1593
        %v1640 = vunpack.c.h.b16 %v1593
        %v1641 = vunpack.c.l.b16 %v1594
        %v1642 = vunpack.c.h.b16 %v1594
        %v1643 = vunpack.c.l.b16 %v1595
        %v1644 = vunpack.c.h.b16 %v1595
        %v1645 = vunpack.c.l.b16 %v1596
        %v1646 = vunpack.c.h.b16 %v1596
        %v1647 = vunpack.c.l.b16 %v1597
        %v1648 = vunpack.c.h.b16 %v1597
        %v1649 = vunpack.c.l.b16 %v1598
        %v1650 = vunpack.c.h.b16 %v1598
        %v1651 = vunpack.c.l.b16 %v1599
        %v1652 = vunpack.c.h.b16 %v1599
        %v1653 = vunpack.c.l.b16 %v1600
        %v1654 = vunpack.c.h.b16 %v1600
        %v1655 = vunpack.c.l.b16 %v1601
        %v1656 = vunpack.c.h.b16 %v1601
        %v1657 = vunpack.c.l.b16 %v1602
        %v1658 = vunpack.c.h.b16 %v1602
        %v1659 = vunpack.c.l.b16 %v1603
        %v1660 = vunpack.c.h.b16 %v1603
        %v1661 = vunpack.c.l.b16 %v1604
        %v1662 = vunpack.c.h.b16 %v1604
        %v1663 = vunpack.c.l.b16 %v1605
        %v1664 = vunpack.c.h.b16 %v1605
        %v1665 = vunpack.c.l.b16 %v1606
        %v1666 = vunpack.c.h.b16 %v1606
        %v1667 = vpack.c.b16 %v1637, %v1635
        %v1668 = vpack.c.b16 %v1638, %v1636
        %v1669 = vpack.c.b16 %v1641, %v1639
        %v1670 = vpack.c.b16 %v1642, %v1640
        %v1671 = vpack.c.b16 %v1645, %v1643
        %v1672 = vpack.c.b16 %v1646, %v1644
        %v1673 = vpack.c.b16 %v1649, %v1647
        %v1674 = vpack.c.b16 %v1650, %v1648
        %v1675 = vpack.c.b16 %v1653, %v1651
        %v1676 = vpack.c.b16 %v1654, %v1652
        %v1677 = vpack.c.b16 %v1657, %v1655
        %v1678 = vpack.c.b16 %v1658, %v1656
        %v1679 = vpack.c.b16 %v1661, %v1659
        %v1680 = vpack.c.b16 %v1662, %v1660
        %v1681 = vpack.c.b16 %v1665, %v1663
        %v1682 = vpack.c.b16 %v1666, %v1664
        %1699 = vmatprep.subr.bf16.mxu0 %v1668
        %1700 = vmatpush1.bf16.msra.mxu0 %v1667
        %1701 = vmatprep.subr.bf16.mxu0 %v1670
        %1702 = vmatpush1.bf16.msra.mxu0 %v1669
        %1703 = vmatprep.subr.bf16.mxu0 %v1672
        %1704 = vmatpush1.bf16.msra.mxu0 %v1671
        %1705 = vmatprep.subr.bf16.mxu0 %v1674
        %1706 = vmatpush1.bf16.msra.mxu0 %v1673
        %1707 = vmatprep.subr.bf16.mxu0 %v1676
        %1708 = vmatpush1.bf16.msra.mxu0 %v1675
        %1709 = vmatprep.subr.bf16.mxu0 %v1678
        %1710 = vmatpush1.bf16.msra.mxu0 %v1677
        %1711 = vmatprep.subr.bf16.mxu0 %v1680
        %1712 = vmatpush1.bf16.msra.mxu0 %v1679
        %1713 = vmatprep.subr.bf16.mxu0 %v1682
        %1714 = vmatpush1.bf16.msra.mxu0 %v1681
        %1715 = vmatprep.subr.bf16.mxu0 0
        %1716 = vmatpush1.bf16.msra.mxu0 0
        %1717 = vmatprep.subr.bf16.mxu0 0
        %1718 = vmatpush1.bf16.msra.mxu0 0
        %1719 = vmatprep.subr.bf16.mxu0 0
        %1720 = vmatpush1.bf16.msra.mxu0 0
        %1721 = vmatprep.subr.bf16.mxu0 0
        %1722 = vmatpush1.bf16.msra.mxu0 0
        %1723 = vmatprep.subr.bf16.mxu0 0
        %1724 = vmatpush1.bf16.msra.mxu0 0
        %1725 = vmatprep.subr.bf16.mxu0 0
        %1726 = vmatpush1.bf16.msra.mxu0 0
        %1727 = vmatprep.subr.bf16.mxu0 0
        %1728 = vmatpush1.bf16.msra.mxu0 0
        %1729 = vmatprep.subr.bf16.mxu0 0
        %1730 = vmatpush1.bf16.msra.mxu0 0
        %1731 = vmatprep.mubr.bf16.mxu0 0
        %1732 = vmatmul.mubr.bf16.gmra.mrb[0].mxu0 %v1590
        %v1733 = vpop.f32.mrb[0].mxu0
        %v1734 = vadd.f32 %v1612, %v1733
        %v1735 = vpop.f32.mrb[0].mxu0
        %v1736 = vadd.f32 %v1616, %v1735
        %v1737 = vpop.f32.mrb[0].mxu0
        %v1738 = vadd.f32 %v1612, %v1737
        %v1739 = vpop.f32.mrb[0].mxu0
        %v1740 = vadd.f32 %v1616, %v1739
        %1741 = vdwg.mxu0
        %v1742 = vmax.f32 %v1734, 0.0
        %v1743 = vmax.f32 %v1736, 0.0
        %v1744 = vmax.f32 %v1738, 0.0
        %v1745 = vmax.f32 %v1740, 0.0
        %v1746 = vpack.c.bf16 %v1744, %v1742
        %v1747 = vpack.c.bf16 %v1745, %v1743
        %v1748 = vld [vmem:[#allocation12] sm:$0xf]
        %v1749 = vld [vmem:[#allocation12 + $0x4] sm:$0xf]
        %v1750 = vld [vmem:[#allocation12 + $0x8] sm:$0xf]
        %v1751 = vld [vmem:[#allocation12 + $0xc] sm:$0xf]
        %v1752 = vld [vmem:[#allocation12 + $0x10] sm:$0xf]
        %v1753 = vld [vmem:[#allocation12 + $0x14] sm:$0xf]
        %v1754 = vld [vmem:[#allocation12 + $0x18] sm:$0xf]
        %v1755 = vld [vmem:[#allocation12 + $0x1c] sm:$0xf]
        %v1756 = vld [vmem:[#allocation12 + $0x20] sm:$0xf]
        %v1757 = vld [vmem:[#allocation12 + $0x24] sm:$0xf]
        %v1758 = vld [vmem:[#allocation12 + $0x28] sm:$0xf]
        %v1759 = vld [vmem:[#allocation12 + $0x2c] sm:$0xf]
        %v1760 = vld [vmem:[#allocation12 + $0x30] sm:$0xf]
        %v1761 = vld [vmem:[#allocation12 + $0x34] sm:$0xf]
        %v1762 = vld [vmem:[#allocation12 + $0x38] sm:$0xf]
        %v1763 = vld [vmem:[#allocation12 + $0x3c] sm:$0xf]
        %v1764 = vld [vmem:[#allocation12 + $0x40] sm:$0xf]
        %v1765 = vld [vmem:[#allocation12 + $0x44] sm:$0xf]
        %v1766 = vld [vmem:[#allocation12 + $0x48] sm:$0xf]
        %v1767 = vld [vmem:[#allocation12 + $0x4c] sm:$0xf]
        %v1768 = vld [vmem:[#allocation12 + $0x50] sm:$0xf]
        %v1769 = vld [vmem:[#allocation12 + $0x54] sm:$0xf]
        %v1770 = vld [vmem:[#allocation12 + $0x58] sm:$0xf]
        %v1771 = vld [vmem:[#allocation12 + $0x5c] sm:$0xf]
        %v1772 = vld [vmem:[#allocation12 + $0x60] sm:$0xf]
        %v1773 = vld [vmem:[#allocation12 + $0x64] sm:$0xf]
        %v1774 = vld [vmem:[#allocation12 + $0x68] sm:$0xf]
        %v1775 = vld [vmem:[#allocation12 + $0x6c] sm:$0xf]
        %v1776 = vld [vmem:[#allocation12 + $0x70] sm:$0xf]
        %v1777 = vld [vmem:[#allocation12 + $0x74] sm:$0xf]
        %v1778 = vld [vmem:[#allocation12 + $0x78] sm:$0xf]
        %v1779 = vld [vmem:[#allocation12 + $0x7c] sm:$0xf]
        %v1780 = vld [vmem:[%s13] sm:$0x1]
        %v1782 = vlaneseq
        %v1783 = vshrl.u32 %v1782, 7
        %v1784 = vsub.s32 0, %v1783
        %v1785 = vrot.slane %v1780, %v1784
        %v1819 = vunpack.c.l.b16 %v1748
        %v1820 = vunpack.c.l.b16 %v1749
        %v1821 = vunpack.c.l.b16 %v1750
        %v1822 = vunpack.c.l.b16 %v1751
        %v1823 = vunpack.c.l.b16 %v1752
        %v1824 = vunpack.c.l.b16 %v1753
        %v1825 = vunpack.c.l.b16 %v1754
        %v1826 = vunpack.c.l.b16 %v1755
        %v1827 = vunpack.c.l.b16 %v1756
        %v1828 = vunpack.c.l.b16 %v1757
        %v1829 = vunpack.c.l.b16 %v1758
        %v1830 = vunpack.c.l.b16 %v1759
        %v1831 = vunpack.c.l.b16 %v1760
        %v1832 = vunpack.c.l.b16 %v1761
        %v1833 = vunpack.c.l.b16 %v1762
        %v1834 = vunpack.c.l.b16 %v1763
        %v1835 = vunpack.c.l.b16 %v1764
        %v1836 = vunpack.c.l.b16 %v1765
        %v1837 = vunpack.c.l.b16 %v1766
        %v1838 = vunpack.c.l.b16 %v1767
        %v1839 = vunpack.c.l.b16 %v1768
        %v1840 = vunpack.c.l.b16 %v1769
        %v1841 = vunpack.c.l.b16 %v1770
        %v1842 = vunpack.c.l.b16 %v1771
        %v1843 = vunpack.c.l.b16 %v1772
        %v1844 = vunpack.c.l.b16 %v1773
        %v1845 = vunpack.c.l.b16 %v1774
        %v1846 = vunpack.c.l.b16 %v1775
        %v1847 = vunpack.c.l.b16 %v1776
        %v1848 = vunpack.c.l.b16 %v1777
        %v1849 = vunpack.c.l.b16 %v1778
        %v1850 = vunpack.c.l.b16 %v1779
        %v1851 = vpack.c.b16 %v1820, %v1819
        %v1852 = vpack.c.b16 %v1822, %v1821
        %v1853 = vpack.c.b16 %v1824, %v1823
        %v1854 = vpack.c.b16 %v1826, %v1825
        %v1855 = vpack.c.b16 %v1828, %v1827
        %v1856 = vpack.c.b16 %v1830, %v1829
        %v1857 = vpack.c.b16 %v1832, %v1831
        %v1858 = vpack.c.b16 %v1834, %v1833
        %v1859 = vpack.c.b16 %v1836, %v1835
        %v1860 = vpack.c.b16 %v1838, %v1837
        %v1861 = vpack.c.b16 %v1840, %v1839
        %v1862 = vpack.c.b16 %v1842, %v1841
        %v1863 = vpack.c.b16 %v1844, %v1843
        %v1864 = vpack.c.b16 %v1846, %v1845
        %v1865 = vpack.c.b16 %v1848, %v1847
        %v1866 = vpack.c.b16 %v1850, %v1849
        %1883 = vmatprep.subr.bf16.mxu0 0
        %1884 = vmatpush1.bf16.msra.mxu0 %v1851
        %1885 = vmatprep.subr.bf16.mxu0 0
        %1886 = vmatpush1.bf16.msra.mxu0 %v1852
        %1887 = vmatprep.subr.bf16.mxu0 0
        %1888 = vmatpush1.bf16.msra.mxu0 %v1853
        %1889 = vmatprep.subr.bf16.mxu0 0
        %1890 = vmatpush1.bf16.msra.mxu0 %v1854
        %1891 = vmatprep.subr.bf16.mxu0 0
        %1892 = vmatpush1.bf16.msra.mxu0 %v1855
        %1893 = vmatprep.subr.bf16.mxu0 0
        %1894 = vmatpush1.bf16.msra.mxu0 %v1856
        %1895 = vmatprep.subr.bf16.mxu0 0
        %1896 = vmatpush1.bf16.msra.mxu0 %v1857
        %1897 = vmatprep.subr.bf16.mxu0 0
        %1898 = vmatpush1.bf16.msra.mxu0 %v1858
        %1899 = vmatprep.subr.bf16.mxu0 0
        %1900 = vmatpush1.bf16.msra.mxu0 %v1859
        %1901 = vmatprep.subr.bf16.mxu0 0
        %1902 = vmatpush1.bf16.msra.mxu0 %v1860
        %1903 = vmatprep.subr.bf16.mxu0 0
        %1904 = vmatpush1.bf16.msra.mxu0 %v1861
        %1905 = vmatprep.subr.bf16.mxu0 0
        %1906 = vmatpush1.bf16.msra.mxu0 %v1862
        %1907 = vmatprep.subr.bf16.mxu0 0
        %1908 = vmatpush1.bf16.msra.mxu0 %v1863
        %1909 = vmatprep.subr.bf16.mxu0 0
        %1910 = vmatpush1.bf16.msra.mxu0 %v1864
        %1911 = vmatprep.subr.bf16.mxu0 0
        %1912 = vmatpush1.bf16.msra.mxu0 %v1865
        %1913 = vmatprep.subr.bf16.mxu0 0
        %1914 = vmatpush1.bf16.msra.mxu0 %v1866
        %1915 = vmatprep.mubr.bf16.mxu0 %v1747
        %1916 = vmatmul.mubr.bf16.gmra.mrb[0].mxu0 %v1746
        %v1917 = vpop.f32.mrb[0].mxu0
        %v1918 = vadd.f32 %v1785, %v1917
        %v1919 = vpop.f32.mrb[0].mxu0
        %v1920 = vpop.f32.mrb[0].mxu0
        %v1921 = vadd.f32 %v1785, %v1920
        %v1922 = vpop.f32.mrb[0].mxu0
        %1923 = vdwg.mxu0
        %v1924 = vadd.f32 %v1534, %v1918
        %v1925 = vadd.f32 %v1535, %v1921
        %1926 = vst [vmem:[%s583] sm:$0xff] %v1924
        %1927 = vst [vmem:[%s583 + $0x8] sm:$0xff] %v1925
        %s1928 = sand.u32 %s348, 1
        %s1929 = scalar_lea.sflag [#allocation5], %s1928
        %s1930 = sand.u32 %s348, 1
        %s1931 = smul.addr %s1930, 16
        %s1932 = scalar_lea.vmem [#allocation14], %s1931
        // Predicated region
        $region101: #{tpu_custom_call.1} parent=75 // pred_check
          %p1933 = pneg %p358
        $region102: #{tpu_custom_call.1} parent=75 // pred_check_branch
          %1935 = sbr.rel (%p1933) target = $region104
        $region103: #{tpu_custom_call.1} parent=75 // pred_region
          %s1937 = ssub.s32 256, 256
          %1938 = vsyncadd %s1929, %s1937
          %s1939 = smul.addr %s36, 2
          %s1940 = smul.addr %s1939, 128
          %s1941 = scalar_lea.hbm %s14, %s1940
          %s1942 = sshll.u32 %s1932, 4
          %s1943 = int_to_ptr.vmem [resolvable:$true] %s1942
          %1948 = dma.vmem_to_hbm [thread:$0]  %s1943, 256, %s1941, %s1929, 128, 128, 8
        $region104: #{tpu_custom_call.1} parent=75 // pred_fallthru
          _
      $region76: #{tpu_custom_call.1} parent=5 // pred_fallthru
        _
      %p1949 = scmp.le.s32.totalorder 2, %s31
      // Predicated region
      $region105: #{tpu_custom_call.1} parent=5 // pred_check
        %p1950 = pneg %p1949
      $region106: #{tpu_custom_call.1} parent=5 // pred_check_branch
        %1952 = sbr.rel (%p1950) target = $region108
      $region107: #{tpu_custom_call.1} parent=5 // pred_region
        %s1953 = ssub.s32 %s31, 2
        // Predicated region
        $region109: #{tpu_custom_call.1} parent=107 // pred_check
          %p1954 = pneg %p364
        $region110: #{tpu_custom_call.1} parent=107 // pred_check_branch
          %1956 = sbr.rel (%p1954) target = $region112
        $region111: #{tpu_custom_call.1} parent=107 // pred_region
          %s1957 = sand.u32 %s349, 1
          %s1958 = scalar_lea.sflag [#allocation5], %s1957
          %s1959 = sand.u32 %s349, 1
          %s1960 = smul.addr %s1959, 16
          %s1961 = scalar_lea.vmem [#allocation14], %s1960
          %1962 = dma.done %s1958, 256
        $region112: #{tpu_custom_call.1} parent=107 // pred_fallthru
          _
      $region108: #{tpu_custom_call.1} parent=5 // pred_fallthru
        _
    $region6: #{tpu_custom_call.1} parent=1 // loop_footer
      %s35 = sadd.s32 1, %s31
    $region7: #{tpu_custom_call.1} parent=1 // loop_footer_branch
      %30 = sbr.rel target = $region3
    $region8: #{tpu_custom_call.1} parent=1 // loop_exit
      _
    %1963 = vsyncpa [#allocation4], 1
    %s1964 = scalar_lea.sflag [#allocation4], 1
    %1965 = vsyncpa %s1964, 1
    %1966 = vsyncpa [#allocation7], 1
    %s1967 = scalar_lea.sflag [#allocation7], 1
    %1968 = vsyncpa %s1967, 1
    %1969 = vsyncpa [#allocation10], 1
    %1970 = vsyncpa [#allocation13], 1
    %1971 = vsyncpa [#allocation5], 1
    %s1972 = scalar_lea.sflag [#allocation5], 1
    %1973 = vsyncpa %s1972, 1

// kernel: tpu_custom_call.1
$region0: #{tpu_custom_call.1}
  #allocation0 [shape = 'u32[]', space=smem, size = 0x4, offset = 0x4, fixed_abs, tag = 'smem constant byte address 0x4 - core index']
  #allocation1 [shape = 'u32[144,128]{1,0:T(1,128)}', space=vmem, size = 0x12000, scoped, tag = 'internal scratch']
  #allocation2 [shape = 'bf16[16,128]{1,0:T(16,128)(2,1)}', space=vmem, size = 0x1000, scoped, tag = 'scratch operand']
  %s0 = inlined_call_operand.hbm [shape: f32[2,16,128], index: 0, kind: input, shape index: {}]
  %s1 = inlined_call_operand.hbm [shape: f32[2,16,16], index: 1, kind: input, shape index: {}]
  %s2 = inlined_call_operand.vmem [shape: f32[1,128], index: 2, kind: input, shape index: {}]
  %s3 = inlined_call_operand.vmem [shape: f32[1,128], index: 3, kind: input, shape index: {}]
  %s4 = inlined_call_operand.hbm [shape: bf16[128,384], index: 4, kind: input, shape index: {}]
  %s5 = inlined_call_operand.vmem [shape: f32[1,384], index: 5, kind: input, shape index: {}]
  %s6 = inlined_call_operand.hbm [shape: bf16[128,128], index: 6, kind: input, shape index: {}]
  %s7 = inlined_call_operand.vmem [shape: f32[1,128], index: 7, kind: input, shape index: {}]
  %s8 = inlined_call_operand.vmem [shape: f32[1,128], index: 8, kind: input, shape index: {}]
  %s9 = inlined_call_operand.vmem [shape: f32[1,128], index: 9, kind: input, shape index: {}]
  %s10 = inlined_call_operand.hbm [shape: bf16[128,256], index: 10, kind: input, shape index: {}]
  %s11 = inlined_call_operand.vmem [shape: f32[1,256], index: 11, kind: input, shape index: {}]
  %s12 = inlined_call_operand.hbm [shape: bf16[256,128], index: 12, kind: input, shape index: {}]
  %s13 = inlined_call_operand.vmem [shape: f32[1,128], index: 13, kind: input, shape index: {}]
  %s14 = inlined_call_operand.hbm [shape: f32[2,16,128], index: 14, kind: output, shape index: {}]
  %s15 = sld [smem:[#allocation0]]
  $region113: #{tpu_custom_call.1} parent=0
    _
  %s17 = ssub.s32 1, %s15
  %s18 = scalar_select 0, %s17, %s15
  $region1: #{tpu_custom_call.1} parent=0
    #allocation3 [shape = 'u8[16384]{0}', space=vmem, size = 0x4000, scoped, tag = 'input window, operand 0']
    #allocation4 [shape = 's32[2]{0}', space=sflag, size = 0x8, scoped, tag = 'scoped memory for tpu_custom_call.1']
    #allocation5 [shape = 's32[2]{0}', space=sflag, size = 0x8, scoped, tag = 'scoped memory for tpu_custom_call.1']
    #allocation6 [shape = 'u8[16384]{0}', space=vmem, size = 0x4000, scoped, tag = 'input window, operand 1']
    #allocation7 [shape = 's32[2]{0}', space=sflag, size = 0x8, scoped, tag = 'scoped memory for tpu_custom_call.1']
    #allocation8 [shape = 'u8[98304]{0}', space=vmem, size = 0x18000, scoped, tag = 'input window, operand 4, single buffered']
    #allocation9 [shape = 'u8[32768]{0}', space=vmem, size = 0x8000, scoped, tag = 'input window, operand 6, single buffered']
    #allocation10 [shape = 's32[1]{0}', space=sflag, size = 0x4, scoped, tag = 'scoped memory for tpu_custom_call.1']
    #allocation11 [shape = 'u8[65536]{0}', space=vmem, size = 0x10000, scoped, tag = 'input window, operand 10, single buffered']
    #allocation12 [shape = 'u8[65536]{0}', space=vmem, size = 0x10000, scoped, tag = 'input window, operand 12, single buffered']
    #allocation13 [shape = 's32[1]{0}', space=sflag, size = 0x4, scoped, tag = 'scoped memory for tpu_custom_call.1']
    #allocation14 [shape = 'u8[16384]{0}', space=vmem, size = 0x4000, scoped, tag = 'output window, operand 0']
    %19 = vsyncpa [#allocation4], 0
    %s20 = scalar_lea.sflag [#allocation4], 1
    %21 = vsyncpa %s20, 0
    %22 = vsyncpa [#allocation7], 0
    %s23 = scalar_lea.sflag [#allocation7], 1
    %24 = vsyncpa %s23, 0
    %25 = vsyncpa [#allocation10], 0
    %26 = vsyncpa [#allocation13], 0
    %27 = vsyncpa [#allocation5], 0
    %s28 = scalar_lea.sflag [#allocation5], 1
    %29 = vsyncpa %s28, 0
    loop: start=0, step=1, limit=4
    $region2: #{tpu_custom_call.1} parent=1 // loop_pre_header
      _
    $region3: #{tpu_custom_call.1} parent=1 // loop_header
      %s31 = sphi 0, %s35
      %p32 = scmp.ge.s32.totalorder %s31, 4
      %s41 = sphi 0, %s43
      %s44 = sphi 0, %s41
      %s45 = sphi 0, %s44
      %s61 = sphi 0, %s45
      %s67 = sphi 0, %s69
      %s70 = sphi 0, %s67
      %s71 = sphi 0, %s70
      %s87 = sphi 0, %s71
      %s91 = sphi 0, %s91
      %s93 = sphi 0, %s91
      %s94 = sphi 0, %s93
      %s108 = sphi 0, %s94
      %s112 = sphi 0, %s112
      %s114 = sphi 0, %s112
      %s115 = sphi 0, %s114
      %s129 = sphi 0, %s115
      %s133 = sphi 0, %s133
      %s135 = sphi 0, %s133
      %s136 = sphi 0, %s135
      %s150 = sphi 0, %s136
      %s154 = sphi 0, %s154
      %s156 = sphi 0, %s154
      %s157 = sphi 0, %s156
      %s171 = sphi 0, %s157
      %s175 = sphi 0, %s175
      %s177 = sphi 0, %s175
      %s178 = sphi 0, %s177
      %s192 = sphi 0, %s178
      %s196 = sphi 0, %s196
      %s198 = sphi 0, %s196
      %s199 = sphi 0, %s198
      %s213 = sphi 0, %s199
      %s217 = sphi 0, %s217
      %s219 = sphi 0, %s217
      %s220 = sphi 0, %s219
      %s234 = sphi 0, %s220
      %s238 = sphi 0, %s238
      %s240 = sphi 0, %s238
      %s241 = sphi 0, %s240
      %s255 = sphi 0, %s241
      %s259 = sphi 0, %s259
      %s261 = sphi 0, %s259
      %s262 = sphi 0, %s261
      %s276 = sphi 0, %s262
      %s280 = sphi 0, %s280
      %s282 = sphi 0, %s280
      %s283 = sphi 0, %s282
      %s297 = sphi 0, %s283
      %s301 = sphi 0, %s301
      %s303 = sphi 0, %s301
      %s304 = sphi 0, %s303
      %s318 = sphi 0, %s304
      %s322 = sphi 0, %s322
      %s324 = sphi 0, %s322
      %s325 = sphi 0, %s324
      %s339 = sphi 0, %s325
      %s345 = sphi 0, %s347
      %s348 = sphi 0, %s345
      %s349 = sphi 0, %s348
      %s365 = sphi 0, %s349
    $region4: #{tpu_custom_call.1} parent=1 // loop_header_branch
      %34 = sbr.rel (%p32) target = $region8
    $region5: #{tpu_custom_call.1} parent=1 // loop_body
      %s36 = ssub.s32 %s31, 1
      %s37 = ssub.s32 %s31, 2
      %s38 = sadd.s32 %s31, 1
      %s39 = ssub.s32 %s31, %s38
      %p40 = scmp.eq.s32.totalorder %s39, 0
      %s42 = sadd.s32 %s41, 1
      %s43 = scalar_select %p40, %s41, %s42
      %p46 = pneg %p40
      %p47 = scmp.eq.s32.totalorder %s31, 1
      %p48 = por %p46, %p47
      %p49 = scmp.ne.s32.totalorder %s41, %s44
      %p50 = scmp.eq.s32.totalorder %s31, 0
      %p51 = por %p49, %p50
      %p52 = scmp.ne.s32.totalorder %s41, %s44
      %p53 = scmp.eq.s32.totalorder %s36, 1
      %p54 = por %p52, %p53
      %p55 = scmp.ne.s32.totalorder %s44, %s45
      %p56 = scmp.eq.s32.totalorder %s36, 0
      %p57 = por %p55, %p56
      %p58 = scmp.ne.s32.totalorder %s44, %s45
      %p59 = scmp.eq.s32.totalorder %s37, 1
      %p60 = por %p58, %p59
      %p62 = scmp.ne.s32.totalorder %s45, %s61
      %p63 = scmp.eq.s32.totalorder %s37, 0
      %p64 = por %p62, %p63
      %s65 = ssub.s32 %s31, %s38
      %p66 = scmp.eq.s32.totalorder %s65, 0
      %s68 = sadd.s32 %s67, 1
      %s69 = scalar_select %p66, %s67, %s68
      %p72 = pneg %p66
      %p73 = scmp.eq.s32.totalorder %s31, 1
      %p74 = por %p72, %p73
      %p75 = scmp.ne.s32.totalorder %s67, %s70
      %p76 = scmp.eq.s32.totalorder %s31, 0
      %p77 = por %p75, %p76
      %p78 = scmp.ne.s32.totalorder %s67, %s70
      %p79 = scmp.eq.s32.totalorder %s36, 1
      %p80 = por %p78, %p79
      %p81 = scmp.ne.s32.totalorder %s70, %s71
      %p82 = scmp.eq.s32.totalorder %s36, 0
      %p83 = por %p81, %p82
      %p84 = scmp.ne.s32.totalorder %s70, %s71
      %p85 = scmp.eq.s32.totalorder %s37, 1
      %p86 = por %p84, %p85
      %p88 = scmp.ne.s32.totalorder %s71, %s87
      %p89 = scmp.eq.s32.totalorder %s37, 0
      %p90 = por %p88, %p89
      %s92 = sadd.s32 %s91, 1
      %p95 = scmp.eq.s32.totalorder %s31, 1
      %p96 = scmp.ne.s32.totalorder %s91, %s93
      %p97 = scmp.eq.s32.totalorder %s31, 0
      %p98 = por %p96, %p97
      %p99 = scmp.ne.s32.totalorder %s91, %s93
      %p100 = scmp.eq.s32.totalorder %s36, 1
      %p101 = por %p99, %p100
      %p102 = scmp.ne.s32.totalorder %s93, %s94
      %p103 = scmp.eq.s32.totalorder %s36, 0
      %p104 = por %p102, %p103
      %p105 = scmp.ne.s32.totalorder %s93, %s94
      %p106 = scmp.eq.s32.totalorder %s37, 1
      %p107 = por %p105, %p106
      %p109 = scmp.ne.s32.totalorder %s94, %s108
      %p110 = scmp.eq.s32.totalorder %s37, 0
      %p111 = por %p109, %p110
      %s113 = sadd.s32 %s112, 1
      %p116 = scmp.eq.s32.totalorder %s31, 1
      %p117 = scmp.ne.s32.totalorder %s112, %s114
      %p118 = scmp.eq.s32.totalorder %s31, 0
      %p119 = por %p117, %p118
      %p120 = scmp.ne.s32.totalorder %s112, %s114
      %p121 = scmp.eq.s32.totalorder %s36, 1
      %p122 = por %p120, %p121
      %p123 = scmp.ne.s32.totalorder %s114, %s115
      %p124 = scmp.eq.s32.totalorder %s36, 0
      %p125 = por %p123, %p124
      %p126 = scmp.ne.s32.totalorder %s114, %s115
      %p127 = scmp.eq.s32.totalorder %s37, 1
      %p128 = por %p126, %p127
      %p130 = scmp.ne.s32.totalorder %s115, %s129
      %p131 = scmp.eq.s32.totalorder %s37, 0
      %p132 = por %p130, %p131
      %s134 = sadd.s32 %s133, 1
      %p137 = scmp.eq.s32.totalorder %s31, 1
      %p138 = scmp.ne.s32.totalorder %s133, %s135
      %p139 = scmp.eq.s32.totalorder %s31, 0
      %p140 = por %p138, %p139
      %p141 = scmp.ne.s32.totalorder %s133, %s135
      %p142 = scmp.eq.s32.totalorder %s36, 1
      %p143 = por %p141, %p142
      %p144 = scmp.ne.s32.totalorder %s135, %s136
      %p145 = scmp.eq.s32.totalorder %s36, 0
      %p146 = por %p144, %p145
      %p147 = scmp.ne.s32.totalorder %s135, %s136
      %p148 = scmp.eq.s32.totalorder %s37, 1
      %p149 = por %p147, %p148
      %p151 = scmp.ne.s32.totalorder %s136, %s150
      %p152 = scmp.eq.s32.totalorder %s37, 0
      %p153 = por %p151, %p152
      %s155 = sadd.s32 %s154, 1
      %p158 = scmp.eq.s32.totalorder %s31, 1
      %p159 = scmp.ne.s32.totalorder %s154, %s156
      %p160 = scmp.eq.s32.totalorder %s31, 0
      %p161 = por %p159, %p160
      %p162 = scmp.ne.s32.totalorder %s154, %s156
      %p163 = scmp.eq.s32.totalorder %s36, 1
      %p164 = por %p162, %p163
      %p165 = scmp.ne.s32.totalorder %s156, %s157
      %p166 = scmp.eq.s32.totalorder %s36, 0
      %p167 = por %p165, %p166
      %p168 = scmp.ne.s32.totalorder %s156, %s157
      %p169 = scmp.eq.s32.totalorder %s37, 1
      %p170 = por %p168, %p169
      %p172 = scmp.ne.s32.totalorder %s157, %s171
      %p173 = scmp.eq.s32.totalorder %s37, 0
      %p174 = por %p172, %p173
      %s176 = sadd.s32 %s175, 1
      %p179 = scmp.eq.s32.totalorder %s31, 1
      %p180 = scmp.ne.s32.totalorder %s175, %s177
      %p181 = scmp.eq.s32.totalorder %s31, 0
      %p182 = por %p180, %p181
      %p183 = scmp.ne.s32.totalorder %s175, %s177
      %p184 = scmp.eq.s32.totalorder %s36, 1
      %p185 = por %p183, %p184
      %p186 = scmp.ne.s32.totalorder %s177, %s178
      %p187 = scmp.eq.s32.totalorder %s36, 0
      %p188 = por %p186, %p187
      %p189 = scmp.ne.s32.totalorder %s177, %s178
      %p190 = scmp.eq.s32.totalorder %s37, 1
      %p191 = por %p189, %p190
      %p193 = scmp.ne.s32.totalorder %s178, %s192
      %p194 = scmp.eq.s32.totalorder %s37, 0
      %p195 = por %p193, %p194
      %s197 = sadd.s32 %s196, 1
      %p200 = scmp.eq.s32.totalorder %s31, 1
      %p201 = scmp.ne.s32.totalorder %s196, %s198
      %p202 = scmp.eq.s32.totalorder %s31, 0
      %p203 = por %p201, %p202
      %p204 = scmp.ne.s32.totalorder %s196, %s198
      %p205 = scmp.eq.s32.totalorder %s36, 1
      %p206 = por %p204, %p205
      %p207 = scmp.ne.s32.totalorder %s198, %s199
      %p208 = scmp.eq.s32.totalorder %s36, 0
      %p209 = por %p207, %p208
      %p210 = scmp.ne.s32.totalorder %s198, %s199
      %p211 = scmp.eq.s32.totalorder %s37, 1
      %p212 = por %p210, %p211
      %p214 = scmp.ne.s32.totalorder %s199, %s213
      %p215 = scmp.eq.s32.totalorder %s37, 0
      %p216 = por %p214, %p215
      %s218 = sadd.s32 %s217, 1
      %p221 = scmp.eq.s32.totalorder %s31, 1
      %p222 = scmp.ne.s32.totalorder %s217, %s219
      %p223 = scmp.eq.s32.totalorder %s31, 0
      %p224 = por %p222, %p223
      %p225 = scmp.ne.s32.totalorder %s217, %s219
      %p226 = scmp.eq.s32.totalorder %s36, 1
      %p227 = por %p225, %p226
      %p228 = scmp.ne.s32.totalorder %s219, %s220
      %p229 = scmp.eq.s32.totalorder %s36, 0
      %p230 = por %p228, %p229
      %p231 = scmp.ne.s32.totalorder %s219, %s220
      %p232 = scmp.eq.s32.totalorder %s37, 1
      %p233 = por %p231, %p232
      %p235 = scmp.ne.s32.totalorder %s220, %s234
      %p236 = scmp.eq.s32.totalorder %s37, 0
      %p237 = por %p235, %p236
      %s239 = sadd.s32 %s238, 1
      %p242 = scmp.eq.s32.totalorder %s31, 1
      %p243 = scmp.ne.s32.totalorder %s238, %s240
      %p244 = scmp.eq.s32.totalorder %s31, 0
      %p245 = por %p243, %p244
      %p246 = scmp.ne.s32.totalorder %s238, %s240
      %p247 = scmp.eq.s32.totalorder %s36, 1
      %p248 = por %p246, %p247
      %p249 = scmp.ne.s32.totalorder %s240, %s241
      %p250 = scmp.eq.s32.totalorder %s36, 0
      %p251 = por %p249, %p250
      %p252 = scmp.ne.s32.totalorder %s240, %s241
      %p253 = scmp.eq.s32.totalorder %s37, 1
      %p254 = por %p252, %p253
      %p256 = scmp.ne.s32.totalorder %s241, %s255
      %p257 = scmp.eq.s32.totalorder %s37, 0
      %p258 = por %p256, %p257
      %s260 = sadd.s32 %s259, 1
      %p263 = scmp.eq.s32.totalorder %s31, 1
      %p264 = scmp.ne.s32.totalorder %s259, %s261
      %p265 = scmp.eq.s32.totalorder %s31, 0
      %p266 = por %p264, %p265
      %p267 = scmp.ne.s32.totalorder %s259, %s261
      %p268 = scmp.eq.s32.totalorder %s36, 1
      %p269 = por %p267, %p268
      %p270 = scmp.ne.s32.totalorder %s261, %s262
      %p271 = scmp.eq.s32.totalorder %s36, 0
      %p272 = por %p270, %p271
      %p273 = scmp.ne.s32.totalorder %s261, %s262
      %p274 = scmp.eq.s32.totalorder %s37, 1
      %p275 = por %p273, %p274
      %p277 = scmp.ne.s32.totalorder %s262, %s276
      %p278 = scmp.eq.s32.totalorder %s37, 0
      %p279 = por %p277, %p278
      %s281 = sadd.s32 %s280, 1
      %p284 = scmp.eq.s32.totalorder %s31, 1
      %p285 = scmp.ne.s32.totalorder %s280, %s282
      %p286 = scmp.eq.s32.totalorder %s31, 0
      %p287 = por %p285, %p286
      %p288 = scmp.ne.s32.totalorder %s280, %s282
      %p289 = scmp.eq.s32.totalorder %s36, 1
      %p290 = por %p288, %p289
      %p291 = scmp.ne.s32.totalorder %s282, %s283
      %p292 = scmp.eq.s32.totalorder %s36, 0
      %p293 = por %p291, %p292
      %p294 = scmp.ne.s32.totalorder %s282, %s283
      %p295 = scmp.eq.s32.totalorder %s37, 1
      %p296 = por %p294, %p295
      %p298 = scmp.ne.s32.totalorder %s283, %s297
      %p299 = scmp.eq.s32.totalorder %s37, 0
      %p300 = por %p298, %p299
      %s302 = sadd.s32 %s301, 1
      %p305 = scmp.eq.s32.totalorder %s31, 1
      %p306 = scmp.ne.s32.totalorder %s301, %s303
      %p307 = scmp.eq.s32.totalorder %s31, 0
      %p308 = por %p306, %p307
      %p309 = scmp.ne.s32.totalorder %s301, %s303
      %p310 = scmp.eq.s32.totalorder %s36, 1
      %p311 = por %p309, %p310
      %p312 = scmp.ne.s32.totalorder %s303, %s304
      %p313 = scmp.eq.s32.totalorder %s36, 0
      %p314 = por %p312, %p313
      %p315 = scmp.ne.s32.totalorder %s303, %s304
      %p316 = scmp.eq.s32.totalorder %s37, 1
      %p317 = por %p315, %p316
      %p319 = scmp.ne.s32.totalorder %s304, %s318
      %p320 = scmp.eq.s32.totalorder %s37, 0
      %p321 = por %p319, %p320
      %s323 = sadd.s32 %s322, 1
      %p326 = scmp.eq.s32.totalorder %s31, 1
      %p327 = scmp.ne.s32.totalorder %s322, %s324
      %p328 = scmp.eq.s32.totalorder %s31, 0
      %p329 = por %p327, %p328
      %p330 = scmp.ne.s32.totalorder %s322, %s324
      %p331 = scmp.eq.s32.totalorder %s36, 1
      %p332 = por %p330, %p331
      %p333 = scmp.ne.s32.totalorder %s324, %s325
      %p334 = scmp.eq.s32.totalorder %s36, 0
      %p335 = por %p333, %p334
      %p336 = scmp.ne.s32.totalorder %s324, %s325
      %p337 = scmp.eq.s32.totalorder %s37, 1
      %p338 = por %p336, %p337
      %p340 = scmp.ne.s32.totalorder %s325, %s339
      %p341 = scmp.eq.s32.totalorder %s37, 0
      %p342 = por %p340, %p341
      %s343 = ssub.s32 %s31, %s38
      %p344 = scmp.eq.s32.totalorder %s343, 0
      %s346 = sadd.s32 %s345, 1
      %s347 = scalar_select %p344, %s345, %s346
      %p350 = pneg %p344
      %p351 = scmp.eq.s32.totalorder %s31, 1
      %p352 = por %p350, %p351
      %p353 = scmp.ne.s32.totalorder %s345, %s348
      %p354 = scmp.eq.s32.totalorder %s31, 0
      %p355 = por %p353, %p354
      %p356 = scmp.ne.s32.totalorder %s345, %s348
      %p357 = scmp.eq.s32.totalorder %s36, 1
      %p358 = por %p356, %p357
      %p359 = scmp.ne.s32.totalorder %s348, %s349
      %p360 = scmp.eq.s32.totalorder %s36, 0
      %p361 = por %p359, %p360
      %p362 = scmp.ne.s32.totalorder %s348, %s349
      %p363 = scmp.eq.s32.totalorder %s37, 1
      %p364 = por %p362, %p363
      %p366 = scmp.ne.s32.totalorder %s349, %s365
      %p367 = scmp.eq.s32.totalorder %s37, 0
      %p368 = por %p366, %p367
      %p369 = scmp.le.s32.totalorder 1, %s31
      %p370 = scmp.lt.s32.totalorder %s31, 3
      %p371 = pnand %p369, %p370
      %p372 = pneg %p371
      // Predicated region
      $region9: #{tpu_custom_call.1} parent=5 // pred_check
        _
      $region10: #{tpu_custom_call.1} parent=5 // pred_check_branch
        %374 = sbr.rel (%p371) target = $region12
      $region11: #{tpu_custom_call.1} parent=5 // pred_region
        %s375 = ssub.s32 %s31, 1
        // Predicated region
        $region13: #{tpu_custom_call.1} parent=11 // pred_check
          %p376 = pneg %p104
        $region14: #{tpu_custom_call.1} parent=11 // pred_check_branch
          %378 = sbr.rel (%p376) target = $region16
        $region15: #{tpu_custom_call.1} parent=11 // pred_region
          _
        $region16: #{tpu_custom_call.1} parent=11 // pred_fallthru
          _
        // Predicated region
        $region17: #{tpu_custom_call.1} parent=11 // pred_check
          %p379 = pneg %p125
        $region18: #{tpu_custom_call.1} parent=11 // pred_check_branch
          %381 = sbr.rel (%p379) target = $region20
        $region19: #{tpu_custom_call.1} parent=11 // pred_region
          _
        $region20: #{tpu_custom_call.1} parent=11 // pred_fallthru
          _
        // Predicated region
        $region21: #{tpu_custom_call.1} parent=11 // pred_check
          %p382 = pneg %p146
        $region22: #{tpu_custom_call.1} parent=11 // pred_check_branch
          %384 = sbr.rel (%p382) target = $region24
        $region23: #{tpu_custom_call.1} parent=11 // pred_region
          %s386 = ssub.s32 3072, 3072
          %387 = vsyncadd [#allocation7], %s386
          %s388 = sshll.u32 [#allocation8], 4
          %s389 = int_to_ptr.vmem [resolvable:$true] %s388
          %394 = dma.hbm_to_vmem [thread:$0]  %s4, 3072, %s389, [#allocation7], 192, 192, 12
        $region24: #{tpu_custom_call.1} parent=11 // pred_fallthru
          _
        // Predicated region
        $region25: #{tpu_custom_call.1} parent=11 // pred_check
          %p395 = pneg %p167
        $region26: #{tpu_custom_call.1} parent=11 // pred_check_branch
          %397 = sbr.rel (%p395) target = $region28
        $region27: #{tpu_custom_call.1} parent=11 // pred_region
          _
        $region28: #{tpu_custom_call.1} parent=11 // pred_fallthru
          _
        // Predicated region
        $region29: #{tpu_custom_call.1} parent=11 // pred_check
          %p398 = pneg %p188
        $region30: #{tpu_custom_call.1} parent=11 // pred_check_branch
          %400 = sbr.rel (%p398) target = $region32
        $region31: #{tpu_custom_call.1} parent=11 // pred_region
          %s402 = ssub.s32 1024, 1024
          %403 = vsyncadd [#allocation10], %s402
          %s404 = sshll.u32 [#allocation9], 4
          %s405 = int_to_ptr.vmem [resolvable:$true] %s404
          %410 = dma.hbm_to_vmem [thread:$0]  %s6, 1024, %s405, [#allocation10], 64, 64, 4
        $region32: #{tpu_custom_call.1} parent=11 // pred_fallthru
          _
        // Predicated region
        $region33: #{tpu_custom_call.1} parent=11 // pred_check
          %p411 = pneg %p209
        $region34: #{tpu_custom_call.1} parent=11 // pred_check_branch
          %413 = sbr.rel (%p411) target = $region36
        $region35: #{tpu_custom_call.1} parent=11 // pred_region
          _
        $region36: #{tpu_custom_call.1} parent=11 // pred_fallthru
          _
        // Predicated region
        $region37: #{tpu_custom_call.1} parent=11 // pred_check
          %p414 = pneg %p230
        $region38: #{tpu_custom_call.1} parent=11 // pred_check_branch
          %416 = sbr.rel (%p414) target = $region40
        $region39: #{tpu_custom_call.1} parent=11 // pred_region
          _
        $region40: #{tpu_custom_call.1} parent=11 // pred_fallthru
          _
        // Predicated region
        $region41: #{tpu_custom_call.1} parent=11 // pred_check
          %p417 = pneg %p251
        $region42: #{tpu_custom_call.1} parent=11 // pred_check_branch
          %419 = sbr.rel (%p417) target = $region44
        $region43: #{tpu_custom_call.1} parent=11 // pred_region
          _
        $region44: #{tpu_custom_call.1} parent=11 // pred_fallthru
          _
        // Predicated region
        $region45: #{tpu_custom_call.1} parent=11 // pred_check
          %p420 = pneg %p272
        $region46: #{tpu_custom_call.1} parent=11 // pred_check_branch
          %422 = sbr.rel (%p420) target = $region48
        $region47: #{tpu_custom_call.1} parent=11 // pred_region
          %s424 = ssub.s32 2048, 2048
          %425 = vsyncadd [#allocation10], %s424
          %s426 = sshll.u32 [#allocation11], 4
          %s427 = int_to_ptr.vmem [resolvable:$true] %s426
          %432 = dma.hbm_to_vmem [thread:$0]  %s10, 2048, %s427, [#allocation10], 128, 128, 8
        $region48: #{tpu_custom_call.1} parent=11 // pred_fallthru
          _
        // Predicated region
        $region49: #{tpu_custom_call.1} parent=11 // pred_check
          %p433 = pneg %p293
        $region50: #{tpu_custom_call.1} parent=11 // pred_check_branch
          %435 = sbr.rel (%p433) target = $region52
        $region51: #{tpu_custom_call.1} parent=11 // pred_region
          _
        $region52: #{tpu_custom_call.1} parent=11 // pred_fallthru
          _
        // Predicated region
        $region53: #{tpu_custom_call.1} parent=11 // pred_check
          %p436 = pneg %p314
        $region54: #{tpu_custom_call.1} parent=11 // pred_check_branch
          %438 = sbr.rel (%p436) target = $region56
        $region55: #{tpu_custom_call.1} parent=11 // pred_region
          %s440 = ssub.s32 2048, 2048
          %441 = vsyncadd [#allocation13], %s440
          %s442 = sshll.u32 [#allocation12], 4
          %s443 = int_to_ptr.vmem [resolvable:$true] %s442
          %448 = dma.hbm_to_vmem [thread:$0]  %s12, 2048, %s443, [#allocation13], 64, 64, 4
        $region56: #{tpu_custom_call.1} parent=11 // pred_fallthru
          _
        // Predicated region
        $region57: #{tpu_custom_call.1} parent=11 // pred_check
          %p449 = pneg %p335
        $region58: #{tpu_custom_call.1} parent=11 // pred_check_branch
          %451 = sbr.rel (%p449) target = $region60
        $region59: #{tpu_custom_call.1} parent=11 // pred_region
          _
        $region60: #{tpu_custom_call.1} parent=11 // pred_fallthru
          _
      $region12: #{tpu_custom_call.1} parent=5 // pred_fallthru
        _
      %p452 = scmp.lt.s32.totalorder %s31, 2
      // Predicated region
      $region61: #{tpu_custom_call.1} parent=5 // pred_check
        %p453 = pneg %p452
      $region62: #{tpu_custom_call.1} parent=5 // pred_check_branch
        %455 = sbr.rel (%p453) target = $region64
      $region63: #{tpu_custom_call.1} parent=5 // pred_region
        // Predicated region
        $region65: #{tpu_custom_call.1} parent=63 // pred_check
          %p456 = pneg %p51
        $region66: #{tpu_custom_call.1} parent=63 // pred_check_branch
          %458 = sbr.rel (%p456) target = $region68
        $region67: #{tpu_custom_call.1} parent=63 // pred_region
          %s459 = sand.u32 %s41, 1
          %s460 = scalar_lea.sflag [#allocation4], %s459
          %s461 = sand.u32 %s41, 1
          %s462 = smul.addr %s461, 16
          %s463 = scalar_lea.vmem [#allocation3], %s462
          %s465 = ssub.s32 256, 256
          %466 = vsyncadd %s460, %s465
          %s467 = smul.addr %s31, 2
          %s468 = smul.addr %s467, 128
          %s469 = scalar_lea.hbm %s0, %s468
          %s470 = sshll.u32 %s463, 4
          %s471 = int_to_ptr.vmem [resolvable:$true] %s470
          %476 = dma.hbm_to_vmem [thread:$0]  %s469, 256, %s471, %s460, 128, 128, 8
        $region68: #{tpu_custom_call.1} parent=63 // pred_fallthru
          _
        // Predicated region
        $region69: #{tpu_custom_call.1} parent=63 // pred_check
          %p477 = pneg %p77
        $region70: #{tpu_custom_call.1} parent=63 // pred_check_branch
          %479 = sbr.rel (%p477) target = $region72
        $region71: #{tpu_custom_call.1} parent=63 // pred_region
          %s480 = sand.u32 %s31, 1
          %s481 = scalar_lea.sflag [#allocation7], %s480
          %s482 = sand.u32 %s67, 1
          %s483 = smul.addr %s482, 16
          %s484 = scalar_lea.vmem [#allocation6], %s483
          %s486 = ssub.s32 256, 256
          %487 = vsyncadd %s481, %s486
          %s488 = smul.addr %s31, 2
          %s489 = smul.addr %s488, 128
          %s490 = scalar_lea.hbm %s1, %s489
          %s491 = sshll.u32 %s484, 4
          %s492 = int_to_ptr.vmem [resolvable:$true] %s491
          %497 = dma.hbm_to_vmem [thread:$0]  %s490, 256, %s492, %s481, 128, 128, 8
        $region72: #{tpu_custom_call.1} parent=63 // pred_fallthru
          _
      $region64: #{tpu_custom_call.1} parent=5 // pred_fallthru
        _
      %p498 = scmp.le.s32.totalorder 1, %s31
      %p499 = scmp.lt.s32.totalorder %s31, 3
      %p500 = pnand %p498, %p499
      %p501 = pneg %p500
      // Predicated region
      $region73: #{tpu_custom_call.1} parent=5 // pred_check
        _
      $region74: #{tpu_custom_call.1} parent=5 // pred_check_branch
        %503 = sbr.rel (%p500) target = $region76
      $region75: #{tpu_custom_call.1} parent=5 // pred_region
        %s504 = ssub.s32 %s31, 1
        %s505 = sand.u32 %s44, 1
        %s506 = scalar_lea.sflag [#allocation4], %s505
        %s507 = sand.u32 %s44, 1
        %s508 = smul.addr %s507, 16
        %s509 = scalar_lea.vmem [#allocation3], %s508
        // Predicated region
        $region77: #{tpu_custom_call.1} parent=75 // pred_check
          %p510 = pneg %p57
        $region78: #{tpu_custom_call.1} parent=75 // pred_check_branch
          %512 = sbr.rel (%p510) target = $region80
        $region79: #{tpu_custom_call.1} parent=75 // pred_region
          %513 = dma.done %s506, 256
        $region80: #{tpu_custom_call.1} parent=75 // pred_fallthru
          _
        %s514 = sand.u32 %s36, 1
        %s515 = scalar_lea.sflag [#allocation7], %s514
        %s516 = sand.u32 %s70, 1
        %s517 = smul.addr %s516, 16
        %s518 = scalar_lea.vmem [#allocation6], %s517
        // Predicated region
        $region81: #{tpu_custom_call.1} parent=75 // pred_check
          %p519 = pneg %p83
        $region82: #{tpu_custom_call.1} parent=75 // pred_check_branch
          %521 = sbr.rel (%p519) target = $region84
        $region83: #{tpu_custom_call.1} parent=75 // pred_region
          %522 = dma.done %s515, 256
        $region84: #{tpu_custom_call.1} parent=75 // pred_fallthru
          _
        // Predicated region
        $region85: #{tpu_custom_call.1} parent=75 // pred_check
          %p523 = pneg %p146
        $region86: #{tpu_custom_call.1} parent=75 // pred_check_branch
          %525 = sbr.rel (%p523) target = $region88
        $region87: #{tpu_custom_call.1} parent=75 // pred_region
          %526 = dma.done [#allocation7], 3072
        $region88: #{tpu_custom_call.1} parent=75 // pred_fallthru
          _
        // Predicated region
        $region89: #{tpu_custom_call.1} parent=75 // pred_check
          %p527 = pneg %p188
        $region90: #{tpu_custom_call.1} parent=75 // pred_check_branch
          %529 = sbr.rel (%p527) target = $region92
        $region91: #{tpu_custom_call.1} parent=75 // pred_region
          %530 = dma.done [#allocation10], 1024
        $region92: #{tpu_custom_call.1} parent=75 // pred_fallthru
          _
        // Predicated region
        $region93: #{tpu_custom_call.1} parent=75 // pred_check
          %p531 = pneg %p272
        $region94: #{tpu_custom_call.1} parent=75 // pred_check_branch
          %533 = sbr.rel (%p531) target = $region96
        $region95: #{tpu_custom_call.1} parent=75 // pred_region
          %534 = dma.done [#allocation10], 2048
        $region96: #{tpu_custom_call.1} parent=75 // pred_fallthru
          _
        // Predicated region
        $region97: #{tpu_custom_call.1} parent=75 // pred_check
          %p535 = pneg %p314
        $region98: #{tpu_custom_call.1} parent=75 // pred_check_branch
          %537 = sbr.rel (%p535) target = $region100
        $region99: #{tpu_custom_call.1} parent=75 // pred_region
          %538 = dma.done [#allocation13], 2048
        $region100: #{tpu_custom_call.1} parent=75 // pred_fallthru
          _
        %s539 = sand.u32 %s44, 1
        %s540 = scalar_lea.sflag [#allocation4], %s539
        %s541 = sand.u32 %s44, 1
        %s542 = smul.addr %s541, 16
        %s543 = scalar_lea.vmem [#allocation3], %s542
        %p544 = pneg %p57
        %p545 = pneg %p54
        %s546 = sand.u32 %s36, 1
        %s547 = scalar_lea.sflag [#allocation7], %s546
        %s548 = sand.u32 %s70, 1
        %s549 = smul.addr %s548, 16
        %s550 = scalar_lea.vmem [#allocation6], %s549
        %p551 = pneg %p83
        %p552 = pneg %p80
        %p553 = pneg %p104
        %p554 = pneg %p101
        %p555 = pneg %p125
        %p556 = pneg %p122
        %p557 = pneg %p146
        %p558 = pneg %p143
        %p559 = pneg %p167
        %p560 = pneg %p164
        %p561 = pneg %p188
        %p562 = pneg %p185
        %p563 = pneg %p209
        %p564 = pneg %p206
        %p565 = pneg %p230
        %p566 = pneg %p227
        %p567 = pneg %p251
        %p568 = pneg %p248
        %p569 = pneg %p272
        %p570 = pneg %p269
        %p571 = pneg %p293
        %p572 = pneg %p290
        %p573 = pneg %p314
        %p574 = pneg %p311
        %p575 = pneg %p335
        %p576 = pneg %p332
        %p577 = pneg %p361
        %p578 = pneg %p358
        %s579 = sand.u32 %s348, 1
        %s580 = scalar_lea.sflag [#allocation5], %s579
        %s581 = sand.u32 %s348, 1
        %s582 = smul.addr %s581, 16
        %s583 = scalar_lea.vmem [#allocation14], %s582
        %v585 = vld [vmem:[%s509] sm:$0xff]
        %v586 = vld [vmem:[%s509 + $0x8] sm:$0xff]
        %v587 = vld [vmem:[%s518] sm:$0xff]
        %v588 = vld [vmem:[%s518 + $0x8] sm:$0xff]
        %vm589 = vcmp.gt.f32.partialorder %v587, 0.0
        %vm590 = vcmp.gt.f32.partialorder %v588, 0.0
        %v591 = vsel %vm589, 0.0, -1e+09
        %v592 = vsel %vm590, 0.0, -1e+09
        %v593 = vld [vmem:[%s2] sm:$0x1]
        %v594 = vld [vmem:[%s3] sm:$0x1]
        %595 = vadd.xlane.f32.xlu0 %v585
        %v596 = vpop.xlane.xlu0 %595
        %597 = vadd.xlane.f32.xlu0 %v586
        %v598 = vpop.xlane.xlu0 %597
        %v599 = vrcp.pop 128.0
        %v600 = vmul.f32 %v596, %v599
        %v601 = vmul.f32 %v598, %v599
        %v602 = vsub.f32 %v585, %v600
        %v603 = vsub.f32 %v586, %v601
        %v604 = vmul.f32 %v602, %v602
        %v605 = vmul.f32 %v603, %v603
        %606 = vadd.xlane.f32.xlu0 %v604
        %v607 = vpop.xlane.xlu0 %606
        %608 = vadd.xlane.f32.xlu0 %v605
        %v609 = vpop.xlane.xlu0 %608
        %v610 = vrcp.pop 127.0
        %v611 = vmul.f32 %v607, %v610
        %v612 = vmul.f32 %v609, %v610
        %v613 = vrsqrt.pop %v611
        %v614 = vmul.f32 %v611, %v613
        %vm615 = vcmp.eq.f32.partialorder %v611, inf
        %v616 = vsel %vm615, %v611, %v614
        %vm617 = vcmp.eq.f32.partialorder %v611, 0.0
        %v618 = vand.u32 %v611, 2147483648
        %v619 = vsel %vm617, %v618, %v616
        %v620 = vrsqrt.pop %v612
        %v621 = vmul.f32 %v612, %v620
        %vm622 = vcmp.eq.f32.partialorder %v612, inf
        %v623 = vsel %vm622, %v612, %v621
        %vm624 = vcmp.eq.f32.partialorder %v612, 0.0
        %v625 = vand.u32 %v612, 2147483648
        %v626 = vsel %vm624, %v625, %v623
        %v628 = vlaneseq
        %v629 = vshrl.u32 %v628, 7
        %v630 = vsub.s32 0, %v629
        %v631 = vrot.slane %v593, %v630
        %v633 = vmul.f32 %v631, %v602
        %v634 = vmul.f32 %v631, %v603
        %v635 = vadd.f32 %v619, 1e-06
        %v636 = vadd.f32 %v626, 1e-06
        %v637 = vrcp.pop %v635
        %v638 = vmul.f32 %v633, %v637
        %v639 = vrcp.pop %v636
        %v640 = vmul.f32 %v634, %v639
        %v642 = vlaneseq
        %v643 = vshrl.u32 %v642, 7
        %v644 = vsub.s32 0, %v643
        %v645 = vrot.slane %v594, %v644
        %v647 = vadd.f32 %v638, %v645
        %v648 = vadd.f32 %v640, %v645
        %v649 = vpack.c.bf16 %v648, %v647
        %v650 = vld [vmem:[#allocation8] sm:$0xff]
        %v651 = vld [vmem:[#allocation8 + $0x8] sm:$0xf]
        %v652 = vld [vmem:[#allocation8 + $0xc] sm:$0xff]
        %v653 = vld [vmem:[#allocation8 + $0x14] sm:$0xf]
        %v654 = vld [vmem:[#allocation8 + $0x18] sm:$0xff]
        %v655 = vld [vmem:[#allocation8 + $0x20] sm:$0xf]
        %v656 = vld [vmem:[#allocation8 + $0x24] sm:$0xff]
        %v657 = vld [vmem:[#allocation8 + $0x2c] sm:$0xf]
        %v658 = vld [vmem:[#allocation8 + $0x30] sm:$0xff]
        %v659 = vld [vmem:[#allocation8 + $0x38] sm:$0xf]
        %v660 = vld [vmem:[#allocation8 + $0x3c] sm:$0xff]
        %v661 = vld [vmem:[#allocation8 + $0x44] sm:$0xf]
        %v662 = vld [vmem:[#allocation8 + $0x48] sm:$0xff]
        %v663 = vld [vmem:[#allocation8 + $0x50] sm:$0xf]
        %v664 = vld [vmem:[#allocation8 + $0x54] sm:$0xff]
        %v665 = vld [vmem:[#allocation8 + $0x5c] sm:$0xf]
        %v666 = vld [vmem:[#allocation8 + $0x60] sm:$0xff]
        %v667 = vld [vmem:[#allocation8 + $0x68] sm:$0xf]
        %v668 = vld [vmem:[#allocation8 + $0x6c] sm:$0xff]
        %v669 = vld [vmem:[#allocation8 + $0x74] sm:$0xf]
        %v670 = vld [vmem:[#allocation8 + $0x78] sm:$0xff]
        %v671 = vld [vmem:[#allocation8 + $0x80] sm:$0xf]
        %v672 = vld [vmem:[#allocation8 + $0x84] sm:$0xff]
        %v673 = vld [vmem:[#allocation8 + $0x8c] sm:$0xf]
        %v674 = vld [vmem:[#allocation8 + $0x90] sm:$0xff]
        %v675 = vld [vmem:[#allocation8 + $0x98] sm:$0xf]
        %v676 = vld [vmem:[#allocation8 + $0x9c] sm:$0xff]
        %v677 = vld [vmem:[#allocation8 + $0xa4] sm:$0xf]
        %v678 = vld [vmem:[#allocation8 + $0xa8] sm:$0xff]
        %v679 = vld [vmem:[#allocation8 + $0xb0] sm:$0xf]
        %v680 = vld [vmem:[#allocation8 + $0xb4] sm:$0xff]
        %v681 = vld [vmem:[#allocation8 + $0xbc] sm:$0xf]
        %v682 = vld [vmem:[%s5] sm:$0x7]
        %v684 = vlaneseq
        %v685 = vshrl.u32 %v684, 7
        %v686 = vsub.s32 0, %v685
        %v687 = vrot.slane %v682, %v686
        %v688 = vlaneseq
        %v689 = vshrl.u32 %v688, 7
        %v690 = vsub.s32 1, %v689
        %v691 = vrot.slane %v682, %v690
        %v692 = vlaneseq
        %v693 = vshrl.u32 %v692, 7
        %v694 = vsub.s32 2, %v693
        %v695 = vrot.slane %v682, %v694
        %v731 = vunpack.c.l.b16 %v650
        %v732 = vunpack.c.h.b16 %v650
        %v733 = vunpack.c.l.b16 %v651
        %v734 = vunpack.c.l.b16 %v652
        %v735 = vunpack.c.h.b16 %v652
        %v736 = vunpack.c.l.b16 %v653
        %v737 = vunpack.c.l.b16 %v654
        %v738 = vunpack.c.h.b16 %v654
        %v739 = vunpack.c.l.b16 %v655
        %v740 = vunpack.c.l.b16 %v656
        %v741 = vunpack.c.h.b16 %v656
        %v742 = vunpack.c.l.b16 %v657
        %v743 = vunpack.c.l.b16 %v658
        %v744 = vunpack.c.h.b16 %v658
        %v745 = vunpack.c.l.b16 %v659
        %v746 = vunpack.c.l.b16 %v660
        %v747 = vunpack.c.h.b16 %v660
        %v748 = vunpack.c.l.b16 %v661
        %v749 = vunpack.c.l.b16 %v662
        %v750 = vunpack.c.h.b16 %v662
        %v751 = vunpack.c.l.b16 %v663
        %v752 = vunpack.c.l.b16 %v664
        %v753 = vunpack.c.h.b16 %v664
        %v754 = vunpack.c.l.b16 %v665
        %v755 = vunpack.c.l.b16 %v666
        %v756 = vunpack.c.h.b16 %v666
        %v757 = vunpack.c.l.b16 %v667
        %v758 = vunpack.c.l.b16 %v668
        %v759 = vunpack.c.h.b16 %v668
        %v760 = vunpack.c.l.b16 %v669
        %v761 = vunpack.c.l.b16 %v670
        %v762 = vunpack.c.h.b16 %v670
        %v763 = vunpack.c.l.b16 %v671
        %v764 = vunpack.c.l.b16 %v672
        %v765 = vunpack.c.h.b16 %v672
        %v766 = vunpack.c.l.b16 %v673
        %v767 = vunpack.c.l.b16 %v674
        %v768 = vunpack.c.h.b16 %v674
        %v769 = vunpack.c.l.b16 %v675
        %v770 = vunpack.c.l.b16 %v676
        %v771 = vunpack.c.h.b16 %v676
        %v772 = vunpack.c.l.b16 %v677
        %v773 = vunpack.c.l.b16 %v678
        %v774 = vunpack.c.h.b16 %v678
        %v775 = vunpack.c.l.b16 %v679
        %v776 = vunpack.c.l.b16 %v680
        %v777 = vunpack.c.h.b16 %v680
        %v778 = vunpack.c.l.b16 %v681
        %v779 = vpack.c.b16 %v734, %v731
        %v780 = vpack.c.b16 %v735, %v732
        %v781 = vpack.c.b16 %v736, %v733
        %v782 = vpack.c.b16 %v740, %v737
        %v783 = vpack.c.b16 %v741, %v738
        %v784 = vpack.c.b16 %v742, %v739
        %v785 = vpack.c.b16 %v746, %v743
        %v786 = vpack.c.b16 %v747, %v744
        %v787 = vpack.c.b16 %v748, %v745
        %v788 = vpack.c.b16 %v752, %v749
        %v789 = vpack.c.b16 %v753, %v750
        %v790 = vpack.c.b16 %v754, %v751
        %v791 = vpack.c.b16 %v758, %v755
        %v792 = vpack.c.b16 %v759, %v756
        %v793 = vpack.c.b16 %v760, %v757
        %v794 = vpack.c.b16 %v764, %v761
        %v795 = vpack.c.b16 %v765, %v762
        %v796 = vpack.c.b16 %v766, %v763
        %v797 = vpack.c.b16 %v770, %v767
        %v798 = vpack.c.b16 %v771, %v768
        %v799 = vpack.c.b16 %v772, %v769
        %v800 = vpack.c.b16 %v776, %v773
        %v801 = vpack.c.b16 %v777, %v774
        %v802 = vpack.c.b16 %v778, %v775
        %827 = vmatprep.subr.bf16.mxu0 %v780
        %828 = vmatpush1.bf16.msra.mxu0 %v779
        %829 = vmatprep.subr.bf16.mxu0 %v783
        %830 = vmatpush1.bf16.msra.mxu0 %v782
        %831 = vmatprep.subr.bf16.mxu0 %v786
        %832 = vmatpush1.bf16.msra.mxu0 %v785
        %833 = vmatprep.subr.bf16.mxu0 %v789
        %834 = vmatpush1.bf16.msra.mxu0 %v788
        %835 = vmatprep.subr.bf16.mxu0 %v792
        %836 = vmatpush1.bf16.msra.mxu0 %v791
        %837 = vmatprep.subr.bf16.mxu0 %v795
        %838 = vmatpush1.bf16.msra.mxu0 %v794
        %839 = vmatprep.subr.bf16.mxu0 %v798
        %840 = vmatpush1.bf16.msra.mxu0 %v797
        %841 = vmatprep.subr.bf16.mxu0 %v801
        %842 = vmatpush1.bf16.msra.mxu0 %v800
        %843 = vmatprep.subr.bf16.mxu0 0
        %844 = vmatpush1.bf16.msra.mxu0 0
        %845 = vmatprep.subr.bf16.mxu0 0
        %846 = vmatpush1.bf16.msra.mxu0 0
        %847 = vmatprep.subr.bf16.mxu0 0
        %848 = vmatpush1.bf16.msra.mxu0 0
        %849 = vmatprep.subr.bf16.mxu0 0
        %850 = vmatpush1.bf16.msra.mxu0 0
        %851 = vmatprep.subr.bf16.mxu0 0
        %852 = vmatpush1.bf16.msra.mxu0 0
        %853 = vmatprep.subr.bf16.mxu0 0
        %854 = vmatpush1.bf16.msra.mxu0 0
        %855 = vmatprep.subr.bf16.mxu0 0
        %856 = vmatpush1.bf16.msra.mxu0 0
        %857 = vmatprep.subr.bf16.mxu0 0
        %858 = vmatpush1.bf16.msra.mxu0 0
        %859 = vmatprep.mubr.bf16.mxu0 0
        %860 = vmatmul.mubr.bf16.gmra.mrb[0].mxu0 %v649
        %v861 = vpop.f32.mrb[0].mxu0
        %v862 = vadd.f32 %v687, %v861
        %v863 = vpop.f32.mrb[0].mxu0
        %v864 = vadd.f32 %v691, %v863
        %v865 = vpop.f32.mrb[0].mxu0
        %v866 = vadd.f32 %v687, %v865
        %v867 = vpop.f32.mrb[0].mxu0
        %v868 = vadd.f32 %v691, %v867
        %869 = vdwg.mxu0
        %870 = vmatprep.subr.bf16.mxu0 0
        %871 = vmatpush1.bf16.msra.mxu0 %v781
        %872 = vmatprep.subr.bf16.mxu0 0
        %873 = vmatpush1.bf16.msra.mxu0 %v784
        %874 = vmatprep.subr.bf16.mxu0 0
        %875 = vmatpush1.bf16.msra.mxu0 %v787
        %876 = vmatprep.subr.bf16.mxu0 0
        %877 = vmatpush1.bf16.msra.mxu0 %v790
        %878 = vmatprep.subr.bf16.mxu0 0
        %879 = vmatpush1.bf16.msra.mxu0 %v793
        %880 = vmatprep.subr.bf16.mxu0 0
        %881 = vmatpush1.bf16.msra.mxu0 %v796
        %882 = vmatprep.subr.bf16.mxu0 0
        %883 = vmatpush1.bf16.msra.mxu0 %v799
        %884 = vmatprep.subr.bf16.mxu0 0
        %885 = vmatpush1.bf16.msra.mxu0 %v802
        %886 = vmatprep.subr.bf16.mxu0 0
        %887 = vmatpush1.bf16.msra.mxu0 0
        %888 = vmatprep.subr.bf16.mxu0 0
        %889 = vmatpush1.bf16.msra.mxu0 0
        %890 = vmatprep.subr.bf16.mxu0 0
        %891 = vmatpush1.bf16.msra.mxu0 0
        %892 = vmatprep.subr.bf16.mxu0 0
        %893 = vmatpush1.bf16.msra.mxu0 0
        %894 = vmatprep.subr.bf16.mxu0 0
        %895 = vmatpush1.bf16.msra.mxu0 0
        %896 = vmatprep.subr.bf16.mxu0 0
        %897 = vmatpush1.bf16.msra.mxu0 0
        %898 = vmatprep.subr.bf16.mxu0 0
        %899 = vmatpush1.bf16.msra.mxu0 0
        %900 = vmatprep.subr.bf16.mxu0 0
        %901 = vmatpush1.bf16.msra.mxu0 0
        %902 = vmatprep.mubr.bf16.mxu0 0
        %903 = vmatmul.mubr.bf16.gmra.mrb[0].mxu0 %v649
        %v904 = vpop.f32.mrb[0].mxu0
        %v905 = vadd.f32 %v695, %v904
        %v906 = vpop.f32.mrb[0].mxu0
        %v907 = vpop.f32.mrb[0].mxu0
        %v908 = vadd.f32 %v695, %v907
        %v909 = vpop.f32.mrb[0].mxu0
        %910 = vdwg.mxu0
        %v911 = vmul.f32 %v862, 0.17677669
        %v912 = vmul.f32 %v866, 0.17677669
        %v913 = vpack.c.bf16 %v912, %v911
        %v914 = vpack.c.bf16 %v868, %v864
        %v915 = vpack.c.bf16 %v908, %v905
        %vm916 = vcmask 261120
        %v918 = vsel %vm916, %v913, 0
        %v921 = vsel %vm916, %v914, 0
        %923 = vmatprep.subr.bf16.mxu0 0
        %924 = vmatpush1.bf16.xpose.msra.mxu0 %v921
        %925 = vmatprep.subr.bf16.mxu0 0
        %926 = vmatpush1.bf16.xpose.msra.mxu0 0
        %927 = vmatprep.subr.bf16.mxu0 0
        %928 = vmatpush1.bf16.xpose.msra.mxu0 0
        %929 = vmatprep.subr.bf16.mxu0 0
        %930 = vmatpush1.bf16.xpose.msra.mxu0 0
        %931 = vmatprep.subr.bf16.mxu0 0
        %932 = vmatpush1.bf16.xpose.msra.mxu0 0
        %933 = vmatprep.subr.bf16.mxu0 0
        %934 = vmatpush1.bf16.xpose.msra.mxu0 0
        %935 = vmatprep.subr.bf16.mxu0 0
        %936 = vmatpush1.bf16.xpose.msra.mxu0 0
        %937 = vmatprep.subr.bf16.mxu0 0
        %938 = vmatpush1.bf16.xpose.msra.mxu0 0
        %939 = vmatprep.subr.bf16.mxu0 0
        %940 = vmatpush1.bf16.xpose.msra.mxu0 0
        %941 = vmatprep.subr.bf16.mxu0 0
        %942 = vmatpush1.bf16.xpose.msra.mxu0 0
        %943 = vmatprep.subr.bf16.mxu0 0
        %944 = vmatpush1.bf16.xpose.msra.mxu0 0
        %945 = vmatprep.subr.bf16.mxu0 0
        %946 = vmatpush1.bf16.xpose.msra.mxu0 0
        %947 = vmatprep.subr.bf16.mxu0 0
        %948 = vmatpush1.bf16.xpose.msra.mxu0 0
        %949 = vmatprep.subr.bf16.mxu0 0
        %950 = vmatpush1.bf16.xpose.msra.mxu0 0
        %951 = vmatprep.subr.bf16.mxu0 0
        %952 = vmatpush1.bf16.xpose.msra.mxu0 0
        %953 = vmatprep.subr.bf16.mxu0 0
        %954 = vmatpush1.bf16.xpose.msra.mxu0 0
        %955 = vmatprep.mubr.bf16.mxu0 0
        %956 = vmatmul.mubr.bf16.gmra.mrb[0].mxu0 %v918
        %v957 = vpop.f32.mrb[0].mxu0
        %v958 = vadd.f32 %v591, %v957
        %v959 = vpop.f32.mrb[0].mxu0
        %v960 = vpop.f32.mrb[0].mxu0
        %v961 = vadd.f32 %v592, %v960
        %v962 = vpop.f32.mrb[0].mxu0
        %963 = vdwg.mxu0
        %vm964 = vcmask 130048
        %v965 = vsel %vm964, %v958, -inf
        %966 = vmax.xlane.f32.xlu0 %v965
        %v967 = vpop.xlane.xlu0 %966
        %v968 = vsel %vm964, %v961, -inf
        %969 = vmax.xlane.f32.xlu0 %v968
        %v970 = vpop.xlane.xlu0 %969
        %v971 = vsub.f32 %v958, %v967
        %v972 = vsub.f32 %v961, %v970
        %v973 = vmul.f32 %v971, 1.442695
        %v974 = vpow.pop %v973
        %v975 = vmul.f32 %v972, 1.442695
        %v976 = vpow.pop %v975
        %v977 = vsel %vm964, %v974, 0.0
        %978 = vadd.xlane.f32.xlu0 %v977
        %v979 = vpop.xlane.xlu0 %978
        %v980 = vsel %vm964, %v976, 0.0
        %981 = vadd.xlane.f32.xlu0 %v980
        %v982 = vpop.xlane.xlu0 %981
        %v983 = vpack.c.bf16 %v976, %v974
        %v985 = vsel %vm964, %v983, 0
        %987 = vmatprep.subr.bf16.mxu0 0
        %988 = vmatpush1.bf16.msra.mxu0 %v915
        %989 = vmatprep.subr.bf16.mxu0 0
        %990 = vmatpush1.bf16.msra.mxu0 0
        %991 = vmatprep.subr.bf16.mxu0 0
        %992 = vmatpush1.bf16.msra.mxu0 0
        %993 = vmatprep.subr.bf16.mxu0 0
        %994 = vmatpush1.bf16.msra.mxu0 0
        %995 = vmatprep.subr.bf16.mxu0 0
        %996 = vmatpush1.bf16.msra.mxu0 0
        %997 = vmatprep.subr.bf16.mxu0 0
        %998 = vmatpush1.bf16.msra.mxu0 0
        %999 = vmatprep.subr.bf16.mxu0 0
        %1000 = vmatpush1.bf16.msra.mxu0 0
        %1001 = vmatprep.subr.bf16.mxu0 0
        %1002 = vmatpush1.bf16.msra.mxu0 0
        %1003 = vmatprep.subr.bf16.mxu0 0
        %1004 = vmatpush1.bf16.msra.mxu0 0
        %1005 = vmatprep.subr.bf16.mxu0 0
        %1006 = vmatpush1.bf16.msra.mxu0 0
        %1007 = vmatprep.subr.bf16.mxu0 0
        %1008 = vmatpush1.bf16.msra.mxu0 0
        %1009 = vmatprep.subr.bf16.mxu0 0
        %1010 = vmatpush1.bf16.msra.mxu0 0
        %1011 = vmatprep.subr.bf16.mxu0 0
        %1012 = vmatpush1.bf16.msra.mxu0 0
        %1013 = vmatprep.subr.bf16.mxu0 0
        %1014 = vmatpush1.bf16.msra.mxu0 0
        %1015 = vmatprep.subr.bf16.mxu0 0
        %1016 = vmatpush1.bf16.msra.mxu0 0
        %1017 = vmatprep.subr.bf16.mxu0 0
        %1018 = vmatpush1.bf16.msra.mxu0 0
        %1019 = vmatprep.mubr.bf16.mxu0 0
        %1020 = vmatmul.mubr.bf16.gmra.mrb[0].mxu0 %v985
        %v1021 = vpop.f32.mrb[0].mxu0
        %v1022 = vadd.f32 0.0, %v1021
        %v1023 = vpop.f32.mrb[0].mxu0
        %v1024 = vpop.f32.mrb[0].mxu0
        %v1025 = vadd.f32 0.0, %v1024
        %v1026 = vpop.f32.mrb[0].mxu0
        %1027 = vdwg.mxu0
        %v1028 = vrcp.pop %v979
        %v1029 = vrcp.pop %v982
        %v1030 = vmul.f32 %v1022, %v1028
        %v1031 = vmul.f32 %v1025, %v1029
        %v1032 = vpack.c.bf16 %v1031, %v1030
        %1033 = vst.msk [vmem:[#allocation2] sm:$0xff] %vm916, %v1032
        %1035 = vrot.lane.b32.xlu0 %v913, 96
        %v1036 = vpop.permute.xlu0 %1035
        %1038 = vrot.lane.b32.xlu0 %v914, 96
        %v1039 = vpop.permute.xlu0 %1038
        %v1041 = vsel %vm916, %v1036, 0
        %v1044 = vsel %vm916, %v1039, 0
        %1046 = vmatprep.subr.bf16.mxu0 0
        %1047 = vmatpush1.bf16.xpose.msra.mxu0 %v1044
        %1048 = vmatprep.subr.bf16.mxu0 0
        %1049 = vmatpush1.bf16.xpose.msra.mxu0 0
        %1050 = vmatprep.subr.bf16.mxu0 0
        %1051 = vmatpush1.bf16.xpose.msra.mxu0 0
        %1052 = vmatprep.subr.bf16.mxu0 0
        %1053 = vmatpush1.bf16.xpose.msra.mxu0 0
        %1054 = vmatprep.subr.bf16.mxu0 0
        %1055 = vmatpush1.bf16.xpose.msra.mxu0 0
        %1056 = vmatprep.subr.bf16.mxu0 0
        %1057 = vmatpush1.bf16.xpose.msra.mxu0 0
        %1058 = vmatprep.subr.bf16.mxu0 0
        %1059 = vmatpush1.bf16.xpose.msra.mxu0 0
        %1060 = vmatprep.subr.bf16.mxu0 0
        %1061 = vmatpush1.bf16.xpose.msra.mxu0 0
        %1062 = vmatprep.subr.bf16.mxu0 0
        %1063 = vmatpush1.bf16.xpose.msra.mxu0 0
        %1064 = vmatprep.subr.bf16.mxu0 0
        %1065 = vmatpush1.bf16.xpose.msra.mxu0 0
        %1066 = vmatprep.subr.bf16.mxu0 0
        %1067 = vmatpush1.bf16.xpose.msra.mxu0 0
        %1068 = vmatprep.subr.bf16.mxu0 0
        %1069 = vmatpush1.bf16.xpose.msra.mxu0 0
        %1070 = vmatprep.subr.bf16.mxu0 0
        %1071 = vmatpush1.bf16.xpose.msra.mxu0 0
        %1072 = vmatprep.subr.bf16.mxu0 0
        %1073 = vmatpush1.bf16.xpose.msra.mxu0 0
        %1074 = vmatprep.subr.bf16.mxu0 0
        %1075 = vmatpush1.bf16.xpose.msra.mxu0 0
        %1076 = vmatprep.subr.bf16.mxu0 0
        %1077 = vmatpush1.bf16.xpose.msra.mxu0 0
        %1078 = vmatprep.mubr.bf16.mxu0 0
        %1079 = vmatmul.mubr.bf16.gmra.mrb[0].mxu0 %v1041
        %v1080 = vpop.f32.mrb[0].mxu0
        %v1081 = vadd.f32 %v591, %v1080
        %v1082 = vpop.f32.mrb[0].mxu0
        %v1083 = vpop.f32.mrb[0].mxu0
        %v1084 = vadd.f32 %v592, %v1083
        %v1085 = vpop.f32.mrb[0].mxu0
        %1086 = vdwg.mxu0
        %v1087 = vsel %vm964, %v1081, -inf
        %1088 = vmax.xlane.f32.xlu0 %v1087
        %v1089 = vpop.xlane.xlu0 %1088
        %v1090 = vsel %vm964, %v1084, -inf
        %1091 = vmax.xlane.f32.xlu0 %v1090
        %v1092 = vpop.xlane.xlu0 %1091
        %v1093 = vsub.f32 %v1081, %v1089
        %v1094 = vsub.f32 %v1084, %v1092
        %v1095 = vmul.f32 %v1093, 1.442695
        %v1096 = vpow.pop %v1095
        %v1097 = vmul.f32 %v1094, 1.442695
        %v1098 = vpow.pop %v1097
        %v1099 = vsel %vm964, %v1096, 0.0
        %1100 = vadd.xlane.f32.xlu0 %v1099
        %v1101 = vpop.xlane.xlu0 %1100
        %v1102 = vsel %vm964, %v1098, 0.0
        %1103 = vadd.xlane.f32.xlu0 %v1102
        %v1104 = vpop.xlane.xlu0 %1103
        %v1105 = vpack.c.bf16 %v1098, %v1096
        %1107 = vrot.lane.b32.xlu0 %v915, 96
        %v1108 = vpop.permute.xlu0 %1107
        %v1111 = vsel %vm964, %v1105, 0
        %1113 = vmatprep.subr.bf16.mxu0 0
        %1114 = vmatpush1.bf16.msra.mxu0 %v1108
        %1115 = vmatprep.subr.bf16.mxu0 0
        %1116 = vmatpush1.bf16.msra.mxu0 0
        %1117 = vmatprep.subr.bf16.mxu0 0
        %1118 = vmatpush1.bf16.msra.mxu0 0
        %1119 = vmatprep.subr.bf16.mxu0 0
        %1120 = vmatpush1.bf16.msra.mxu0 0
        %1121 = vmatprep.subr.bf16.mxu0 0
        %1122 = vmatpush1.bf16.msra.mxu0 0
        %1123 = vmatprep.subr.bf16.mxu0 0
        %1124 = vmatpush1.bf16.msra.mxu0 0
        %1125 = vmatprep.subr.bf16.mxu0 0
        %1126 = vmatpush1.bf16.msra.mxu0 0
        %1127 = vmatprep.subr.bf16.mxu0 0
        %1128 = vmatpush1.bf16.msra.mxu0 0
        %1129 = vmatprep.subr.bf16.mxu0 0
        %1130 = vmatpush1.bf16.msra.mxu0 0
        %1131 = vmatprep.subr.bf16.mxu0 0
        %1132 = vmatpush1.bf16.msra.mxu0 0
        %1133 = vmatprep.subr.bf16.mxu0 0
        %1134 = vmatpush1.bf16.msra.mxu0 0
        %1135 = vmatprep.subr.bf16.mxu0 0
        %1136 = vmatpush1.bf16.msra.mxu0 0
        %1137 = vmatprep.subr.bf16.mxu0 0
        %1138 = vmatpush1.bf16.msra.mxu0 0
        %1139 = vmatprep.subr.bf16.mxu0 0
        %1140 = vmatpush1.bf16.msra.mxu0 0
        %1141 = vmatprep.subr.bf16.mxu0 0
        %1142 = vmatpush1.bf16.msra.mxu0 0
        %1143 = vmatprep.subr.bf16.mxu0 0
        %1144 = vmatpush1.bf16.msra.mxu0 0
        %1145 = vmatprep.mubr.bf16.mxu0 0
        %1146 = vmatmul.mubr.bf16.gmra.mrb[0].mxu0 %v1111
        %v1147 = vpop.f32.mrb[0].mxu0
        %v1148 = vadd.f32 0.0, %v1147
        %v1149 = vpop.f32.mrb[0].mxu0
        %v1150 = vpop.f32.mrb[0].mxu0
        %v1151 = vadd.f32 0.0, %v1150
        %v1152 = vpop.f32.mrb[0].mxu0
        %1153 = vdwg.mxu0
        %v1154 = vrcp.pop %v1101
        %v1155 = vrcp.pop %v1104
        %v1156 = vmul.f32 %v1148, %v1154
        %v1157 = vmul.f32 %v1151, %v1155
        %v1158 = vpack.c.bf16 %v1157, %v1156
        %1160 = vrot.lane.b32.xlu0 %v1158, 32
        %v1161 = vpop.permute.xlu0 %1160
        %vm1163 = vcmask 523520
        %1164 = vst.msk [vmem:[#allocation2] sm:$0xff] %vm1163, %v1161
        %1165 = vrot.lane.b32.xlu0 %v913, 64
        %v1166 = vpop.permute.xlu0 %1165
        %1167 = vrot.lane.b32.xlu0 %v914, 64
        %v1168 = vpop.permute.xlu0 %1167
        %v1170 = vsel %vm916, %v1166, 0
        %v1173 = vsel %vm916, %v1168, 0
        %1175 = vmatprep.subr.bf16.mxu0 0
        %1176 = vmatpush1.bf16.xpose.msra.mxu0 %v1173
        %1177 = vmatprep.subr.bf16.mxu0 0
        %1178 = vmatpush1.bf16.xpose.msra.mxu0 0
        %1179 = vmatprep.subr.bf16.mxu0 0
        %1180 = vmatpush1.bf16.xpose.msra.mxu0 0
        %1181 = vmatprep.subr.bf16.mxu0 0
        %1182 = vmatpush1.bf16.xpose.msra.mxu0 0
        %1183 = vmatprep.subr.bf16.mxu0 0
        %1184 = vmatpush1.bf16.xpose.msra.mxu0 0
        %1185 = vmatprep.subr.bf16.mxu0 0
        %1186 = vmatpush1.bf16.xpose.msra.mxu0 0
        %1187 = vmatprep.subr.bf16.mxu0 0
        %1188 = vmatpush1.bf16.xpose.msra.mxu0 0
        %1189 = vmatprep.subr.bf16.mxu0 0
        %1190 = vmatpush1.bf16.xpose.msra.mxu0 0
        %1191 = vmatprep.subr.bf16.mxu0 0
        %1192 = vmatpush1.bf16.xpose.msra.mxu0 0
        %1193 = vmatprep.subr.bf16.mxu0 0
        %1194 = vmatpush1.bf16.xpose.msra.mxu0 0
        %1195 = vmatprep.subr.bf16.mxu0 0
        %1196 = vmatpush1.bf16.xpose.msra.mxu0 0
        %1197 = vmatprep.subr.bf16.mxu0 0
        %1198 = vmatpush1.bf16.xpose.msra.mxu0 0
        %1199 = vmatprep.subr.bf16.mxu0 0
        %1200 = vmatpush1.bf16.xpose.msra.mxu0 0
        %1201 = vmatprep.subr.bf16.mxu0 0
        %1202 = vmatpush1.bf16.xpose.msra.mxu0 0
        %1203 = vmatprep.subr.bf16.mxu0 0
        %1204 = vmatpush1.bf16.xpose.msra.mxu0 0
        %1205 = vmatprep.subr.bf16.mxu0 0
        %1206 = vmatpush1.bf16.xpose.msra.mxu0 0
        %1207 = vmatprep.mubr.bf16.mxu0 0
        %1208 = vmatmul.mubr.bf16.gmra.mrb[0].mxu0 %v1170
        %v1209 = vpop.f32.mrb[0].mxu0
        %v1210 = vadd.f32 %v591, %v1209
        %v1211 = vpop.f32.mrb[0].mxu0
        %v1212 = vpop.f32.mrb[0].mxu0
        %v1213 = vadd.f32 %v592, %v1212
        %v1214 = vpop.f32.mrb[0].mxu0
        %1215 = vdwg.mxu0
        %v1216 = vsel %vm964, %v1210, -inf
        %1217 = vmax.xlane.f32.xlu0 %v1216
        %v1218 = vpop.xlane.xlu0 %1217
        %v1219 = vsel %vm964, %v1213, -inf
        %1220 = vmax.xlane.f32.xlu0 %v1219
        %v1221 = vpop.xlane.xlu0 %1220
        %v1222 = vsub.f32 %v1210, %v1218
        %v1223 = vsub.f32 %v1213, %v1221
        %v1224 = vmul.f32 %v1222, 1.442695
        %v1225 = vpow.pop %v1224
        %v1226 = vmul.f32 %v1223, 1.442695
        %v1227 = vpow.pop %v1226
        %v1228 = vsel %vm964, %v1225, 0.0
        %1229 = vadd.xlane.f32.xlu0 %v1228
        %v1230 = vpop.xlane.xlu0 %1229
        %v1231 = vsel %vm964, %v1227, 0.0
        %1232 = vadd.xlane.f32.xlu0 %v1231
        %v1233 = vpop.xlane.xlu0 %1232
        %v1234 = vpack.c.bf16 %v1227, %v1225
        %1235 = vrot.lane.b32.xlu0 %v915, 64
        %v1236 = vpop.permute.xlu0 %1235
        %v1239 = vsel %vm964, %v1234, 0
        %1241 = vmatprep.subr.bf16.mxu0 0
        %1242 = vmatpush1.bf16.msra.mxu0 %v1236
        %1243 = vmatprep.subr.bf16.mxu0 0
        %1244 = vmatpush1.bf16.msra.mxu0 0
        %1245 = vmatprep.subr.bf16.mxu0 0
        %1246 = vmatpush1.bf16.msra.mxu0 0
        %1247 = vmatprep.subr.bf16.mxu0 0
        %1248 = vmatpush1.bf16.msra.mxu0 0
        %1249 = vmatprep.subr.bf16.mxu0 0
        %1250 = vmatpush1.bf16.msra.mxu0 0
        %1251 = vmatprep.subr.bf16.mxu0 0
        %1252 = vmatpush1.bf16.msra.mxu0 0
        %1253 = vmatprep.subr.bf16.mxu0 0
        %1254 = vmatpush1.bf16.msra.mxu0 0
        %1255 = vmatprep.subr.bf16.mxu0 0
        %1256 = vmatpush1.bf16.msra.mxu0 0
        %1257 = vmatprep.subr.bf16.mxu0 0
        %1258 = vmatpush1.bf16.msra.mxu0 0
        %1259 = vmatprep.subr.bf16.mxu0 0
        %1260 = vmatpush1.bf16.msra.mxu0 0
        %1261 = vmatprep.subr.bf16.mxu0 0
        %1262 = vmatpush1.bf16.msra.mxu0 0
        %1263 = vmatprep.subr.bf16.mxu0 0
        %1264 = vmatpush1.bf16.msra.mxu0 0
        %1265 = vmatprep.subr.bf16.mxu0 0
        %1266 = vmatpush1.bf16.msra.mxu0 0
        %1267 = vmatprep.subr.bf16.mxu0 0
        %1268 = vmatpush1.bf16.msra.mxu0 0
        %1269 = vmatprep.subr.bf16.mxu0 0
        %1270 = vmatpush1.bf16.msra.mxu0 0
        %1271 = vmatprep.subr.bf16.mxu0 0
        %1272 = vmatpush1.bf16.msra.mxu0 0
        %1273 = vmatprep.mubr.bf16.mxu0 0
        %1274 = vmatmul.mubr.bf16.gmra.mrb[0].mxu0 %v1239
        %v1275 = vpop.f32.mrb[0].mxu0
        %v1276 = vadd.f32 0.0, %v1275
        %v1277 = vpop.f32.mrb[0].mxu0
        %v1278 = vpop.f32.mrb[0].mxu0
        %v1279 = vadd.f32 0.0, %v1278
        %v1280 = vpop.f32.mrb[0].mxu0
        %1281 = vdwg.mxu0
        %v1282 = vrcp.pop %v1230
        %v1283 = vrcp.pop %v1233
        %v1284 = vmul.f32 %v1276, %v1282
        %v1285 = vmul.f32 %v1279, %v1283
        %v1286 = vpack.c.bf16 %v1285, %v1284
        %1288 = vrot.lane.b32.xlu0 %v1286, 64
        %v1289 = vpop.permute.xlu0 %1288
        %vm1291 = vcmask 785920
        %1292 = vst.msk [vmem:[#allocation2] sm:$0xff] %vm1291, %v1289
        %1293 = vrot.lane.b32.xlu0 %v913, 32
        %v1294 = vpop.permute.xlu0 %1293
        %1295 = vrot.lane.b32.xlu0 %v914, 32
        %v1296 = vpop.permute.xlu0 %1295
        %v1298 = vsel %vm916, %v1294, 0
        %v1301 = vsel %vm916, %v1296, 0
        %1303 = vmatprep.subr.bf16.mxu0 0
        %1304 = vmatpush1.bf16.xpose.msra.mxu0 %v1301
        %1305 = vmatprep.subr.bf16.mxu0 0
        %1306 = vmatpush1.bf16.xpose.msra.mxu0 0
        %1307 = vmatprep.subr.bf16.mxu0 0
        %1308 = vmatpush1.bf16.xpose.msra.mxu0 0
        %1309 = vmatprep.subr.bf16.mxu0 0
        %1310 = vmatpush1.bf16.xpose.msra.mxu0 0
        %1311 = vmatprep.subr.bf16.mxu0 0
        %1312 = vmatpush1.bf16.xpose.msra.mxu0 0
        %1313 = vmatprep.subr.bf16.mxu0 0
        %1314 = vmatpush1.bf16.xpose.msra.mxu0 0
        %1315 = vmatprep.subr.bf16.mxu0 0
        %1316 = vmatpush1.bf16.xpose.msra.mxu0 0
        %1317 = vmatprep.subr.bf16.mxu0 0
        %1318 = vmatpush1.bf16.xpose.msra.mxu0 0
        %1319 = vmatprep.subr.bf16.mxu0 0
        %1320 = vmatpush1.bf16.xpose.msra.mxu0 0
        %1321 = vmatprep.subr.bf16.mxu0 0
        %1322 = vmatpush1.bf16.xpose.msra.mxu0 0
        %1323 = vmatprep.subr.bf16.mxu0 0
        %1324 = vmatpush1.bf16.xpose.msra.mxu0 0
        %1325 = vmatprep.subr.bf16.mxu0 0
        %1326 = vmatpush1.bf16.xpose.msra.mxu0 0
        %1327 = vmatprep.subr.bf16.mxu0 0
        %1328 = vmatpush1.bf16.xpose.msra.mxu0 0
        %1329 = vmatprep.subr.bf16.mxu0 0
        %1330 = vmatpush1.bf16.xpose.msra.mxu0 0
        %1331 = vmatprep.subr.bf16.mxu0 0
        %1332 = vmatpush1.bf16.xpose.msra.mxu0 0
        %1333 = vmatprep.subr.bf16.mxu0 0
        %1334 = vmatpush1.bf16.xpose.msra.mxu0 0
        %1335 = vmatprep.mubr.bf16.mxu0 0
        %1336 = vmatmul.mubr.bf16.gmra.mrb[0].mxu0 %v1298
        %v1337 = vpop.f32.mrb[0].mxu0
        %v1338 = vadd.f32 %v591, %v1337
        %v1339 = vpop.f32.mrb[0].mxu0
        %v1340 = vpop.f32.mrb[0].mxu0
        %v1341 = vadd.f32 %v592, %v1340
        %v1342 = vpop.f32.mrb[0].mxu0
        %1343 = vdwg.mxu0
        %v1344 = vsel %vm964, %v1338, -inf
        %1345 = vmax.xlane.f32.xlu0 %v1344
        %v1346 = vpop.xlane.xlu0 %1345
        %v1347 = vsel %vm964, %v1341, -inf
        %1348 = vmax.xlane.f32.xlu0 %v1347
        %v1349 = vpop.xlane.xlu0 %1348
        %v1350 = vsub.f32 %v1338, %v1346
        %v1351 = vsub.f32 %v1341, %v1349
        %v1352 = vmul.f32 %v1350, 1.442695
        %v1353 = vpow.pop %v1352
        %v1354 = vmul.f32 %v1351, 1.442695
        %v1355 = vpow.pop %v1354
        %v1356 = vsel %vm964, %v1353, 0.0
        %1357 = vadd.xlane.f32.xlu0 %v1356
        %v1358 = vpop.xlane.xlu0 %1357
        %v1359 = vsel %vm964, %v1355, 0.0
        %1360 = vadd.xlane.f32.xlu0 %v1359
        %v1361 = vpop.xlane.xlu0 %1360
        %v1362 = vpack.c.bf16 %v1355, %v1353
        %1363 = vrot.lane.b32.xlu0 %v915, 32
        %v1364 = vpop.permute.xlu0 %1363
        %v1367 = vsel %vm964, %v1362, 0
        %1369 = vmatprep.subr.bf16.mxu0 0
        %1370 = vmatpush1.bf16.msra.mxu0 %v1364
        %1371 = vmatprep.subr.bf16.mxu0 0
        %1372 = vmatpush1.bf16.msra.mxu0 0
        %1373 = vmatprep.subr.bf16.mxu0 0
        %1374 = vmatpush1.bf16.msra.mxu0 0
        %1375 = vmatprep.subr.bf16.mxu0 0
        %1376 = vmatpush1.bf16.msra.mxu0 0
        %1377 = vmatprep.subr.bf16.mxu0 0
        %1378 = vmatpush1.bf16.msra.mxu0 0
        %1379 = vmatprep.subr.bf16.mxu0 0
        %1380 = vmatpush1.bf16.msra.mxu0 0
        %1381 = vmatprep.subr.bf16.mxu0 0
        %1382 = vmatpush1.bf16.msra.mxu0 0
        %1383 = vmatprep.subr.bf16.mxu0 0
        %1384 = vmatpush1.bf16.msra.mxu0 0
        %1385 = vmatprep.subr.bf16.mxu0 0
        %1386 = vmatpush1.bf16.msra.mxu0 0
        %1387 = vmatprep.subr.bf16.mxu0 0
        %1388 = vmatpush1.bf16.msra.mxu0 0
        %1389 = vmatprep.subr.bf16.mxu0 0
        %1390 = vmatpush1.bf16.msra.mxu0 0
        %1391 = vmatprep.subr.bf16.mxu0 0
        %1392 = vmatpush1.bf16.msra.mxu0 0
        %1393 = vmatprep.subr.bf16.mxu0 0
        %1394 = vmatpush1.bf16.msra.mxu0 0
        %1395 = vmatprep.subr.bf16.mxu0 0
        %1396 = vmatpush1.bf16.msra.mxu0 0
        %1397 = vmatprep.subr.bf16.mxu0 0
        %1398 = vmatpush1.bf16.msra.mxu0 0
        %1399 = vmatprep.subr.bf16.mxu0 0
        %1400 = vmatpush1.bf16.msra.mxu0 0
        %1401 = vmatprep.mubr.bf16.mxu0 0
        %1402 = vmatmul.mubr.bf16.gmra.mrb[0].mxu0 %v1367
        %v1403 = vpop.f32.mrb[0].mxu0
        %v1404 = vadd.f32 0.0, %v1403
        %v1405 = vpop.f32.mrb[0].mxu0
        %v1406 = vpop.f32.mrb[0].mxu0
        %v1407 = vadd.f32 0.0, %v1406
        %v1408 = vpop.f32.mrb[0].mxu0
        %1409 = vdwg.mxu0
        %v1410 = vrcp.pop %v1358
        %v1411 = vrcp.pop %v1361
        %v1412 = vmul.f32 %v1404, %v1410
        %v1413 = vmul.f32 %v1407, %v1411
        %v1414 = vpack.c.bf16 %v1413, %v1412
        %1416 = vrot.lane.b32.xlu0 %v1414, 96
        %v1417 = vpop.permute.xlu0 %1416
        %vm1419 = vcmask 1048320
        %1420 = vst.msk [vmem:[#allocation2] sm:$0xff] %vm1419, %v1417
        %v1421 = vld [vmem:[#allocation2] sm:$0xff]
        %v1422 = vld [vmem:[#allocation9] sm:$0xf]
        %v1423 = vld [vmem:[#allocation9 + $0x4] sm:$0xf]
        %v1424 = vld [vmem:[#allocation9 + $0x8] sm:$0xf]
        %v1425 = vld [vmem:[#allocation9 + $0xc] sm:$0xf]
        %v1426 = vld [vmem:[#allocation9 + $0x10] sm:$0xf]
        %v1427 = vld [vmem:[#allocation9 + $0x14] sm:$0xf]
        %v1428 = vld [vmem:[#allocation9 + $0x18] sm:$0xf]
        %v1429 = vld [vmem:[#allocation9 + $0x1c] sm:$0xf]
        %v1430 = vld [vmem:[#allocation9 + $0x20] sm:$0xf]
        %v1431 = vld [vmem:[#allocation9 + $0x24] sm:$0xf]
        %v1432 = vld [vmem:[#allocation9 + $0x28] sm:$0xf]
        %v1433 = vld [vmem:[#allocation9 + $0x2c] sm:$0xf]
        %v1434 = vld [vmem:[#allocation9 + $0x30] sm:$0xf]
        %v1435 = vld [vmem:[#allocation9 + $0x34] sm:$0xf]
        %v1436 = vld [vmem:[#allocation9 + $0x38] sm:$0xf]
        %v1437 = vld [vmem:[#allocation9 + $0x3c] sm:$0xf]
        %v1438 = vld [vmem:[%s7] sm:$0x1]
        %v1440 = vlaneseq
        %v1441 = vshrl.u32 %v1440, 7
        %v1442 = vsub.s32 0, %v1441
        %v1443 = vrot.slane %v1438, %v1442
        %v1461 = vunpack.c.l.b16 %v1422
        %v1462 = vunpack.c.l.b16 %v1423
        %v1463 = vunpack.c.l.b16 %v1424
        %v1464 = vunpack.c.l.b16 %v1425
        %v1465 = vunpack.c.l.b16 %v1426
        %v1466 = vunpack.c.l.b16 %v1427
        %v1467 = vunpack.c.l.b16 %v1428
        %v1468 = vunpack.c.l.b16 %v1429
        %v1469 = vunpack.c.l.b16 %v1430
        %v1470 = vunpack.c.l.b16 %v1431
        %v1471 = vunpack.c.l.b16 %v1432
        %v1472 = vunpack.c.l.b16 %v1433
        %v1473 = vunpack.c.l.b16 %v1434
        %v1474 = vunpack.c.l.b16 %v1435
        %v1475 = vunpack.c.l.b16 %v1436
        %v1476 = vunpack.c.l.b16 %v1437
        %v1477 = vpack.c.b16 %v1462, %v1461
        %v1478 = vpack.c.b16 %v1464, %v1463
        %v1479 = vpack.c.b16 %v1466, %v1465
        %v1480 = vpack.c.b16 %v1468, %v1467
        %v1481 = vpack.c.b16 %v1470, %v1469
        %v1482 = vpack.c.b16 %v1472, %v1471
        %v1483 = vpack.c.b16 %v1474, %v1473
        %v1484 = vpack.c.b16 %v1476, %v1475
        %1493 = vmatprep.subr.bf16.mxu0 0
        %1494 = vmatpush1.bf16.msra.mxu0 %v1477
        %1495 = vmatprep.subr.bf16.mxu0 0
        %1496 = vmatpush1.bf16.msra.mxu0 %v1478
        %1497 = vmatprep.subr.bf16.mxu0 0
        %1498 = vmatpush1.bf16.msra.mxu0 %v1479
        %1499 = vmatprep.subr.bf16.mxu0 0
        %1500 = vmatpush1.bf16.msra.mxu0 %v1480
        %1501 = vmatprep.subr.bf16.mxu0 0
        %1502 = vmatpush1.bf16.msra.mxu0 %v1481
        %1503 = vmatprep.subr.bf16.mxu0 0
        %1504 = vmatpush1.bf16.msra.mxu0 %v1482
        %1505 = vmatprep.subr.bf16.mxu0 0
        %1506 = vmatpush1.bf16.msra.mxu0 %v1483
        %1507 = vmatprep.subr.bf16.mxu0 0
        %1508 = vmatpush1.bf16.msra.mxu0 %v1484
        %1509 = vmatprep.subr.bf16.mxu0 0
        %1510 = vmatpush1.bf16.msra.mxu0 0
        %1511 = vmatprep.subr.bf16.mxu0 0
        %1512 = vmatpush1.bf16.msra.mxu0 0
        %1513 = vmatprep.subr.bf16.mxu0 0
        %1514 = vmatpush1.bf16.msra.mxu0 0
        %1515 = vmatprep.subr.bf16.mxu0 0
        %1516 = vmatpush1.bf16.msra.mxu0 0
        %1517 = vmatprep.subr.bf16.mxu0 0
        %1518 = vmatpush1.bf16.msra.mxu0 0
        %1519 = vmatprep.subr.bf16.mxu0 0
        %1520 = vmatpush1.bf16.msra.mxu0 0
        %1521 = vmatprep.subr.bf16.mxu0 0
        %1522 = vmatpush1.bf16.msra.mxu0 0
        %1523 = vmatprep.subr.bf16.mxu0 0
        %1524 = vmatpush1.bf16.msra.mxu0 0
        %1525 = vmatprep.mubr.bf16.mxu0 0
        %1526 = vmatmul.mubr.bf16.gmra.mrb[0].mxu0 %v1421
        %v1527 = vpop.f32.mrb[0].mxu0
        %v1528 = vadd.f32 %v1443, %v1527
        %v1529 = vpop.f32.mrb[0].mxu0
        %v1530 = vpop.f32.mrb[0].mxu0
        %v1531 = vadd.f32 %v1443, %v1530
        %v1532 = vpop.f32.mrb[0].mxu0
        %1533 = vdwg.mxu0
        %v1534 = vadd.f32 %v585, %v1528
        %v1535 = vadd.f32 %v586, %v1531
        %v1536 = vld [vmem:[%s8] sm:$0x1]
        %v1537 = vld [vmem:[%s9] sm:$0x1]
        %1538 = vadd.xlane.f32.xlu0 %v1534
        %v1539 = vpop.xlane.xlu0 %1538
        %1540 = vadd.xlane.f32.xlu0 %v1535
        %v1541 = vpop.xlane.xlu0 %1540
        %v1542 = vmul.f32 %v1539, %v599
        %v1543 = vmul.f32 %v1541, %v599
        %v1544 = vsub.f32 %v1534, %v1542
        %v1545 = vsub.f32 %v1535, %v1543
        %v1546 = vmul.f32 %v1544, %v1544
        %v1547 = vmul.f32 %v1545, %v1545
        %1548 = vadd.xlane.f32.xlu0 %v1546
        %v1549 = vpop.xlane.xlu0 %1548
        %1550 = vadd.xlane.f32.xlu0 %v1547
        %v1551 = vpop.xlane.xlu0 %1550
        %v1552 = vmul.f32 %v1549, %v610
        %v1553 = vmul.f32 %v1551, %v610
        %v1554 = vrsqrt.pop %v1552
        %v1555 = vmul.f32 %v1552, %v1554
        %vm1556 = vcmp.eq.f32.partialorder %v1552, inf
        %v1557 = vsel %vm1556, %v1552, %v1555
        %vm1558 = vcmp.eq.f32.partialorder %v1552, 0.0
        %v1559 = vand.u32 %v1552, 2147483648
        %v1560 = vsel %vm1558, %v1559, %v1557
        %v1561 = vrsqrt.pop %v1553
        %v1562 = vmul.f32 %v1553, %v1561
        %vm1563 = vcmp.eq.f32.partialorder %v1553, inf
        %v1564 = vsel %vm1563, %v1553, %v1562
        %vm1565 = vcmp.eq.f32.partialorder %v1553, 0.0
        %v1566 = vand.u32 %v1553, 2147483648
        %v1567 = vsel %vm1565, %v1566, %v1564
        %v1569 = vlaneseq
        %v1570 = vshrl.u32 %v1569, 7
        %v1571 = vsub.s32 0, %v1570
        %v1572 = vrot.slane %v1536, %v1571
        %v1574 = vmul.f32 %v1572, %v1544
        %v1575 = vmul.f32 %v1572, %v1545
        %v1576 = vadd.f32 %v1560, 1e-06
        %v1577 = vadd.f32 %v1567, 1e-06
        %v1578 = vrcp.pop %v1576
        %v1579 = vmul.f32 %v1574, %v1578
        %v1580 = vrcp.pop %v1577
        %v1581 = vmul.f32 %v1575, %v1580
        %v1583 = vlaneseq
        %v1584 = vshrl.u32 %v1583, 7
        %v1585 = vsub.s32 0, %v1584
        %v1586 = vrot.slane %v1537, %v1585
        %v1588 = vadd.f32 %v1579, %v1586
        %v1589 = vadd.f32 %v1581, %v1586
        %v1590 = vpack.c.bf16 %v1589, %v1588
        %v1591 = vld [vmem:[#allocation11] sm:$0xff]
        %v1592 = vld [vmem:[#allocation11 + $0x8] sm:$0xff]
        %v1593 = vld [vmem:[#allocation11 + $0x10] sm:$0xff]
        %v1594 = vld [vmem:[#allocation11 + $0x18] sm:$0xff]
        %v1595 = vld [vmem:[#allocation11 + $0x20] sm:$0xff]
        %v1596 = vld [vmem:[#allocation11 + $0x28] sm:$0xff]
        %v1597 = vld [vmem:[#allocation11 + $0x30] sm:$0xff]
        %v1598 = vld [vmem:[#allocation11 + $0x38] sm:$0xff]
        %v1599 = vld [vmem:[#allocation11 + $0x40] sm:$0xff]
        %v1600 = vld [vmem:[#allocation11 + $0x48] sm:$0xff]
        %v1601 = vld [vmem:[#allocation11 + $0x50] sm:$0xff]
        %v1602 = vld [vmem:[#allocation11 + $0x58] sm:$0xff]
        %v1603 = vld [vmem:[#allocation11 + $0x60] sm:$0xff]
        %v1604 = vld [vmem:[#allocation11 + $0x68] sm:$0xff]
        %v1605 = vld [vmem:[#allocation11 + $0x70] sm:$0xff]
        %v1606 = vld [vmem:[#allocation11 + $0x78] sm:$0xff]
        %v1607 = vld [vmem:[%s11] sm:$0x3]
        %v1609 = vlaneseq
        %v1610 = vshrl.u32 %v1609, 7
        %v1611 = vsub.s32 0, %v1610
        %v1612 = vrot.slane %v1607, %v1611
        %v1613 = vlaneseq
        %v1614 = vshrl.u32 %v1613, 7
        %v1615 = vsub.s32 1, %v1614
        %v1616 = vrot.slane %v1607, %v1615
        %v1635 = vunpack.c.l.b16 %v1591
        %v1636 = vunpack.c.h.b16 %v1591
        %v1637 = vunpack.c.l.b16 %v1592
        %v1638 = vunpack.c.h.b16 %v1592
        %v1639 = vunpack.c.l.b16 %v1593
        %v1640 = vunpack.c.h.b16 %v1593
        %v1641 = vunpack.c.l.b16 %v1594
        %v1642 = vunpack.c.h.b16 %v1594
        %v1643 = vunpack.c.l.b16 %v1595
        %v1644 = vunpack.c.h.b16 %v1595
        %v1645 = vunpack.c.l.b16 %v1596
        %v1646 = vunpack.c.h.b16 %v1596
        %v1647 = vunpack.c.l.b16 %v1597
        %v1648 = vunpack.c.h.b16 %v1597
        %v1649 = vunpack.c.l.b16 %v1598
        %v1650 = vunpack.c.h.b16 %v1598
        %v1651 = vunpack.c.l.b16 %v1599
        %v1652 = vunpack.c.h.b16 %v1599
        %v1653 = vunpack.c.l.b16 %v1600
        %v1654 = vunpack.c.h.b16 %v1600
        %v1655 = vunpack.c.l.b16 %v1601
        %v1656 = vunpack.c.h.b16 %v1601
        %v1657 = vunpack.c.l.b16 %v1602
        %v1658 = vunpack.c.h.b16 %v1602
        %v1659 = vunpack.c.l.b16 %v1603
        %v1660 = vunpack.c.h.b16 %v1603
        %v1661 = vunpack.c.l.b16 %v1604
        %v1662 = vunpack.c.h.b16 %v1604
        %v1663 = vunpack.c.l.b16 %v1605
        %v1664 = vunpack.c.h.b16 %v1605
        %v1665 = vunpack.c.l.b16 %v1606
        %v1666 = vunpack.c.h.b16 %v1606
        %v1667 = vpack.c.b16 %v1637, %v1635
        %v1668 = vpack.c.b16 %v1638, %v1636
        %v1669 = vpack.c.b16 %v1641, %v1639
        %v1670 = vpack.c.b16 %v1642, %v1640
        %v1671 = vpack.c.b16 %v1645, %v1643
        %v1672 = vpack.c.b16 %v1646, %v1644
        %v1673 = vpack.c.b16 %v1649, %v1647
        %v1674 = vpack.c.b16 %v1650, %v1648
        %v1675 = vpack.c.b16 %v1653, %v1651
        %v1676 = vpack.c.b16 %v1654, %v1652
        %v1677 = vpack.c.b16 %v1657, %v1655
        %v1678 = vpack.c.b16 %v1658, %v1656
        %v1679 = vpack.c.b16 %v1661, %v1659
        %v1680 = vpack.c.b16 %v1662, %v1660
        %v1681 = vpack.c.b16 %v1665, %v1663
        %v1682 = vpack.c.b16 %v1666, %v1664
        %1699 = vmatprep.subr.bf16.mxu0 %v1668
        %1700 = vmatpush1.bf16.msra.mxu0 %v1667
        %1701 = vmatprep.subr.bf16.mxu0 %v1670
        %1702 = vmatpush1.bf16.msra.mxu0 %v1669
        %1703 = vmatprep.subr.bf16.mxu0 %v1672
        %1704 = vmatpush1.bf16.msra.mxu0 %v1671
        %1705 = vmatprep.subr.bf16.mxu0 %v1674
        %1706 = vmatpush1.bf16.msra.mxu0 %v1673
        %1707 = vmatprep.subr.bf16.mxu0 %v1676
        %1708 = vmatpush1.bf16.msra.mxu0 %v1675
        %1709 = vmatprep.subr.bf16.mxu0 %v1678
        %1710 = vmatpush1.bf16.msra.mxu0 %v1677
        %1711 = vmatprep.subr.bf16.mxu0 %v1680
        %1712 = vmatpush1.bf16.msra.mxu0 %v1679
        %1713 = vmatprep.subr.bf16.mxu0 %v1682
        %1714 = vmatpush1.bf16.msra.mxu0 %v1681
        %1715 = vmatprep.subr.bf16.mxu0 0
        %1716 = vmatpush1.bf16.msra.mxu0 0
        %1717 = vmatprep.subr.bf16.mxu0 0
        %1718 = vmatpush1.bf16.msra.mxu0 0
        %1719 = vmatprep.subr.bf16.mxu0 0
        %1720 = vmatpush1.bf16.msra.mxu0 0
        %1721 = vmatprep.subr.bf16.mxu0 0
        %1722 = vmatpush1.bf16.msra.mxu0 0
        %1723 = vmatprep.subr.bf16.mxu0 0
        %1724 = vmatpush1.bf16.msra.mxu0 0
        %1725 = vmatprep.subr.bf16.mxu0 0
        %1726 = vmatpush1.bf16.msra.mxu0 0
        %1727 = vmatprep.subr.bf16.mxu0 0
        %1728 = vmatpush1.bf16.msra.mxu0 0
        %1729 = vmatprep.subr.bf16.mxu0 0
        %1730 = vmatpush1.bf16.msra.mxu0 0
        %1731 = vmatprep.mubr.bf16.mxu0 0
        %1732 = vmatmul.mubr.bf16.gmra.mrb[0].mxu0 %v1590
        %v1733 = vpop.f32.mrb[0].mxu0
        %v1734 = vadd.f32 %v1612, %v1733
        %v1735 = vpop.f32.mrb[0].mxu0
        %v1736 = vadd.f32 %v1616, %v1735
        %v1737 = vpop.f32.mrb[0].mxu0
        %v1738 = vadd.f32 %v1612, %v1737
        %v1739 = vpop.f32.mrb[0].mxu0
        %v1740 = vadd.f32 %v1616, %v1739
        %1741 = vdwg.mxu0
        %v1742 = vmax.f32 %v1734, 0.0
        %v1743 = vmax.f32 %v1736, 0.0
        %v1744 = vmax.f32 %v1738, 0.0
        %v1745 = vmax.f32 %v1740, 0.0
        %v1746 = vpack.c.bf16 %v1744, %v1742
        %v1747 = vpack.c.bf16 %v1745, %v1743
        %v1748 = vld [vmem:[#allocation12] sm:$0xf]
        %v1749 = vld [vmem:[#allocation12 + $0x4] sm:$0xf]
        %v1750 = vld [vmem:[#allocation12 + $0x8] sm:$0xf]
        %v1751 = vld [vmem:[#allocation12 + $0xc] sm:$0xf]
        %v1752 = vld [vmem:[#allocation12 + $0x10] sm:$0xf]
        %v1753 = vld [vmem:[#allocation12 + $0x14] sm:$0xf]
        %v1754 = vld [vmem:[#allocation12 + $0x18] sm:$0xf]
        %v1755 = vld [vmem:[#allocation12 + $0x1c] sm:$0xf]
        %v1756 = vld [vmem:[#allocation12 + $0x20] sm:$0xf]
        %v1757 = vld [vmem:[#allocation12 + $0x24] sm:$0xf]
        %v1758 = vld [vmem:[#allocation12 + $0x28] sm:$0xf]
        %v1759 = vld [vmem:[#allocation12 + $0x2c] sm:$0xf]
        %v1760 = vld [vmem:[#allocation12 + $0x30] sm:$0xf]
        %v1761 = vld [vmem:[#allocation12 + $0x34] sm:$0xf]
        %v1762 = vld [vmem:[#allocation12 + $0x38] sm:$0xf]
        %v1763 = vld [vmem:[#allocation12 + $0x3c] sm:$0xf]
        %v1764 = vld [vmem:[#allocation12 + $0x40] sm:$0xf]
        %v1765 = vld [vmem:[#allocation12 + $0x44] sm:$0xf]
        %v1766 = vld [vmem:[#allocation12 + $0x48] sm:$0xf]
        %v1767 = vld [vmem:[#allocation12 + $0x4c] sm:$0xf]
        %v1768 = vld [vmem:[#allocation12 + $0x50] sm:$0xf]
        %v1769 = vld [vmem:[#allocation12 + $0x54] sm:$0xf]
        %v1770 = vld [vmem:[#allocation12 + $0x58] sm:$0xf]
        %v1771 = vld [vmem:[#allocation12 + $0x5c] sm:$0xf]
        %v1772 = vld [vmem:[#allocation12 + $0x60] sm:$0xf]
        %v1773 = vld [vmem:[#allocation12 + $0x64] sm:$0xf]
        %v1774 = vld [vmem:[#allocation12 + $0x68] sm:$0xf]
        %v1775 = vld [vmem:[#allocation12 + $0x6c] sm:$0xf]
        %v1776 = vld [vmem:[#allocation12 + $0x70] sm:$0xf]
        %v1777 = vld [vmem:[#allocation12 + $0x74] sm:$0xf]
        %v1778 = vld [vmem:[#allocation12 + $0x78] sm:$0xf]
        %v1779 = vld [vmem:[#allocation12 + $0x7c] sm:$0xf]
        %v1780 = vld [vmem:[%s13] sm:$0x1]
        %v1782 = vlaneseq
        %v1783 = vshrl.u32 %v1782, 7
        %v1784 = vsub.s32 0, %v1783
        %v1785 = vrot.slane %v1780, %v1784
        %v1819 = vunpack.c.l.b16 %v1748
        %v1820 = vunpack.c.l.b16 %v1749
        %v1821 = vunpack.c.l.b16 %v1750
        %v1822 = vunpack.c.l.b16 %v1751
        %v1823 = vunpack.c.l.b16 %v1752
        %v1824 = vunpack.c.l.b16 %v1753
        %v1825 = vunpack.c.l.b16 %v1754
        %v1826 = vunpack.c.l.b16 %v1755
        %v1827 = vunpack.c.l.b16 %v1756
        %v1828 = vunpack.c.l.b16 %v1757
        %v1829 = vunpack.c.l.b16 %v1758
        %v1830 = vunpack.c.l.b16 %v1759
        %v1831 = vunpack.c.l.b16 %v1760
        %v1832 = vunpack.c.l.b16 %v1761
        %v1833 = vunpack.c.l.b16 %v1762
        %v1834 = vunpack.c.l.b16 %v1763
        %v1835 = vunpack.c.l.b16 %v1764
        %v1836 = vunpack.c.l.b16 %v1765
        %v1837 = vunpack.c.l.b16 %v1766
        %v1838 = vunpack.c.l.b16 %v1767
        %v1839 = vunpack.c.l.b16 %v1768
        %v1840 = vunpack.c.l.b16 %v1769
        %v1841 = vunpack.c.l.b16 %v1770
        %v1842 = vunpack.c.l.b16 %v1771
        %v1843 = vunpack.c.l.b16 %v1772
        %v1844 = vunpack.c.l.b16 %v1773
        %v1845 = vunpack.c.l.b16 %v1774
        %v1846 = vunpack.c.l.b16 %v1775
        %v1847 = vunpack.c.l.b16 %v1776
        %v1848 = vunpack.c.l.b16 %v1777
        %v1849 = vunpack.c.l.b16 %v1778
        %v1850 = vunpack.c.l.b16 %v1779
        %v1851 = vpack.c.b16 %v1820, %v1819
        %v1852 = vpack.c.b16 %v1822, %v1821
        %v1853 = vpack.c.b16 %v1824, %v1823
        %v1854 = vpack.c.b16 %v1826, %v1825
        %v1855 = vpack.c.b16 %v1828, %v1827
        %v1856 = vpack.c.b16 %v1830, %v1829
        %v1857 = vpack.c.b16 %v1832, %v1831
        %v1858 = vpack.c.b16 %v1834, %v1833
        %v1859 = vpack.c.b16 %v1836, %v1835
        %v1860 = vpack.c.b16 %v1838, %v1837
        %v1861 = vpack.c.b16 %v1840, %v1839
        %v1862 = vpack.c.b16 %v1842, %v1841
        %v1863 = vpack.c.b16 %v1844, %v1843
        %v1864 = vpack.c.b16 %v1846, %v1845
        %v1865 = vpack.c.b16 %v1848, %v1847
        %v1866 = vpack.c.b16 %v1850, %v1849
        %1883 = vmatprep.subr.bf16.mxu0 0
        %1884 = vmatpush1.bf16.msra.mxu0 %v1851
        %1885 = vmatprep.subr.bf16.mxu0 0
        %1886 = vmatpush1.bf16.msra.mxu0 %v1852
        %1887 = vmatprep.subr.bf16.mxu0 0
        %1888 = vmatpush1.bf16.msra.mxu0 %v1853
        %1889 = vmatprep.subr.bf16.mxu0 0
        %1890 = vmatpush1.bf16.msra.mxu0 %v1854
        %1891 = vmatprep.subr.bf16.mxu0 0
        %1892 = vmatpush1.bf16.msra.mxu0 %v1855
        %1893 = vmatprep.subr.bf16.mxu0 0
        %1894 = vmatpush1.bf16.msra.mxu0 %v1856
        %1895 = vmatprep.subr.bf16.mxu0 0
        %1896 = vmatpush1.bf16.msra.mxu0 %v1857
        %1897 = vmatprep.subr.bf16.mxu0 0
        %1898 = vmatpush1.bf16.msra.mxu0 %v1858
        %1899 = vmatprep.subr.bf16.mxu0 0
        %1900 = vmatpush1.bf16.msra.mxu0 %v1859
        %1901 = vmatprep.subr.bf16.mxu0 0
        %1902 = vmatpush1.bf16.msra.mxu0 %v1860
        %1903 = vmatprep.subr.bf16.mxu0 0
        %1904 = vmatpush1.bf16.msra.mxu0 %v1861
        %1905 = vmatprep.subr.bf16.mxu0 0
        %1906 = vmatpush1.bf16.msra.mxu0 %v1862
        %1907 = vmatprep.subr.bf16.mxu0 0
        %1908 = vmatpush1.bf16.msra.mxu0 %v1863
        %1909 = vmatprep.subr.bf16.mxu0 0
        %1910 = vmatpush1.bf16.msra.mxu0 %v1864
        %1911 = vmatprep.subr.bf16.mxu0 0
        %1912 = vmatpush1.bf16.msra.mxu0 %v1865
        %1913 = vmatprep.subr.bf16.mxu0 0
        %1914 = vmatpush1.bf16.msra.mxu0 %v1866
        %1915 = vmatprep.mubr.bf16.mxu0 %v1747
        %1916 = vmatmul.mubr.bf16.gmra.mrb[0].mxu0 %v1746
        %v1917 = vpop.f32.mrb[0].mxu0
        %v1918 = vadd.f32 %v1785, %v1917
        %v1919 = vpop.f32.mrb[0].mxu0
        %v1920 = vpop.f32.mrb[0].mxu0
        %v1921 = vadd.f32 %v1785, %v1920
        %v1922 = vpop.f32.mrb[0].mxu0
        %1923 = vdwg.mxu0
        %v1924 = vadd.f32 %v1534, %v1918
        %v1925 = vadd.f32 %v1535, %v1921
        %1926 = vst [vmem:[%s583] sm:$0xff] %v1924
        %1927 = vst [vmem:[%s583 + $0x8] sm:$0xff] %v1925
        %s1928 = sand.u32 %s348, 1
        %s1929 = scalar_lea.sflag [#allocation5], %s1928
        %s1930 = sand.u32 %s348, 1
        %s1931 = smul.addr %s1930, 16
        %s1932 = scalar_lea.vmem [#allocation14], %s1931
        // Predicated region
        $region101: #{tpu_custom_call.1} parent=75 // pred_check
          %p1933 = pneg %p358
        $region102: #{tpu_custom_call.1} parent=75 // pred_check_branch
          %1935 = sbr.rel (%p1933) target = $region104
        $region103: #{tpu_custom_call.1} parent=75 // pred_region
          %s1937 = ssub.s32 256, 256
          %1938 = vsyncadd %s1929, %s1937
          %s1939 = smul.addr %s36, 2
          %s1940 = smul.addr %s1939, 128
          %s1941 = scalar_lea.hbm %s14, %s1940
          %s1942 = sshll.u32 %s1932, 4
          %s1943 = int_to_ptr.vmem [resolvable:$true] %s1942
          %1948 = dma.vmem_to_hbm [thread:$0]  %s1943, 256, %s1941, %s1929, 128, 128, 8
        $region104: #{tpu_custom_call.1} parent=75 // pred_fallthru
          _
      $region76: #{tpu_custom_call.1} parent=5 // pred_fallthru
        _
      %p1949 = scmp.le.s32.totalorder 2, %s31
      // Predicated region
      $region105: #{tpu_custom_call.1} parent=5 // pred_check
        %p1950 = pneg %p1949
      $region106: #{tpu_custom_call.1} parent=5 // pred_check_branch
        %1952 = sbr.rel (%p1950) target = $region108
      $region107: #{tpu_custom_call.1} parent=5 // pred_region
        %s1953 = ssub.s32 %s31, 2
        // Predicated region
        $region109: #{tpu_custom_call.1} parent=107 // pred_check
          %p1954 = pneg %p364
        $region110: #{tpu_custom_call.1} parent=107 // pred_check_branch
          %1956 = sbr.rel (%p1954) target = $region112
        $region111: #{tpu_custom_call.1} parent=107 // pred_region
          %s1957 = sand.u32 %s349, 1
          %s1958 = scalar_lea.sflag [#allocation5], %s1957
          %s1959 = sand.u32 %s349, 1
          %s1960 = smul.addr %s1959, 16
          %s1961 = scalar_lea.vmem [#allocation14], %s1960
          %1962 = dma.done %s1958, 256
        $region112: #{tpu_custom_call.1} parent=107 // pred_fallthru
          _
      $region108: #{tpu_custom_call.1} parent=5 // pred_fallthru
        _
    $region6: #{tpu_custom_call.1} parent=1 // loop_footer
      %s35 = sadd.s32 1, %s31
    $region7: #{tpu_custom_call.1} parent=1 // loop_footer_branch
      %30 = sbr.rel target = $region3
    $region8: #{tpu_custom_call.1} parent=1 // loop_exit
      _
    %1963 = vsyncpa [#allocation4], 1
    %s1964 = scalar_lea.sflag [#allocation4], 1
    %1965 = vsyncpa %s1964, 1
    %1966 = vsyncpa [#allocation7], 1
    %s1967 = scalar_lea.sflag [#allocation7], 1
    %1968 = vsyncpa %s1967, 1
    %1969 = vsyncpa [#allocation10], 1
    %1970 = vsyncpa [#allocation13], 1
    %1971 = vsyncpa [#allocation5], 1
    %s1972 = scalar_lea.sflag [#allocation5], 1
    %1973 = vsyncpa %s1972, 1

</llo_original>
